<compile_context>
chip_gen: v7x
topology: tpu7x:2x2x1
jax: 0.10.0
libtpu: 0.0.40
codegen_flags: <defaults>
</compile_context>

<pallas_src>
import numpy as np
import jax
import jax.numpy as jnp
from jax.experimental import pallas as pl
from jax.experimental.pallas import tpu as pltpu

EPS = 1e-5
KPAD = 128   # lane-dense output width (num_classes padded up to one vreg row)


def _make_fused_kernel(Bt, C, W, OH, OW, COUT, K):
    L = (OH - 1) * W + OW              # frame holding all valid conv columns
    LP = (OH - 2) * W + (OW - 2) + 1   # frame holding all pooled base columns
    inv_cnt = 1.0 / float(OH * OW)

    def kernel(x_ref, wtap_ref, bcol_ref, mask_ref, wexp_ref, blin_ref, o_ref):
        # Step-invariant values: load/broadcast once per grid step (hoisted out
        # of the unrolled batch loop so broadcasts are not re-emitted).
        maskb = jnp.broadcast_to(mask_ref[...], (COUT, L))      # (COUT, L)
        bfull = jnp.broadcast_to(bcol_ref[...], (COUT, L))      # folded conv bias
        blin = blin_ref[...]                                    # (1, KPAD)
        lane = jax.lax.broadcasted_iota(jnp.int32, (COUT, KPAD), 1)

        rows = []
        for b in range(Bt):                                     # unrolled batch loop
            xi = x_ref[b]                                        # (C, H*W), one load

            # ---- Conv2d(3x3, valid) with Normalize folded in: 9 MXU taps ----
            y = bfull
            for t in range(9):
                kh, kw = divmod(t, 3)
                s = kh * W + kw
                xs = xi[:, s:s + L]                              # (C, L) shifted tap
                y = y + jnp.dot(wtap_ref[t], xs,                 # (COUT,C)@(C,L)
                                preferred_element_type=jnp.float32)

            # ---- InstanceNorm2d (no affine, biased var): two-pass masked stats ----
            mu = jnp.sum(y * maskb, axis=1, keepdims=True) * inv_cnt   # (COUT,1)
            d = (y - mu) * maskb
            var = jnp.sum(d * d, axis=1, keepdims=True) * inv_cnt
            yn = (y - mu) * jax.lax.rsqrt(var + EPS)

            # ---- MaxPool2d(2,2): elementwise max of 4 lane-shifted slices ----
            m2 = jnp.maximum(
                jnp.maximum(yn[:, 0:LP], yn[:, 1:1 + LP]),
                jnp.maximum(yn[:, W:W + LP], yn[:, W + 1:W + 1 + LP]))  # (COUT,LP)

            # ---- Flatten + Linear: K independent lane reductions -> (COUT,KPAD)
            #      stack -> single cross-sublane reduce -> +bias (lane-dense row) ----
            stack = jnp.zeros((COUT, KPAD), jnp.float32)
            for k in range(K):
                ck = jnp.sum(m2 * wexp_ref[k], axis=1, keepdims=True)  # (COUT,1)
                stack = stack + jnp.where(lane == k, ck, 0.0)
            rows.append(jnp.sum(stack, axis=0, keepdims=True) + blin)  # (1, KPAD)

        o_ref[0] = rows[0] if Bt == 1 else jnp.concatenate(rows, axis=0)

    return kernel


def prepare_params(mean, std, Wc, bc, Wl, bl, H, W):
    """One-time weight preparation (hoisted out of the per-call jit):
    fold Normalize into the conv, split conv weights per tap, expand the
    Linear weights onto pooled frame positions, zero-pad the bias to KPAD."""
    mean = np.asarray(mean, np.float32)
    std = np.asarray(std, np.float32)
    Wc = np.asarray(Wc, np.float32)
    bc = np.asarray(bc, np.float32)
    Wl = np.asarray(Wl, np.float32)
    bl = np.asarray(bl, np.float32)

    COUT, C = Wc.shape[0], Wc.shape[1]
    K = Wl.shape[0]
    OH, OW = H - 2, W - 2
    PH, PW = OH // 2, OW // 2
    L = (OH - 1) * W + OW
    LP = (OH - 2) * W + (OW - 2) + 1

    # Fold Normalize (linear) into conv weights / bias.
    Wn = Wc / std[None, :, None, None]
    bn = bc - np.sum(Wn * mean[None, :, None, None], axis=(1, 2, 3))
    wtap = np.transpose(Wn, (2, 3, 0, 1)).reshape(9, COUT, C)   # wtap[kh*3+kw] = (COUT,C)
    bcol = bn.reshape(COUT, 1)

    # Mask of valid conv columns inside the L-wide frame (j % W < OW).
    maskf = ((np.arange(L) % W) < OW).astype(np.float32).reshape(1, L)

    # Zero-expanded linear weights: wexp[k, o, 2*ph*W + 2*pw] = Wl[k, o*PH*PW + ph*PW + pw]
    pos = (2 * W * np.arange(PH)[:, None] + 2 * np.arange(PW)[None, :]).reshape(-1)
    wexp = np.zeros((K, COUT, LP), np.float32)
    wexp[:, :, pos] = Wl.reshape(K, COUT, PH * PW)

    blin = np.zeros((1, KPAD), np.float32)
    blin[0, :K] = bl

    return tuple(jnp.asarray(a) for a in (wtap, bcol, maskf, wexp, blin))


def make_forward(B, C, H, W, COUT, K):
    OH, OW = H - 2, W - 2
    L = (OH - 1) * W + OW
    LP = (OH - 2) * W + (OW - 2) + 1

    # Batch blocking: one grid step per TensorCore. v7x has 2 TCs (keep 2 parallel
    # steps so both cores get work); v5e/v6e have 1 TC (collapse to a single step
    # and loop over the batch inside the kernel to amortize per-step overhead).
    kind = jax.devices()[0].device_kind.lower()
    n_tc = 2 if "v7" in kind else 1
    steps = n_tc if (n_tc > 1 and B % n_tc == 0) else 1
    Bt = B // steps

    kernel = _make_fused_kernel(Bt, C, W, OH, OW, COUT, K)

    @jax.jit
    def forward(x, wtap, bcol, maskf, wexp, blin):
        x2 = x.reshape(B, C, H * W)   # contiguous, free
        out3 = pl.pallas_call(
            kernel,
            out_shape=jax.ShapeDtypeStruct((steps, Bt, KPAD), jnp.float32),
            grid_spec=pltpu.PrefetchScalarGridSpec(
                num_scalar_prefetch=0,
                grid=(steps,),
                in_specs=[
                    pl.BlockSpec((Bt, C, H * W), lambda s: (s, 0, 0)),
                    pl.BlockSpec((9, COUT, C), lambda s: (0, 0, 0)),
                    pl.BlockSpec((COUT, 1), lambda s: (0, 0)),
                    pl.BlockSpec((1, L), lambda s: (0, 0)),
                    pl.BlockSpec((K, COUT, LP), lambda s: (0, 0, 0)),
                    pl.BlockSpec((1, KPAD), lambda s: (0, 0)),
                ],
                out_specs=pl.BlockSpec((1, Bt, KPAD), lambda s: (s, 0, 0)),
            ),
            compiler_params=pltpu.CompilerParams(
                dimension_semantics=("parallel",)),
        )(x2, wtap, bcol, maskf, wexp, blin)
        return out3.reshape(B, KPAD)[:, :K]

    return forward


def reference(x, mean, std, Wc, bc, Wl, bl):
    """Pure-JAX reference mirroring the PyTorch module."""
    xn = (x - mean[None, :, None, None]) / std[None, :, None, None]
    y = jax.lax.conv_general_dilated(
        xn, Wc, window_strides=(1, 1), padding="VALID",
        dimension_numbers=("NCHW", "OIHW", "NCHW"))
    y = y + bc[None, :, None, None]
    mu = y.mean(axis=(2, 3), keepdims=True)
    var = ((y - mu) ** 2).mean(axis=(2, 3), keepdims=True)
    yn = (y - mu) / jnp.sqrt(var + EPS)
    pooled = jax.lax.reduce_window(
        yn, -jnp.inf, jax.lax.max, (1, 1, 2, 2), (1, 1, 2, 2), "VALID")
    feat = pooled.reshape(x.shape[0], -1)
    return feat @ Wl.T + bl[None, :]


if __name__ == "__main__":
    B, C, H, W = 2, 4, 16, 16
    num_classes = 10
    COUT = 16

    key = jax.random.PRNGKey(0)
    k1, k2, k3, k4, k5 = jax.random.split(key, 5)

    x = jax.random.normal(k1, (B, C, H, W), jnp.float32)
    # registered buffers mean/std (per-channel), deterministic
    mean = jnp.array([0.1, 0.2, 0.3, 0.4], jnp.float32)
    std = jnp.array([0.5, 0.6, 0.7, 0.8], jnp.float32)

    # Conv2d(C, 16, 3) params
    Wc = jax.random.normal(k2, (COUT, C, 3, 3), jnp.float32) * 0.1
    bc = jax.random.normal(k3, (COUT,), jnp.float32) * 0.1
    # LazyLinear(num_classes) -> in_features = 16 * 7 * 7 = 784
    Wl = jax.random.normal(k4, (num_classes, COUT * 7 * 7), jnp.float32) * 0.05
    bl = jax.random.normal(k5, (num_classes,), jnp.float32) * 0.05

    # One-time weight prep (hoisted out of the per-call jit).
    params = prepare_params(mean, std, Wc, bc, Wl, bl, H, W)
    forward = make_forward(B, C, H, W, COUT, num_classes)

    out = jax.block_until_ready(forward(x, *params))
    ref = jax.block_until_ready(reference(x, mean, std, Wc, bc, Wl, bl))

    assert out.shape == (B, num_classes)
    assert bool(jnp.all(jnp.isfinite(out)))
    assert bool(jnp.allclose(out, ref, rtol=2e-2, atol=2e-2)), (
        f"mismatch: max abs err = {float(jnp.max(jnp.abs(out - ref)))}")

    print("KERNEL_OK")
</pallas_src>

<mosaic_0001>
module attributes {stable_mosaic.version = 11 : i64} {
  func.func @kernel(%arg0: i32, %arg1: memref<2x4x256xf32, #tpu.memory_space<vmem>>, %arg2: memref<9x16x4xf32, #tpu.memory_space<vmem>>, %arg3: memref<16x1xf32, #tpu.memory_space<vmem>>, %arg4: memref<1x222xf32, #tpu.memory_space<vmem>>, %arg5: memref<10x16x205xf32, #tpu.memory_space<vmem>>, %arg6: memref<1x128xf32, #tpu.memory_space<vmem>>, %arg7: memref<1x2x128xf32, #tpu.memory_space<vmem>>) attributes {dimension_semantics = [#tpu.dimension_semantics<parallel>], iteration_bounds = array<i64: 1>, scalar_prefetch = 0 : i64, scratch_operands = 0 : i64, tpu.core_type = #tpu.core_type<tc>, window_params = [{transform_indices = @transform_0, window_bounds = array<i64: 2, 4, 256>}, {pipeline_mode = #tpu.pipeline_mode<synchronous>, transform_indices = @transform_1, window_bounds = array<i64: 9, 16, 4>}, {pipeline_mode = #tpu.pipeline_mode<synchronous>, transform_indices = @transform_2, window_bounds = array<i64: 16, 1>}, {pipeline_mode = #tpu.pipeline_mode<synchronous>, transform_indices = @transform_3, window_bounds = array<i64: 1, 222>}, {pipeline_mode = #tpu.pipeline_mode<synchronous>, transform_indices = @transform_4, window_bounds = array<i64: 10, 16, 205>}, {pipeline_mode = #tpu.pipeline_mode<synchronous>, transform_indices = @transform_5, window_bounds = array<i64: 1, 128>}, {transform_indices = @transform_6, window_bounds = array<i64: 1, 2, 128>}]} {
    %c0 = arith.constant 0 : index
    %c0_0 = arith.constant 0 : index
    %0 = vector.load %arg4[%c0, %c0_0] : memref<1x222xf32, #tpu.memory_space<vmem>>, vector<1x222xf32>
    %1 = vector.shape_cast %0 : vector<1x222xf32> to vector<1x222xf32>
    %2 = vector.broadcast %1 : vector<1x222xf32> to vector<16x222xf32>
    %c0_1 = arith.constant 0 : index
    %c0_2 = arith.constant 0 : index
    %3 = vector.load %arg3[%c0_1, %c0_2] : memref<16x1xf32, #tpu.memory_space<vmem>>, vector<16x1xf32>
    %4 = vector.shape_cast %3 : vector<16x1xf32> to vector<16x1xf32>
    %5 = vector.broadcast %4 : vector<16x1xf32> to vector<16x222xf32>
    %c0_3 = arith.constant 0 : index
    %c0_4 = arith.constant 0 : index
    %6 = vector.load %arg6[%c0_3, %c0_4] : memref<1x128xf32, #tpu.memory_space<vmem>>, vector<1x128xf32>
    %7 = tpu.iota {dimensions = array<i32: 1>} : vector<16x128xi32>
    %c0_5 = arith.constant 0 : index
    %c0_6 = arith.constant 0 : index
    %c0_7 = arith.constant 0 : index
    %8 = vector.load %arg1[%c0_5, %c0_6, %c0_7] : memref<2x4x256xf32, #tpu.memory_space<vmem>>, vector<1x4x256xf32>
    %9 = vector.shape_cast %8 : vector<1x4x256xf32> to vector<4x256xf32>
    %10 = vector.extract_strided_slice %9 {offsets = [0, 0], sizes = [4, 222], strides = [1, 1]} : vector<4x256xf32> to vector<4x222xf32>
    %c0_8 = arith.constant 0 : index
    %c0_9 = arith.constant 0 : index
    %c0_10 = arith.constant 0 : index
    %11 = vector.load %arg2[%c0_8, %c0_9, %c0_10] : memref<9x16x4xf32, #tpu.memory_space<vmem>>, vector<1x16x4xf32>
    %12 = vector.shape_cast %11 : vector<1x16x4xf32> to vector<16x4xf32>
    %cst = arith.constant dense<0.000000e+00> : vector<16x222xf32>
    %13 = tpu.matmul %12, %10, %cst {dimension_numbers = #tpu.dot_dimension_numbers<[1], [0], [0], [1], [0, 0, 1, 1], [], []>} : vector<16x4xf32>, vector<4x222xf32>, vector<16x222xf32> -> vector<16x222xf32>
    %14 = arith.addf %5, %13 : vector<16x222xf32>
    %15 = vector.extract_strided_slice %9 {offsets = [0, 1], sizes = [4, 222], strides = [1, 1]} : vector<4x256xf32> to vector<4x222xf32>
    %c1 = arith.constant 1 : index
    %c0_11 = arith.constant 0 : index
    %c0_12 = arith.constant 0 : index
    %16 = vector.load %arg2[%c1, %c0_11, %c0_12] : memref<9x16x4xf32, #tpu.memory_space<vmem>>, vector<1x16x4xf32>
    %17 = vector.shape_cast %16 : vector<1x16x4xf32> to vector<16x4xf32>
    %cst_13 = arith.constant dense<0.000000e+00> : vector<16x222xf32>
    %18 = tpu.matmul %17, %15, %cst_13 {dimension_numbers = #tpu.dot_dimension_numbers<[1], [0], [0], [1], [0, 0, 1, 1], [], []>} : vector<16x4xf32>, vector<4x222xf32>, vector<16x222xf32> -> vector<16x222xf32>
    %19 = arith.addf %14, %18 : vector<16x222xf32>
    %20 = vector.extract_strided_slice %9 {offsets = [0, 2], sizes = [4, 222], strides = [1, 1]} : vector<4x256xf32> to vector<4x222xf32>
    %c2 = arith.constant 2 : index
    %c0_14 = arith.constant 0 : index
    %c0_15 = arith.constant 0 : index
    %21 = vector.load %arg2[%c2, %c0_14, %c0_15] : memref<9x16x4xf32, #tpu.memory_space<vmem>>, vector<1x16x4xf32>
    %22 = vector.shape_cast %21 : vector<1x16x4xf32> to vector<16x4xf32>
    %cst_16 = arith.constant dense<0.000000e+00> : vector<16x222xf32>
    %23 = tpu.matmul %22, %20, %cst_16 {dimension_numbers = #tpu.dot_dimension_numbers<[1], [0], [0], [1], [0, 0, 1, 1], [], []>} : vector<16x4xf32>, vector<4x222xf32>, vector<16x222xf32> -> vector<16x222xf32>
    %24 = arith.addf %19, %23 : vector<16x222xf32>
    %25 = vector.extract_strided_slice %9 {offsets = [0, 16], sizes = [4, 222], strides = [1, 1]} : vector<4x256xf32> to vector<4x222xf32>
    %c3 = arith.constant 3 : index
    %c0_17 = arith.constant 0 : index
    %c0_18 = arith.constant 0 : index
    %26 = vector.load %arg2[%c3, %c0_17, %c0_18] : memref<9x16x4xf32, #tpu.memory_space<vmem>>, vector<1x16x4xf32>
    %27 = vector.shape_cast %26 : vector<1x16x4xf32> to vector<16x4xf32>
    %cst_19 = arith.constant dense<0.000000e+00> : vector<16x222xf32>
    %28 = tpu.matmul %27, %25, %cst_19 {dimension_numbers = #tpu.dot_dimension_numbers<[1], [0], [0], [1], [0, 0, 1, 1], [], []>} : vector<16x4xf32>, vector<4x222xf32>, vector<16x222xf32> -> vector<16x222xf32>
    %29 = arith.addf %24, %28 : vector<16x222xf32>
    %30 = vector.extract_strided_slice %9 {offsets = [0, 17], sizes = [4, 222], strides = [1, 1]} : vector<4x256xf32> to vector<4x222xf32>
    %c4 = arith.constant 4 : index
    %c0_20 = arith.constant 0 : index
    %c0_21 = arith.constant 0 : index
    %31 = vector.load %arg2[%c4, %c0_20, %c0_21] : memref<9x16x4xf32, #tpu.memory_space<vmem>>, vector<1x16x4xf32>
    %32 = vector.shape_cast %31 : vector<1x16x4xf32> to vector<16x4xf32>
    %cst_22 = arith.constant dense<0.000000e+00> : vector<16x222xf32>
    %33 = tpu.matmul %32, %30, %cst_22 {dimension_numbers = #tpu.dot_dimension_numbers<[1], [0], [0], [1], [0, 0, 1, 1], [], []>} : vector<16x4xf32>, vector<4x222xf32>, vector<16x222xf32> -> vector<16x222xf32>
    %34 = arith.addf %29, %33 : vector<16x222xf32>
    %35 = vector.extract_strided_slice %9 {offsets = [0, 18], sizes = [4, 222], strides = [1, 1]} : vector<4x256xf32> to vector<4x222xf32>
    %c5 = arith.constant 5 : index
    %c0_23 = arith.constant 0 : index
    %c0_24 = arith.constant 0 : index
    %36 = vector.load %arg2[%c5, %c0_23, %c0_24] : memref<9x16x4xf32, #tpu.memory_space<vmem>>, vector<1x16x4xf32>
    %37 = vector.shape_cast %36 : vector<1x16x4xf32> to vector<16x4xf32>
    %cst_25 = arith.constant dense<0.000000e+00> : vector<16x222xf32>
    %38 = tpu.matmul %37, %35, %cst_25 {dimension_numbers = #tpu.dot_dimension_numbers<[1], [0], [0], [1], [0, 0, 1, 1], [], []>} : vector<16x4xf32>, vector<4x222xf32>, vector<16x222xf32> -> vector<16x222xf32>
    %39 = arith.addf %34, %38 : vector<16x222xf32>
    %40 = vector.extract_strided_slice %9 {offsets = [0, 32], sizes = [4, 222], strides = [1, 1]} : vector<4x256xf32> to vector<4x222xf32>
    %c6 = arith.constant 6 : index
    %c0_26 = arith.constant 0 : index
    %c0_27 = arith.constant 0 : index
    %41 = vector.load %arg2[%c6, %c0_26, %c0_27] : memref<9x16x4xf32, #tpu.memory_space<vmem>>, vector<1x16x4xf32>
    %42 = vector.shape_cast %41 : vector<1x16x4xf32> to vector<16x4xf32>
    %cst_28 = arith.constant dense<0.000000e+00> : vector<16x222xf32>
    %43 = tpu.matmul %42, %40, %cst_28 {dimension_numbers = #tpu.dot_dimension_numbers<[1], [0], [0], [1], [0, 0, 1, 1], [], []>} : vector<16x4xf32>, vector<4x222xf32>, vector<16x222xf32> -> vector<16x222xf32>
    %44 = arith.addf %39, %43 : vector<16x222xf32>
    %45 = vector.extract_strided_slice %9 {offsets = [0, 33], sizes = [4, 222], strides = [1, 1]} : vector<4x256xf32> to vector<4x222xf32>
    %c7 = arith.constant 7 : index
    %c0_29 = arith.constant 0 : index
    %c0_30 = arith.constant 0 : index
    %46 = vector.load %arg2[%c7, %c0_29, %c0_30] : memref<9x16x4xf32, #tpu.memory_space<vmem>>, vector<1x16x4xf32>
    %47 = vector.shape_cast %46 : vector<1x16x4xf32> to vector<16x4xf32>
    %cst_31 = arith.constant dense<0.000000e+00> : vector<16x222xf32>
    %48 = tpu.matmul %47, %45, %cst_31 {dimension_numbers = #tpu.dot_dimension_numbers<[1], [0], [0], [1], [0, 0, 1, 1], [], []>} : vector<16x4xf32>, vector<4x222xf32>, vector<16x222xf32> -> vector<16x222xf32>
    %49 = arith.addf %44, %48 : vector<16x222xf32>
    %50 = vector.extract_strided_slice %9 {offsets = [0, 34], sizes = [4, 222], strides = [1, 1]} : vector<4x256xf32> to vector<4x222xf32>
    %c8 = arith.constant 8 : index
    %c0_32 = arith.constant 0 : index
    %c0_33 = arith.constant 0 : index
    %51 = vector.load %arg2[%c8, %c0_32, %c0_33] : memref<9x16x4xf32, #tpu.memory_space<vmem>>, vector<1x16x4xf32>
    %52 = vector.shape_cast %51 : vector<1x16x4xf32> to vector<16x4xf32>
    %cst_34 = arith.constant dense<0.000000e+00> : vector<16x222xf32>
    %53 = tpu.matmul %52, %50, %cst_34 {dimension_numbers = #tpu.dot_dimension_numbers<[1], [0], [0], [1], [0, 0, 1, 1], [], []>} : vector<16x4xf32>, vector<4x222xf32>, vector<16x222xf32> -> vector<16x222xf32>
    %54 = arith.addf %49, %53 : vector<16x222xf32>
    %55 = arith.mulf %54, %2 : vector<16x222xf32>
    %cst_35 = arith.constant dense<0.000000e+00> : vector<16xf32>
    %56 = vector.multi_reduction <add>, %55, %cst_35 [1] : vector<16x222xf32> to vector<16xf32>
    %57 = vector.shape_cast %56 : vector<16xf32> to vector<16x1xf32>
    %cst_36 = arith.constant 0.00510204071 : f32
    %58 = vector.broadcast %cst_36 : f32 to vector<16x1xf32>
    %59 = arith.mulf %57, %58 : vector<16x1xf32>
    %60 = vector.broadcast %59 : vector<16x1xf32> to vector<16x222xf32>
    %61 = arith.subf %54, %60 : vector<16x222xf32>
    %62 = arith.mulf %61, %2 : vector<16x222xf32>
    %63 = arith.mulf %62, %62 : vector<16x222xf32>
    %cst_37 = arith.constant dense<0.000000e+00> : vector<16xf32>
    %64 = vector.multi_reduction <add>, %63, %cst_37 [1] : vector<16x222xf32> to vector<16xf32>
    %65 = vector.shape_cast %64 : vector<16xf32> to vector<16x1xf32>
    %cst_38 = arith.constant 0.00510204071 : f32
    %66 = vector.broadcast %cst_38 : f32 to vector<16x1xf32>
    %67 = arith.mulf %65, %66 : vector<16x1xf32>
    %68 = vector.broadcast %59 : vector<16x1xf32> to vector<16x222xf32>
    %69 = arith.subf %54, %68 : vector<16x222xf32>
    %cst_39 = arith.constant 9.99999974E-6 : f32
    %70 = vector.broadcast %cst_39 : f32 to vector<16x1xf32>
    %71 = arith.addf %67, %70 : vector<16x1xf32>
    %72 = math.rsqrt %71 : vector<16x1xf32>
    %73 = vector.broadcast %72 : vector<16x1xf32> to vector<16x222xf32>
    %74 = arith.mulf %69, %73 : vector<16x222xf32>
    %75 = vector.extract_strided_slice %74 {offsets = [0, 0], sizes = [16, 205], strides = [1, 1]} : vector<16x222xf32> to vector<16x205xf32>
    %76 = vector.extract_strided_slice %74 {offsets = [0, 1], sizes = [16, 205], strides = [1, 1]} : vector<16x222xf32> to vector<16x205xf32>
    %77 = arith.maximumf %75, %76 : vector<16x205xf32>
    %78 = vector.extract_strided_slice %74 {offsets = [0, 16], sizes = [16, 205], strides = [1, 1]} : vector<16x222xf32> to vector<16x205xf32>
    %79 = vector.extract_strided_slice %74 {offsets = [0, 17], sizes = [16, 205], strides = [1, 1]} : vector<16x222xf32> to vector<16x205xf32>
    %80 = arith.maximumf %78, %79 : vector<16x205xf32>
    %81 = arith.maximumf %77, %80 : vector<16x205xf32>
    %cst_40 = arith.constant 0.000000e+00 : f32
    %82 = vector.broadcast %cst_40 : f32 to vector<16x128xf32>
    %c0_41 = arith.constant 0 : index
    %c0_42 = arith.constant 0 : index
    %c0_43 = arith.constant 0 : index
    %83 = vector.load %arg5[%c0_41, %c0_42, %c0_43] : memref<10x16x205xf32, #tpu.memory_space<vmem>>, vector<1x16x205xf32>
    %84 = vector.shape_cast %83 : vector<1x16x205xf32> to vector<16x205xf32>
    %85 = arith.mulf %81, %84 : vector<16x205xf32>
    %cst_44 = arith.constant dense<0.000000e+00> : vector<16xf32>
    %86 = vector.multi_reduction <add>, %85, %cst_44 [1] : vector<16x205xf32> to vector<16xf32>
    %87 = vector.shape_cast %86 : vector<16xf32> to vector<16x1xf32>
    %c0_i32 = arith.constant 0 : i32
    %88 = vector.broadcast %c0_i32 : i32 to vector<16x128xi32>
    %89 = arith.cmpi eq, %7, %88 : vector<16x128xi32>
    %cst_45 = arith.constant 0.000000e+00 : f32
    %90 = vector.shape_cast %87 : vector<16x1xf32> to vector<16x1xf32>
    %91 = vector.broadcast %90 : vector<16x1xf32> to vector<16x128xf32>
    %92 = vector.broadcast %cst_45 : f32 to vector<16x128xf32>
    %93 = arith.select %89, %91, %92 : vector<16x128xi1>, vector<16x128xf32>
    %94 = arith.addf %82, %93 : vector<16x128xf32>
    %c1_46 = arith.constant 1 : index
    %c0_47 = arith.constant 0 : index
    %c0_48 = arith.constant 0 : index
    %95 = vector.load %arg5[%c1_46, %c0_47, %c0_48] : memref<10x16x205xf32, #tpu.memory_space<vmem>>, vector<1x16x205xf32>
    %96 = vector.shape_cast %95 : vector<1x16x205xf32> to vector<16x205xf32>
    %97 = arith.mulf %81, %96 : vector<16x205xf32>
    %cst_49 = arith.constant dense<0.000000e+00> : vector<16xf32>
    %98 = vector.multi_reduction <add>, %97, %cst_49 [1] : vector<16x205xf32> to vector<16xf32>
    %99 = vector.shape_cast %98 : vector<16xf32> to vector<16x1xf32>
    %c1_i32 = arith.constant 1 : i32
    %100 = vector.broadcast %c1_i32 : i32 to vector<16x128xi32>
    %101 = arith.cmpi eq, %7, %100 : vector<16x128xi32>
    %cst_50 = arith.constant 0.000000e+00 : f32
    %102 = vector.shape_cast %99 : vector<16x1xf32> to vector<16x1xf32>
    %103 = vector.broadcast %102 : vector<16x1xf32> to vector<16x128xf32>
    %104 = vector.broadcast %cst_50 : f32 to vector<16x128xf32>
    %105 = arith.select %101, %103, %104 : vector<16x128xi1>, vector<16x128xf32>
    %106 = arith.addf %94, %105 : vector<16x128xf32>
    %c2_51 = arith.constant 2 : index
    %c0_52 = arith.constant 0 : index
    %c0_53 = arith.constant 0 : index
    %107 = vector.load %arg5[%c2_51, %c0_52, %c0_53] : memref<10x16x205xf32, #tpu.memory_space<vmem>>, vector<1x16x205xf32>
    %108 = vector.shape_cast %107 : vector<1x16x205xf32> to vector<16x205xf32>
    %109 = arith.mulf %81, %108 : vector<16x205xf32>
    %cst_54 = arith.constant dense<0.000000e+00> : vector<16xf32>
    %110 = vector.multi_reduction <add>, %109, %cst_54 [1] : vector<16x205xf32> to vector<16xf32>
    %111 = vector.shape_cast %110 : vector<16xf32> to vector<16x1xf32>
    %c2_i32 = arith.constant 2 : i32
    %112 = vector.broadcast %c2_i32 : i32 to vector<16x128xi32>
    %113 = arith.cmpi eq, %7, %112 : vector<16x128xi32>
    %cst_55 = arith.constant 0.000000e+00 : f32
    %114 = vector.shape_cast %111 : vector<16x1xf32> to vector<16x1xf32>
    %115 = vector.broadcast %114 : vector<16x1xf32> to vector<16x128xf32>
    %116 = vector.broadcast %cst_55 : f32 to vector<16x128xf32>
    %117 = arith.select %113, %115, %116 : vector<16x128xi1>, vector<16x128xf32>
    %118 = arith.addf %106, %117 : vector<16x128xf32>
    %c3_56 = arith.constant 3 : index
    %c0_57 = arith.constant 0 : index
    %c0_58 = arith.constant 0 : index
    %119 = vector.load %arg5[%c3_56, %c0_57, %c0_58] : memref<10x16x205xf32, #tpu.memory_space<vmem>>, vector<1x16x205xf32>
    %120 = vector.shape_cast %119 : vector<1x16x205xf32> to vector<16x205xf32>
    %121 = arith.mulf %81, %120 : vector<16x205xf32>
    %cst_59 = arith.constant dense<0.000000e+00> : vector<16xf32>
    %122 = vector.multi_reduction <add>, %121, %cst_59 [1] : vector<16x205xf32> to vector<16xf32>
    %123 = vector.shape_cast %122 : vector<16xf32> to vector<16x1xf32>
    %c3_i32 = arith.constant 3 : i32
    %124 = vector.broadcast %c3_i32 : i32 to vector<16x128xi32>
    %125 = arith.cmpi eq, %7, %124 : vector<16x128xi32>
    %cst_60 = arith.constant 0.000000e+00 : f32
    %126 = vector.shape_cast %123 : vector<16x1xf32> to vector<16x1xf32>
    %127 = vector.broadcast %126 : vector<16x1xf32> to vector<16x128xf32>
    %128 = vector.broadcast %cst_60 : f32 to vector<16x128xf32>
    %129 = arith.select %125, %127, %128 : vector<16x128xi1>, vector<16x128xf32>
    %130 = arith.addf %118, %129 : vector<16x128xf32>
    %c4_61 = arith.constant 4 : index
    %c0_62 = arith.constant 0 : index
    %c0_63 = arith.constant 0 : index
    %131 = vector.load %arg5[%c4_61, %c0_62, %c0_63] : memref<10x16x205xf32, #tpu.memory_space<vmem>>, vector<1x16x205xf32>
    %132 = vector.shape_cast %131 : vector<1x16x205xf32> to vector<16x205xf32>
    %133 = arith.mulf %81, %132 : vector<16x205xf32>
    %cst_64 = arith.constant dense<0.000000e+00> : vector<16xf32>
    %134 = vector.multi_reduction <add>, %133, %cst_64 [1] : vector<16x205xf32> to vector<16xf32>
    %135 = vector.shape_cast %134 : vector<16xf32> to vector<16x1xf32>
    %c4_i32 = arith.constant 4 : i32
    %136 = vector.broadcast %c4_i32 : i32 to vector<16x128xi32>
    %137 = arith.cmpi eq, %7, %136 : vector<16x128xi32>
    %cst_65 = arith.constant 0.000000e+00 : f32
    %138 = vector.shape_cast %135 : vector<16x1xf32> to vector<16x1xf32>
    %139 = vector.broadcast %138 : vector<16x1xf32> to vector<16x128xf32>
    %140 = vector.broadcast %cst_65 : f32 to vector<16x128xf32>
    %141 = arith.select %137, %139, %140 : vector<16x128xi1>, vector<16x128xf32>
    %142 = arith.addf %130, %141 : vector<16x128xf32>
    %c5_66 = arith.constant 5 : index
    %c0_67 = arith.constant 0 : index
    %c0_68 = arith.constant 0 : index
    %143 = vector.load %arg5[%c5_66, %c0_67, %c0_68] : memref<10x16x205xf32, #tpu.memory_space<vmem>>, vector<1x16x205xf32>
    %144 = vector.shape_cast %143 : vector<1x16x205xf32> to vector<16x205xf32>
    %145 = arith.mulf %81, %144 : vector<16x205xf32>
    %cst_69 = arith.constant dense<0.000000e+00> : vector<16xf32>
    %146 = vector.multi_reduction <add>, %145, %cst_69 [1] : vector<16x205xf32> to vector<16xf32>
    %147 = vector.shape_cast %146 : vector<16xf32> to vector<16x1xf32>
    %c5_i32 = arith.constant 5 : i32
    %148 = vector.broadcast %c5_i32 : i32 to vector<16x128xi32>
    %149 = arith.cmpi eq, %7, %148 : vector<16x128xi32>
    %cst_70 = arith.constant 0.000000e+00 : f32
    %150 = vector.shape_cast %147 : vector<16x1xf32> to vector<16x1xf32>
    %151 = vector.broadcast %150 : vector<16x1xf32> to vector<16x128xf32>
    %152 = vector.broadcast %cst_70 : f32 to vector<16x128xf32>
    %153 = arith.select %149, %151, %152 : vector<16x128xi1>, vector<16x128xf32>
    %154 = arith.addf %142, %153 : vector<16x128xf32>
    %c6_71 = arith.constant 6 : index
    %c0_72 = arith.constant 0 : index
    %c0_73 = arith.constant 0 : index
    %155 = vector.load %arg5[%c6_71, %c0_72, %c0_73] : memref<10x16x205xf32, #tpu.memory_space<vmem>>, vector<1x16x205xf32>
    %156 = vector.shape_cast %155 : vector<1x16x205xf32> to vector<16x205xf32>
    %157 = arith.mulf %81, %156 : vector<16x205xf32>
    %cst_74 = arith.constant dense<0.000000e+00> : vector<16xf32>
    %158 = vector.multi_reduction <add>, %157, %cst_74 [1] : vector<16x205xf32> to vector<16xf32>
    %159 = vector.shape_cast %158 : vector<16xf32> to vector<16x1xf32>
    %c6_i32 = arith.constant 6 : i32
    %160 = vector.broadcast %c6_i32 : i32 to vector<16x128xi32>
    %161 = arith.cmpi eq, %7, %160 : vector<16x128xi32>
    %cst_75 = arith.constant 0.000000e+00 : f32
    %162 = vector.shape_cast %159 : vector<16x1xf32> to vector<16x1xf32>
    %163 = vector.broadcast %162 : vector<16x1xf32> to vector<16x128xf32>
    %164 = vector.broadcast %cst_75 : f32 to vector<16x128xf32>
    %165 = arith.select %161, %163, %164 : vector<16x128xi1>, vector<16x128xf32>
    %166 = arith.addf %154, %165 : vector<16x128xf32>
    %c7_76 = arith.constant 7 : index
    %c0_77 = arith.constant 0 : index
    %c0_78 = arith.constant 0 : index
    %167 = vector.load %arg5[%c7_76, %c0_77, %c0_78] : memref<10x16x205xf32, #tpu.memory_space<vmem>>, vector<1x16x205xf32>
    %168 = vector.shape_cast %167 : vector<1x16x205xf32> to vector<16x205xf32>
    %169 = arith.mulf %81, %168 : vector<16x205xf32>
    %cst_79 = arith.constant dense<0.000000e+00> : vector<16xf32>
    %170 = vector.multi_reduction <add>, %169, %cst_79 [1] : vector<16x205xf32> to vector<16xf32>
    %171 = vector.shape_cast %170 : vector<16xf32> to vector<16x1xf32>
    %c7_i32 = arith.constant 7 : i32
    %172 = vector.broadcast %c7_i32 : i32 to vector<16x128xi32>
    %173 = arith.cmpi eq, %7, %172 : vector<16x128xi32>
    %cst_80 = arith.constant 0.000000e+00 : f32
    %174 = vector.shape_cast %171 : vector<16x1xf32> to vector<16x1xf32>
    %175 = vector.broadcast %174 : vector<16x1xf32> to vector<16x128xf32>
    %176 = vector.broadcast %cst_80 : f32 to vector<16x128xf32>
    %177 = arith.select %173, %175, %176 : vector<16x128xi1>, vector<16x128xf32>
    %178 = arith.addf %166, %177 : vector<16x128xf32>
    %c8_81 = arith.constant 8 : index
    %c0_82 = arith.constant 0 : index
    %c0_83 = arith.constant 0 : index
    %179 = vector.load %arg5[%c8_81, %c0_82, %c0_83] : memref<10x16x205xf32, #tpu.memory_space<vmem>>, vector<1x16x205xf32>
    %180 = vector.shape_cast %179 : vector<1x16x205xf32> to vector<16x205xf32>
    %181 = arith.mulf %81, %180 : vector<16x205xf32>
    %cst_84 = arith.constant dense<0.000000e+00> : vector<16xf32>
    %182 = vector.multi_reduction <add>, %181, %cst_84 [1] : vector<16x205xf32> to vector<16xf32>
    %183 = vector.shape_cast %182 : vector<16xf32> to vector<16x1xf32>
    %c8_i32 = arith.constant 8 : i32
    %184 = vector.broadcast %c8_i32 : i32 to vector<16x128xi32>
    %185 = arith.cmpi eq, %7, %184 : vector<16x128xi32>
    %cst_85 = arith.constant 0.000000e+00 : f32
    %186 = vector.shape_cast %183 : vector<16x1xf32> to vector<16x1xf32>
    %187 = vector.broadcast %186 : vector<16x1xf32> to vector<16x128xf32>
    %188 = vector.broadcast %cst_85 : f32 to vector<16x128xf32>
    %189 = arith.select %185, %187, %188 : vector<16x128xi1>, vector<16x128xf32>
    %190 = arith.addf %178, %189 : vector<16x128xf32>
    %c9 = arith.constant 9 : index
    %c0_86 = arith.constant 0 : index
    %c0_87 = arith.constant 0 : index
    %191 = vector.load %arg5[%c9, %c0_86, %c0_87] : memref<10x16x205xf32, #tpu.memory_space<vmem>>, vector<1x16x205xf32>
    %192 = vector.shape_cast %191 : vector<1x16x205xf32> to vector<16x205xf32>
    %193 = arith.mulf %81, %192 : vector<16x205xf32>
    %cst_88 = arith.constant dense<0.000000e+00> : vector<16xf32>
    %194 = vector.multi_reduction <add>, %193, %cst_88 [1] : vector<16x205xf32> to vector<16xf32>
    %195 = vector.shape_cast %194 : vector<16xf32> to vector<16x1xf32>
    %c9_i32 = arith.constant 9 : i32
    %196 = vector.broadcast %c9_i32 : i32 to vector<16x128xi32>
    %197 = arith.cmpi eq, %7, %196 : vector<16x128xi32>
    %cst_89 = arith.constant 0.000000e+00 : f32
    %198 = vector.shape_cast %195 : vector<16x1xf32> to vector<16x1xf32>
    %199 = vector.broadcast %198 : vector<16x1xf32> to vector<16x128xf32>
    %200 = vector.broadcast %cst_89 : f32 to vector<16x128xf32>
    %201 = arith.select %197, %199, %200 : vector<16x128xi1>, vector<16x128xf32>
    %202 = arith.addf %190, %201 : vector<16x128xf32>
    %cst_90 = arith.constant dense<0.000000e+00> : vector<128xf32>
    %203 = vector.multi_reduction <add>, %202, %cst_90 [0] : vector<16x128xf32> to vector<128xf32>
    %204 = vector.shape_cast %203 : vector<128xf32> to vector<1x128xf32>
    %205 = arith.addf %204, %6 : vector<1x128xf32>
    %c1_91 = arith.constant 1 : index
    %c0_92 = arith.constant 0 : index
    %c0_93 = arith.constant 0 : index
    %206 = vector.load %arg1[%c1_91, %c0_92, %c0_93] : memref<2x4x256xf32, #tpu.memory_space<vmem>>, vector<1x4x256xf32>
    %207 = vector.shape_cast %206 : vector<1x4x256xf32> to vector<4x256xf32>
    %208 = vector.extract_strided_slice %207 {offsets = [0, 0], sizes = [4, 222], strides = [1, 1]} : vector<4x256xf32> to vector<4x222xf32>
    %c0_94 = arith.constant 0 : index
    %c0_95 = arith.constant 0 : index
    %c0_96 = arith.constant 0 : index
    %209 = vector.load %arg2[%c0_94, %c0_95, %c0_96] : memref<9x16x4xf32, #tpu.memory_space<vmem>>, vector<1x16x4xf32>
    %210 = vector.shape_cast %209 : vector<1x16x4xf32> to vector<16x4xf32>
    %cst_97 = arith.constant dense<0.000000e+00> : vector<16x222xf32>
    %211 = tpu.matmul %210, %208, %cst_97 {dimension_numbers = #tpu.dot_dimension_numbers<[1], [0], [0], [1], [0, 0, 1, 1], [], []>} : vector<16x4xf32>, vector<4x222xf32>, vector<16x222xf32> -> vector<16x222xf32>
    %212 = arith.addf %5, %211 : vector<16x222xf32>
    %213 = vector.extract_strided_slice %207 {offsets = [0, 1], sizes = [4, 222], strides = [1, 1]} : vector<4x256xf32> to vector<4x222xf32>
    %c1_98 = arith.constant 1 : index
    %c0_99 = arith.constant 0 : index
    %c0_100 = arith.constant 0 : index
    %214 = vector.load %arg2[%c1_98, %c0_99, %c0_100] : memref<9x16x4xf32, #tpu.memory_space<vmem>>, vector<1x16x4xf32>
    %215 = vector.shape_cast %214 : vector<1x16x4xf32> to vector<16x4xf32>
    %cst_101 = arith.constant dense<0.000000e+00> : vector<16x222xf32>
    %216 = tpu.matmul %215, %213, %cst_101 {dimension_numbers = #tpu.dot_dimension_numbers<[1], [0], [0], [1], [0, 0, 1, 1], [], []>} : vector<16x4xf32>, vector<4x222xf32>, vector<16x222xf32> -> vector<16x222xf32>
    %217 = arith.addf %212, %216 : vector<16x222xf32>
    %218 = vector.extract_strided_slice %207 {offsets = [0, 2], sizes = [4, 222], strides = [1, 1]} : vector<4x256xf32> to vector<4x222xf32>
    %c2_102 = arith.constant 2 : index
    %c0_103 = arith.constant 0 : index
    %c0_104 = arith.constant 0 : index
    %219 = vector.load %arg2[%c2_102, %c0_103, %c0_104] : memref<9x16x4xf32, #tpu.memory_space<vmem>>, vector<1x16x4xf32>
    %220 = vector.shape_cast %219 : vector<1x16x4xf32> to vector<16x4xf32>
    %cst_105 = arith.constant dense<0.000000e+00> : vector<16x222xf32>
    %221 = tpu.matmul %220, %218, %cst_105 {dimension_numbers = #tpu.dot_dimension_numbers<[1], [0], [0], [1], [0, 0, 1, 1], [], []>} : vector<16x4xf32>, vector<4x222xf32>, vector<16x222xf32> -> vector<16x222xf32>
    %222 = arith.addf %217, %221 : vector<16x222xf32>
    %223 = vector.extract_strided_slice %207 {offsets = [0, 16], sizes = [4, 222], strides = [1, 1]} : vector<4x256xf32> to vector<4x222xf32>
    %c3_106 = arith.constant 3 : index
    %c0_107 = arith.constant 0 : index
    %c0_108 = arith.constant 0 : index
    %224 = vector.load %arg2[%c3_106, %c0_107, %c0_108] : memref<9x16x4xf32, #tpu.memory_space<vmem>>, vector<1x16x4xf32>
    %225 = vector.shape_cast %224 : vector<1x16x4xf32> to vector<16x4xf32>
    %cst_109 = arith.constant dense<0.000000e+00> : vector<16x222xf32>
    %226 = tpu.matmul %225, %223, %cst_109 {dimension_numbers = #tpu.dot_dimension_numbers<[1], [0], [0], [1], [0, 0, 1, 1], [], []>} : vector<16x4xf32>, vector<4x222xf32>, vector<16x222xf32> -> vector<16x222xf32>
    %227 = arith.addf %222, %226 : vector<16x222xf32>
    %228 = vector.extract_strided_slice %207 {offsets = [0, 17], sizes = [4, 222], strides = [1, 1]} : vector<4x256xf32> to vector<4x222xf32>
    %c4_110 = arith.constant 4 : index
    %c0_111 = arith.constant 0 : index
    %c0_112 = arith.constant 0 : index
    %229 = vector.load %arg2[%c4_110, %c0_111, %c0_112] : memref<9x16x4xf32, #tpu.memory_space<vmem>>, vector<1x16x4xf32>
    %230 = vector.shape_cast %229 : vector<1x16x4xf32> to vector<16x4xf32>
    %cst_113 = arith.constant dense<0.000000e+00> : vector<16x222xf32>
    %231 = tpu.matmul %230, %228, %cst_113 {dimension_numbers = #tpu.dot_dimension_numbers<[1], [0], [0], [1], [0, 0, 1, 1], [], []>} : vector<16x4xf32>, vector<4x222xf32>, vector<16x222xf32> -> vector<16x222xf32>
    %232 = arith.addf %227, %231 : vector<16x222xf32>
    %233 = vector.extract_strided_slice %207 {offsets = [0, 18], sizes = [4, 222], strides = [1, 1]} : vector<4x256xf32> to vector<4x222xf32>
    %c5_114 = arith.constant 5 : index
    %c0_115 = arith.constant 0 : index
    %c0_116 = arith.constant 0 : index
    %234 = vector.load %arg2[%c5_114, %c0_115, %c0_116] : memref<9x16x4xf32, #tpu.memory_space<vmem>>, vector<1x16x4xf32>
    %235 = vector.shape_cast %234 : vector<1x16x4xf32> to vector<16x4xf32>
    %cst_117 = arith.constant dense<0.000000e+00> : vector<16x222xf32>
    %236 = tpu.matmul %235, %233, %cst_117 {dimension_numbers = #tpu.dot_dimension_numbers<[1], [0], [0], [1], [0, 0, 1, 1], [], []>} : vector<16x4xf32>, vector<4x222xf32>, vector<16x222xf32> -> vector<16x222xf32>
    %237 = arith.addf %232, %236 : vector<16x222xf32>
    %238 = vector.extract_strided_slice %207 {offsets = [0, 32], sizes = [4, 222], strides = [1, 1]} : vector<4x256xf32> to vector<4x222xf32>
    %c6_118 = arith.constant 6 : index
    %c0_119 = arith.constant 0 : index
    %c0_120 = arith.constant 0 : index
    %239 = vector.load %arg2[%c6_118, %c0_119, %c0_120] : memref<9x16x4xf32, #tpu.memory_space<vmem>>, vector<1x16x4xf32>
    %240 = vector.shape_cast %239 : vector<1x16x4xf32> to vector<16x4xf32>
    %cst_121 = arith.constant dense<0.000000e+00> : vector<16x222xf32>
    %241 = tpu.matmul %240, %238, %cst_121 {dimension_numbers = #tpu.dot_dimension_numbers<[1], [0], [0], [1], [0, 0, 1, 1], [], []>} : vector<16x4xf32>, vector<4x222xf32>, vector<16x222xf32> -> vector<16x222xf32>
    %242 = arith.addf %237, %241 : vector<16x222xf32>
    %243 = vector.extract_strided_slice %207 {offsets = [0, 33], sizes = [4, 222], strides = [1, 1]} : vector<4x256xf32> to vector<4x222xf32>
    %c7_122 = arith.constant 7 : index
    %c0_123 = arith.constant 0 : index
    %c0_124 = arith.constant 0 : index
    %244 = vector.load %arg2[%c7_122, %c0_123, %c0_124] : memref<9x16x4xf32, #tpu.memory_space<vmem>>, vector<1x16x4xf32>
    %245 = vector.shape_cast %244 : vector<1x16x4xf32> to vector<16x4xf32>
    %cst_125 = arith.constant dense<0.000000e+00> : vector<16x222xf32>
    %246 = tpu.matmul %245, %243, %cst_125 {dimension_numbers = #tpu.dot_dimension_numbers<[1], [0], [0], [1], [0, 0, 1, 1], [], []>} : vector<16x4xf32>, vector<4x222xf32>, vector<16x222xf32> -> vector<16x222xf32>
    %247 = arith.addf %242, %246 : vector<16x222xf32>
    %248 = vector.extract_strided_slice %207 {offsets = [0, 34], sizes = [4, 222], strides = [1, 1]} : vector<4x256xf32> to vector<4x222xf32>
    %c8_126 = arith.constant 8 : index
    %c0_127 = arith.constant 0 : index
    %c0_128 = arith.constant 0 : index
    %249 = vector.load %arg2[%c8_126, %c0_127, %c0_128] : memref<9x16x4xf32, #tpu.memory_space<vmem>>, vector<1x16x4xf32>
    %250 = vector.shape_cast %249 : vector<1x16x4xf32> to vector<16x4xf32>
    %cst_129 = arith.constant dense<0.000000e+00> : vector<16x222xf32>
    %251 = tpu.matmul %250, %248, %cst_129 {dimension_numbers = #tpu.dot_dimension_numbers<[1], [0], [0], [1], [0, 0, 1, 1], [], []>} : vector<16x4xf32>, vector<4x222xf32>, vector<16x222xf32> -> vector<16x222xf32>
    %252 = arith.addf %247, %251 : vector<16x222xf32>
    %253 = arith.mulf %252, %2 : vector<16x222xf32>
    %cst_130 = arith.constant dense<0.000000e+00> : vector<16xf32>
    %254 = vector.multi_reduction <add>, %253, %cst_130 [1] : vector<16x222xf32> to vector<16xf32>
    %255 = vector.shape_cast %254 : vector<16xf32> to vector<16x1xf32>
    %cst_131 = arith.constant 0.00510204071 : f32
    %256 = vector.broadcast %cst_131 : f32 to vector<16x1xf32>
    %257 = arith.mulf %255, %256 : vector<16x1xf32>
    %258 = vector.broadcast %257 : vector<16x1xf32> to vector<16x222xf32>
    %259 = arith.subf %252, %258 : vector<16x222xf32>
    %260 = arith.mulf %259, %2 : vector<16x222xf32>
    %261 = arith.mulf %260, %260 : vector<16x222xf32>
    %cst_132 = arith.constant dense<0.000000e+00> : vector<16xf32>
    %262 = vector.multi_reduction <add>, %261, %cst_132 [1] : vector<16x222xf32> to vector<16xf32>
    %263 = vector.shape_cast %262 : vector<16xf32> to vector<16x1xf32>
    %cst_133 = arith.constant 0.00510204071 : f32
    %264 = vector.broadcast %cst_133 : f32 to vector<16x1xf32>
    %265 = arith.mulf %263, %264 : vector<16x1xf32>
    %266 = vector.broadcast %257 : vector<16x1xf32> to vector<16x222xf32>
    %267 = arith.subf %252, %266 : vector<16x222xf32>
    %cst_134 = arith.constant 9.99999974E-6 : f32
    %268 = vector.broadcast %cst_134 : f32 to vector<16x1xf32>
    %269 = arith.addf %265, %268 : vector<16x1xf32>
    %270 = math.rsqrt %269 : vector<16x1xf32>
    %271 = vector.broadcast %270 : vector<16x1xf32> to vector<16x222xf32>
    %272 = arith.mulf %267, %271 : vector<16x222xf32>
    %273 = vector.extract_strided_slice %272 {offsets = [0, 0], sizes = [16, 205], strides = [1, 1]} : vector<16x222xf32> to vector<16x205xf32>
    %274 = vector.extract_strided_slice %272 {offsets = [0, 1], sizes = [16, 205], strides = [1, 1]} : vector<16x222xf32> to vector<16x205xf32>
    %275 = arith.maximumf %273, %274 : vector<16x205xf32>
    %276 = vector.extract_strided_slice %272 {offsets = [0, 16], sizes = [16, 205], strides = [1, 1]} : vector<16x222xf32> to vector<16x205xf32>
    %277 = vector.extract_strided_slice %272 {offsets = [0, 17], sizes = [16, 205], strides = [1, 1]} : vector<16x222xf32> to vector<16x205xf32>
    %278 = arith.maximumf %276, %277 : vector<16x205xf32>
    %279 = arith.maximumf %275, %278 : vector<16x205xf32>
    %cst_135 = arith.constant 0.000000e+00 : f32
    %280 = vector.broadcast %cst_135 : f32 to vector<16x128xf32>
    %c0_136 = arith.constant 0 : index
    %c0_137 = arith.constant 0 : index
    %c0_138 = arith.constant 0 : index
    %281 = vector.load %arg5[%c0_136, %c0_137, %c0_138] : memref<10x16x205xf32, #tpu.memory_space<vmem>>, vector<1x16x205xf32>
    %282 = vector.shape_cast %281 : vector<1x16x205xf32> to vector<16x205xf32>
    %283 = arith.mulf %279, %282 : vector<16x205xf32>
    %cst_139 = arith.constant dense<0.000000e+00> : vector<16xf32>
    %284 = vector.multi_reduction <add>, %283, %cst_139 [1] : vector<16x205xf32> to vector<16xf32>
    %285 = vector.shape_cast %284 : vector<16xf32> to vector<16x1xf32>
    %c0_i32_140 = arith.constant 0 : i32
    %286 = vector.broadcast %c0_i32_140 : i32 to vector<16x128xi32>
    %287 = arith.cmpi eq, %7, %286 : vector<16x128xi32>
    %cst_141 = arith.constant 0.000000e+00 : f32
    %288 = vector.shape_cast %285 : vector<16x1xf32> to vector<16x1xf32>
    %289 = vector.broadcast %288 : vector<16x1xf32> to vector<16x128xf32>
    %290 = vector.broadcast %cst_141 : f32 to vector<16x128xf32>
    %291 = arith.select %287, %289, %290 : vector<16x128xi1>, vector<16x128xf32>
    %292 = arith.addf %280, %291 : vector<16x128xf32>
    %c1_142 = arith.constant 1 : index
    %c0_143 = arith.constant 0 : index
    %c0_144 = arith.constant 0 : index
    %293 = vector.load %arg5[%c1_142, %c0_143, %c0_144] : memref<10x16x205xf32, #tpu.memory_space<vmem>>, vector<1x16x205xf32>
    %294 = vector.shape_cast %293 : vector<1x16x205xf32> to vector<16x205xf32>
    %295 = arith.mulf %279, %294 : vector<16x205xf32>
    %cst_145 = arith.constant dense<0.000000e+00> : vector<16xf32>
    %296 = vector.multi_reduction <add>, %295, %cst_145 [1] : vector<16x205xf32> to vector<16xf32>
    %297 = vector.shape_cast %296 : vector<16xf32> to vector<16x1xf32>
    %c1_i32_146 = arith.constant 1 : i32
    %298 = vector.broadcast %c1_i32_146 : i32 to vector<16x128xi32>
    %299 = arith.cmpi eq, %7, %298 : vector<16x128xi32>
    %cst_147 = arith.constant 0.000000e+00 : f32
    %300 = vector.shape_cast %297 : vector<16x1xf32> to vector<16x1xf32>
    %301 = vector.broadcast %300 : vector<16x1xf32> to vector<16x128xf32>
    %302 = vector.broadcast %cst_147 : f32 to vector<16x128xf32>
    %303 = arith.select %299, %301, %302 : vector<16x128xi1>, vector<16x128xf32>
    %304 = arith.addf %292, %303 : vector<16x128xf32>
    %c2_148 = arith.constant 2 : index
    %c0_149 = arith.constant 0 : index
    %c0_150 = arith.constant 0 : index
    %305 = vector.load %arg5[%c2_148, %c0_149, %c0_150] : memref<10x16x205xf32, #tpu.memory_space<vmem>>, vector<1x16x205xf32>
    %306 = vector.shape_cast %305 : vector<1x16x205xf32> to vector<16x205xf32>
    %307 = arith.mulf %279, %306 : vector<16x205xf32>
    %cst_151 = arith.constant dense<0.000000e+00> : vector<16xf32>
    %308 = vector.multi_reduction <add>, %307, %cst_151 [1] : vector<16x205xf32> to vector<16xf32>
    %309 = vector.shape_cast %308 : vector<16xf32> to vector<16x1xf32>
    %c2_i32_152 = arith.constant 2 : i32
    %310 = vector.broadcast %c2_i32_152 : i32 to vector<16x128xi32>
    %311 = arith.cmpi eq, %7, %310 : vector<16x128xi32>
    %cst_153 = arith.constant 0.000000e+00 : f32
    %312 = vector.shape_cast %309 : vector<16x1xf32> to vector<16x1xf32>
    %313 = vector.broadcast %312 : vector<16x1xf32> to vector<16x128xf32>
    %314 = vector.broadcast %cst_153 : f32 to vector<16x128xf32>
    %315 = arith.select %311, %313, %314 : vector<16x128xi1>, vector<16x128xf32>
    %316 = arith.addf %304, %315 : vector<16x128xf32>
    %c3_154 = arith.constant 3 : index
    %c0_155 = arith.constant 0 : index
    %c0_156 = arith.constant 0 : index
    %317 = vector.load %arg5[%c3_154, %c0_155, %c0_156] : memref<10x16x205xf32, #tpu.memory_space<vmem>>, vector<1x16x205xf32>
    %318 = vector.shape_cast %317 : vector<1x16x205xf32> to vector<16x205xf32>
    %319 = arith.mulf %279, %318 : vector<16x205xf32>
    %cst_157 = arith.constant dense<0.000000e+00> : vector<16xf32>
    %320 = vector.multi_reduction <add>, %319, %cst_157 [1] : vector<16x205xf32> to vector<16xf32>
    %321 = vector.shape_cast %320 : vector<16xf32> to vector<16x1xf32>
    %c3_i32_158 = arith.constant 3 : i32
    %322 = vector.broadcast %c3_i32_158 : i32 to vector<16x128xi32>
    %323 = arith.cmpi eq, %7, %322 : vector<16x128xi32>
    %cst_159 = arith.constant 0.000000e+00 : f32
    %324 = vector.shape_cast %321 : vector<16x1xf32> to vector<16x1xf32>
    %325 = vector.broadcast %324 : vector<16x1xf32> to vector<16x128xf32>
    %326 = vector.broadcast %cst_159 : f32 to vector<16x128xf32>
    %327 = arith.select %323, %325, %326 : vector<16x128xi1>, vector<16x128xf32>
    %328 = arith.addf %316, %327 : vector<16x128xf32>
    %c4_160 = arith.constant 4 : index
    %c0_161 = arith.constant 0 : index
    %c0_162 = arith.constant 0 : index
    %329 = vector.load %arg5[%c4_160, %c0_161, %c0_162] : memref<10x16x205xf32, #tpu.memory_space<vmem>>, vector<1x16x205xf32>
    %330 = vector.shape_cast %329 : vector<1x16x205xf32> to vector<16x205xf32>
    %331 = arith.mulf %279, %330 : vector<16x205xf32>
    %cst_163 = arith.constant dense<0.000000e+00> : vector<16xf32>
    %332 = vector.multi_reduction <add>, %331, %cst_163 [1] : vector<16x205xf32> to vector<16xf32>
    %333 = vector.shape_cast %332 : vector<16xf32> to vector<16x1xf32>
    %c4_i32_164 = arith.constant 4 : i32
    %334 = vector.broadcast %c4_i32_164 : i32 to vector<16x128xi32>
    %335 = arith.cmpi eq, %7, %334 : vector<16x128xi32>
    %cst_165 = arith.constant 0.000000e+00 : f32
    %336 = vector.shape_cast %333 : vector<16x1xf32> to vector<16x1xf32>
    %337 = vector.broadcast %336 : vector<16x1xf32> to vector<16x128xf32>
    %338 = vector.broadcast %cst_165 : f32 to vector<16x128xf32>
    %339 = arith.select %335, %337, %338 : vector<16x128xi1>, vector<16x128xf32>
    %340 = arith.addf %328, %339 : vector<16x128xf32>
    %c5_166 = arith.constant 5 : index
    %c0_167 = arith.constant 0 : index
    %c0_168 = arith.constant 0 : index
    %341 = vector.load %arg5[%c5_166, %c0_167, %c0_168] : memref<10x16x205xf32, #tpu.memory_space<vmem>>, vector<1x16x205xf32>
    %342 = vector.shape_cast %341 : vector<1x16x205xf32> to vector<16x205xf32>
    %343 = arith.mulf %279, %342 : vector<16x205xf32>
    %cst_169 = arith.constant dense<0.000000e+00> : vector<16xf32>
    %344 = vector.multi_reduction <add>, %343, %cst_169 [1] : vector<16x205xf32> to vector<16xf32>
    %345 = vector.shape_cast %344 : vector<16xf32> to vector<16x1xf32>
    %c5_i32_170 = arith.constant 5 : i32
    %346 = vector.broadcast %c5_i32_170 : i32 to vector<16x128xi32>
    %347 = arith.cmpi eq, %7, %346 : vector<16x128xi32>
    %cst_171 = arith.constant 0.000000e+00 : f32
    %348 = vector.shape_cast %345 : vector<16x1xf32> to vector<16x1xf32>
    %349 = vector.broadcast %348 : vector<16x1xf32> to vector<16x128xf32>
    %350 = vector.broadcast %cst_171 : f32 to vector<16x128xf32>
    %351 = arith.select %347, %349, %350 : vector<16x128xi1>, vector<16x128xf32>
    %352 = arith.addf %340, %351 : vector<16x128xf32>
    %c6_172 = arith.constant 6 : index
    %c0_173 = arith.constant 0 : index
    %c0_174 = arith.constant 0 : index
    %353 = vector.load %arg5[%c6_172, %c0_173, %c0_174] : memref<10x16x205xf32, #tpu.memory_space<vmem>>, vector<1x16x205xf32>
    %354 = vector.shape_cast %353 : vector<1x16x205xf32> to vector<16x205xf32>
    %355 = arith.mulf %279, %354 : vector<16x205xf32>
    %cst_175 = arith.constant dense<0.000000e+00> : vector<16xf32>
    %356 = vector.multi_reduction <add>, %355, %cst_175 [1] : vector<16x205xf32> to vector<16xf32>
    %357 = vector.shape_cast %356 : vector<16xf32> to vector<16x1xf32>
    %c6_i32_176 = arith.constant 6 : i32
    %358 = vector.broadcast %c6_i32_176 : i32 to vector<16x128xi32>
    %359 = arith.cmpi eq, %7, %358 : vector<16x128xi32>
    %cst_177 = arith.constant 0.000000e+00 : f32
    %360 = vector.shape_cast %357 : vector<16x1xf32> to vector<16x1xf32>
    %361 = vector.broadcast %360 : vector<16x1xf32> to vector<16x128xf32>
    %362 = vector.broadcast %cst_177 : f32 to vector<16x128xf32>
    %363 = arith.select %359, %361, %362 : vector<16x128xi1>, vector<16x128xf32>
    %364 = arith.addf %352, %363 : vector<16x128xf32>
    %c7_178 = arith.constant 7 : index
    %c0_179 = arith.constant 0 : index
    %c0_180 = arith.constant 0 : index
    %365 = vector.load %arg5[%c7_178, %c0_179, %c0_180] : memref<10x16x205xf32, #tpu.memory_space<vmem>>, vector<1x16x205xf32>
    %366 = vector.shape_cast %365 : vector<1x16x205xf32> to vector<16x205xf32>
    %367 = arith.mulf %279, %366 : vector<16x205xf32>
    %cst_181 = arith.constant dense<0.000000e+00> : vector<16xf32>
    %368 = vector.multi_reduction <add>, %367, %cst_181 [1] : vector<16x205xf32> to vector<16xf32>
    %369 = vector.shape_cast %368 : vector<16xf32> to vector<16x1xf32>
    %c7_i32_182 = arith.constant 7 : i32
    %370 = vector.broadcast %c7_i32_182 : i32 to vector<16x128xi32>
    %371 = arith.cmpi eq, %7, %370 : vector<16x128xi32>
    %cst_183 = arith.constant 0.000000e+00 : f32
    %372 = vector.shape_cast %369 : vector<16x1xf32> to vector<16x1xf32>
    %373 = vector.broadcast %372 : vector<16x1xf32> to vector<16x128xf32>
    %374 = vector.broadcast %cst_183 : f32 to vector<16x128xf32>
    %375 = arith.select %371, %373, %374 : vector<16x128xi1>, vector<16x128xf32>
    %376 = arith.addf %364, %375 : vector<16x128xf32>
    %c8_184 = arith.constant 8 : index
    %c0_185 = arith.constant 0 : index
    %c0_186 = arith.constant 0 : index
    %377 = vector.load %arg5[%c8_184, %c0_185, %c0_186] : memref<10x16x205xf32, #tpu.memory_space<vmem>>, vector<1x16x205xf32>
    %378 = vector.shape_cast %377 : vector<1x16x205xf32> to vector<16x205xf32>
    %379 = arith.mulf %279, %378 : vector<16x205xf32>
    %cst_187 = arith.constant dense<0.000000e+00> : vector<16xf32>
    %380 = vector.multi_reduction <add>, %379, %cst_187 [1] : vector<16x205xf32> to vector<16xf32>
    %381 = vector.shape_cast %380 : vector<16xf32> to vector<16x1xf32>
    %c8_i32_188 = arith.constant 8 : i32
    %382 = vector.broadcast %c8_i32_188 : i32 to vector<16x128xi32>
    %383 = arith.cmpi eq, %7, %382 : vector<16x128xi32>
    %cst_189 = arith.constant 0.000000e+00 : f32
    %384 = vector.shape_cast %381 : vector<16x1xf32> to vector<16x1xf32>
    %385 = vector.broadcast %384 : vector<16x1xf32> to vector<16x128xf32>
    %386 = vector.broadcast %cst_189 : f32 to vector<16x128xf32>
    %387 = arith.select %383, %385, %386 : vector<16x128xi1>, vector<16x128xf32>
    %388 = arith.addf %376, %387 : vector<16x128xf32>
    %c9_190 = arith.constant 9 : index
    %c0_191 = arith.constant 0 : index
    %c0_192 = arith.constant 0 : index
    %389 = vector.load %arg5[%c9_190, %c0_191, %c0_192] : memref<10x16x205xf32, #tpu.memory_space<vmem>>, vector<1x16x205xf32>
    %390 = vector.shape_cast %389 : vector<1x16x205xf32> to vector<16x205xf32>
    %391 = arith.mulf %279, %390 : vector<16x205xf32>
    %cst_193 = arith.constant dense<0.000000e+00> : vector<16xf32>
    %392 = vector.multi_reduction <add>, %391, %cst_193 [1] : vector<16x205xf32> to vector<16xf32>
    %393 = vector.shape_cast %392 : vector<16xf32> to vector<16x1xf32>
    %c9_i32_194 = arith.constant 9 : i32
    %394 = vector.broadcast %c9_i32_194 : i32 to vector<16x128xi32>
    %395 = arith.cmpi eq, %7, %394 : vector<16x128xi32>
    %cst_195 = arith.constant 0.000000e+00 : f32
    %396 = vector.shape_cast %393 : vector<16x1xf32> to vector<16x1xf32>
    %397 = vector.broadcast %396 : vector<16x1xf32> to vector<16x128xf32>
    %398 = vector.broadcast %cst_195 : f32 to vector<16x128xf32>
    %399 = arith.select %395, %397, %398 : vector<16x128xi1>, vector<16x128xf32>
    %400 = arith.addf %388, %399 : vector<16x128xf32>
    %cst_196 = arith.constant dense<0.000000e+00> : vector<128xf32>
    %401 = vector.multi_reduction <add>, %400, %cst_196 [0] : vector<16x128xf32> to vector<128xf32>
    %402 = vector.shape_cast %401 : vector<128xf32> to vector<1x128xf32>
    %403 = arith.addf %402, %6 : vector<1x128xf32>
    %404 = tpu.concatenate %205, %403 in 0 : vector<1x128xf32>, vector<1x128xf32> -> vector<2x128xf32>
    %c0_197 = arith.constant 0 : index
    %c0_198 = arith.constant 0 : index
    %c0_199 = arith.constant 0 : index
    %405 = vector.load %arg7[%c0_197, %c0_198, %c0_199] : memref<1x2x128xf32, #tpu.memory_space<vmem>>, vector<1x2x128xf32>
    %406 = vector.shape_cast %405 : vector<1x2x128xf32> to vector<2x128xf32>
    %407 = vector.shape_cast %404 : vector<2x128xf32> to vector<1x2x128xf32>
    tpu.vector_store %arg7[%c0_197, %c0_198, %c0_199], %407 {strides = array<i32>} : memref<1x2x128xf32, #tpu.memory_space<vmem>>, vector<1x2x128xf32>,
    return
  }
  func.func @transform_0(%arg0: i32) -> (i32, i32, i32) {
    %c0_i32 = arith.constant 0 : i32
    %c0_i32_0 = arith.constant 0 : i32
    %c0_i32_1 = arith.constant 0 : i32
    return %arg0, %c0_i32, %c0_i32_0 : i32, i32, i32
  }
  func.func @transform_1(%arg0: i32) -> (i32, i32, i32) {
    %c0_i32 = arith.constant 0 : i32
    %c0_i32_0 = arith.constant 0 : i32
    %c0_i32_1 = arith.constant 0 : i32
    %c0_i32_2 = arith.constant 0 : i32
    return %c0_i32, %c0_i32_0, %c0_i32_1 : i32, i32, i32
  }
  func.func @transform_2(%arg0: i32) -> (i32, i32) {
    %c0_i32 = arith.constant 0 : i32
    %c0_i32_0 = arith.constant 0 : i32
    %c0_i32_1 = arith.constant 0 : i32
    return %c0_i32, %c0_i32_0 : i32, i32
  }
  func.func @transform_3(%arg0: i32) -> (i32, i32) {
    %c0_i32 = arith.constant 0 : i32
    %c0_i32_0 = arith.constant 0 : i32
    %c0_i32_1 = arith.constant 0 : i32
    return %c0_i32, %c0_i32_0 : i32, i32
  }
  func.func @transform_4(%arg0: i32) -> (i32, i32, i32) {
    %c0_i32 = arith.constant 0 : i32
    %c0_i32_0 = arith.constant 0 : i32
    %c0_i32_1 = arith.constant 0 : i32
    %c0_i32_2 = arith.constant 0 : i32
    return %c0_i32, %c0_i32_0, %c0_i32_1 : i32, i32, i32
  }
  func.func @transform_5(%arg0: i32) -> (i32, i32) {
    %c0_i32 = arith.constant 0 : i32
    %c0_i32_0 = arith.constant 0 : i32
    %c0_i32_1 = arith.constant 0 : i32
    return %c0_i32, %c0_i32_0 : i32, i32
  }
  func.func @transform_6(%arg0: i32) -> (i32, i32, i32) {
    %c0_i32 = arith.constant 0 : i32
    %c0_i32_0 = arith.constant 0 : i32
    %c0_i32_1 = arith.constant 0 : i32
    return %arg0, %c0_i32, %c0_i32_0 : i32, i32, i32
  }
}

</mosaic_0001>

<llo_original>
// kernel: forward.1
$region0: #{forward.1}
  #allocation0 [shape = 'u32[]', space=smem, size = 0x4, offset = 0x4, fixed_abs, tag = 'smem constant byte address 0x4 - core index']
  #allocation1 [shape = 'u32[144,128]{1,0:T(1,128)}', space=vmem, size = 0x12000, scoped, tag = 'internal scratch']
  %s0 = inlined_call_operand.vmem [shape: f32[2,4,256], index: 0, kind: input, shape index: {}]
  %s1 = inlined_call_operand.vmem [shape: f32[9,16,4], index: 1, kind: input, shape index: {}]
  %s2 = inlined_call_operand.vmem [shape: f32[16,1], index: 2, kind: input, shape index: {}]
  %s3 = inlined_call_operand.vmem [shape: f32[1,222], index: 3, kind: input, shape index: {}]
  %s4 = inlined_call_operand.vmem [shape: f32[10,16,205], index: 4, kind: input, shape index: {}]
  %s5 = inlined_call_operand.vmem [shape: f32[1,128], index: 5, kind: input, shape index: {}]
  %s6 = inlined_call_operand.hbm [shape: f32[1,2,128], index: 6, kind: output, shape index: {}]
  %s7 = sld [smem:[#allocation0]]
  $region34: #{forward.1} parent=0
    _
  %s9 = ssub.s32 1, %s7
  %s10 = scalar_select 0, %s9, %s7
  $region1: #{forward.1} parent=0
    #allocation2 [shape = 'u8[1024]{0}', space=vmem, size = 0x400, scoped, tag = 'output window, operand 0, single buffered']
    #allocation3 [shape = 's32[1]{0}', space=sflag, size = 0x4, scoped, tag = 'scoped memory for forward.1']
    %11 = vsyncpa [#allocation3], 0
    // Predicated region
    $region2: #{forward.1} parent=1 // pred_check
      _
    $region3: #{forward.1} parent=1 // pred_check_branch
      %13 = sbr.rel (0) target = $region5
    $region4: #{forward.1} parent=1 // pred_region
      _
    $region5: #{forward.1} parent=1 // pred_fallthru
      _
    // Predicated region
    $region6: #{forward.1} parent=1 // pred_check
      _
    $region7: #{forward.1} parent=1 // pred_check_branch
      %15 = sbr.rel (0) target = $region9
    $region8: #{forward.1} parent=1 // pred_region
      _
    $region9: #{forward.1} parent=1 // pred_fallthru
      _
    // Predicated region
    $region10: #{forward.1} parent=1 // pred_check
      _
    $region11: #{forward.1} parent=1 // pred_check_branch
      %17 = sbr.rel (0) target = $region13
    $region12: #{forward.1} parent=1 // pred_region
      _
    $region13: #{forward.1} parent=1 // pred_fallthru
      _
    // Predicated region
    $region14: #{forward.1} parent=1 // pred_check
      _
    $region15: #{forward.1} parent=1 // pred_check_branch
      %19 = sbr.rel (0) target = $region17
    $region16: #{forward.1} parent=1 // pred_region
      _
    $region17: #{forward.1} parent=1 // pred_fallthru
      _
    // Predicated region
    $region18: #{forward.1} parent=1 // pred_check
      _
    $region19: #{forward.1} parent=1 // pred_check_branch
      %21 = sbr.rel (0) target = $region21
    $region20: #{forward.1} parent=1 // pred_region
      _
    $region21: #{forward.1} parent=1 // pred_fallthru
      _
    // Predicated region
    $region22: #{forward.1} parent=1 // pred_check
      _
    $region23: #{forward.1} parent=1 // pred_check_branch
      %23 = sbr.rel (0) target = $region25
    $region24: #{forward.1} parent=1 // pred_region
      _
    $region25: #{forward.1} parent=1 // pred_fallthru
      _
    %v24 = vld [vmem:[%s3] sm:$0x3]
    %v26 = vlaneseq
    %v27 = vshrl.u32 %v26, 7
    %v28 = vsub.s32 0, %v27
    %v29 = vrot.slane %v24, %v28
    %v30 = vlaneseq
    %v31 = vshrl.u32 %v30, 7
    %v32 = vsub.s32 1, %v31
    %v33 = vrot.slane %v24, %v32
    %v36 = vld [vmem:[%s2] sm:$0xff]
    %v37 = vld [vmem:[%s2 + $0x8] sm:$0xff]
    %39 = vset.pattern.permute.xlu0 0
    %40 = vperm.xlu0 %39, %v36
    %v41 = vpop.permute.xlu0 %40
    %44 = vset.pattern.permute.xlu0 0
    %45 = vperm.xlu0 %44, %v37
    %v46 = vpop.permute.xlu0 %45
    %v48 = vld [vmem:[%s5] sm:$0x1]
    %v49 = vlaneseq
    %v50 = vand.u32 %v49, 127
    %v51 = vld [vmem:[%s0] sm:$0xff]
    %v52 = vld [vmem:[%s1] sm:$0xff]
    %v53 = vld [vmem:[%s1 + $0x8] sm:$0xff]
    %v55 = vcombine.high %v51, %v51
    %vm56 = vcmask 31744
    %v58 = vsel %vm56, %v52, 0
    %v61 = vsel %vm56, %v53, 0
    %vm63 = vcmask 1043456
    %v64 = vsel %vm63, %v51, 0
    %v66 = vsel %vm63, %v55, 0
    %68 = vmatprep.subr.mxu0 %v66
    %69 = vmatpush1.msra.mxu0 %v64
    %70 = vmatprep.subr.mxu0 0.0
    %71 = vmatpush1.msra.mxu0 0.0
    %72 = vmatprep.subr.mxu0 0.0
    %73 = vmatpush1.msra.mxu0 0.0
    %74 = vmatprep.subr.mxu0 0.0
    %75 = vmatpush1.msra.mxu0 0.0
    %76 = vmatprep.subr.mxu0 0.0
    %77 = vmatpush1.msra.mxu0 0.0
    %78 = vmatprep.subr.mxu0 0.0
    %79 = vmatpush1.msra.mxu0 0.0
    %80 = vmatprep.subr.mxu0 0.0
    %81 = vmatpush1.msra.mxu0 0.0
    %82 = vmatprep.subr.mxu0 0.0
    %83 = vmatpush1.msra.mxu0 0.0
    %84 = vmatprep.subr.mxu0 0.0
    %85 = vmatpush1.msra.mxu0 0.0
    %86 = vmatprep.subr.mxu0 0.0
    %87 = vmatpush1.msra.mxu0 0.0
    %88 = vmatprep.subr.mxu0 0.0
    %89 = vmatpush1.msra.mxu0 0.0
    %90 = vmatprep.subr.mxu0 0.0
    %91 = vmatpush1.msra.mxu0 0.0
    %92 = vmatprep.subr.mxu0 0.0
    %93 = vmatpush1.msra.mxu0 0.0
    %94 = vmatprep.subr.mxu0 0.0
    %95 = vmatpush1.msra.mxu0 0.0
    %96 = vmatprep.subr.mxu0 0.0
    %97 = vmatpush1.msra.mxu0 0.0
    %98 = vmatprep.subr.mxu0 0.0
    %99 = vmatpush1.msra.mxu0 0.0
    %100 = vmatprep.subr.mxu0 0.0
    %101 = vmatpush1.msra.mxu0 0.0
    %102 = vmatprep.subr.mxu0 0.0
    %103 = vmatpush1.msra.mxu0 0.0
    %104 = vmatprep.subr.mxu0 0.0
    %105 = vmatpush1.msra.mxu0 0.0
    %106 = vmatprep.subr.mxu0 0.0
    %107 = vmatpush1.msra.mxu0 0.0
    %108 = vmatprep.subr.mxu0 0.0
    %109 = vmatpush1.msra.mxu0 0.0
    %110 = vmatprep.subr.mxu0 0.0
    %111 = vmatpush1.msra.mxu0 0.0
    %112 = vmatprep.subr.mxu0 0.0
    %113 = vmatpush1.msra.mxu0 0.0
    %114 = vmatprep.subr.mxu0 0.0
    %115 = vmatpush1.msra.mxu0 0.0
    %116 = vmatprep.subr.mxu0 0.0
    %117 = vmatpush1.msra.mxu0 0.0
    %118 = vmatprep.subr.mxu0 0.0
    %119 = vmatpush1.msra.mxu0 0.0
    %120 = vmatprep.subr.mxu0 0.0
    %121 = vmatpush1.msra.mxu0 0.0
    %122 = vmatprep.subr.mxu0 0.0
    %123 = vmatpush1.msra.mxu0 0.0
    %124 = vmatprep.subr.mxu0 0.0
    %125 = vmatpush1.msra.mxu0 0.0
    %126 = vmatprep.subr.mxu0 0.0
    %127 = vmatpush1.msra.mxu0 0.0
    %128 = vmatprep.subr.mxu0 0.0
    %129 = vmatpush1.msra.mxu0 0.0
    %130 = vmatprep.subr.mxu0 0.0
    %131 = vmatpush1.msra.mxu0 0.0
    %132 = vmatprep.mubr.f32.mxu0 0.0
    %133 = vmatmul.mubr.f32.gmra.mrb[0].mxu0 %v58
    %v134 = vpop.f32.mrb[0].mxu0
    %v135 = vadd.f32 0.0, %v134
    %v136 = vpop.f32.mrb[0].mxu0
    %v137 = vadd.f32 0.0, %v136
    %138 = vmatprep.mubr.f32.mxu0 0.0
    %139 = vmatmul.mubr.f32.gmra.mrb[0].mxu0 %v61
    %v140 = vpop.f32.mrb[0].mxu0
    %v141 = vadd.f32 0.0, %v140
    %v142 = vpop.f32.mrb[0].mxu0
    %v143 = vadd.f32 0.0, %v142
    %144 = vdwg.mxu0
    %v145 = vadd.f32 %v41, %v135
    %v146 = vadd.f32 %v41, %v137
    %v147 = vadd.f32 %v46, %v141
    %v148 = vadd.f32 %v46, %v143
    %s149 = scalar_lea.vmem %s1, 16
    %v150 = vld [vmem:[%s149] sm:$0xff]
    %v151 = vld [vmem:[%s149 + $0x8] sm:$0xff]
    %152 = vrot.lane.b32.xlu0 %v51, 127
    %v153 = vpop.permute.xlu0 %152
    %154 = vrot.lane.b32.xlu0 %v55, 127
    %v155 = vpop.permute.xlu0 %154
    %vm156 = vcmask 1039360
    %v157 = vsel %vm156, %v153, %v155
    %v159 = vsel %vm56, %v150, 0
    %v162 = vsel %vm56, %v151, 0
    %v164 = vsel %vm63, %v157, 0
    %v166 = vsel %vm63, %v155, 0
    %168 = vmatprep.subr.mxu0 %v166
    %169 = vmatpush1.msra.mxu0 %v164
    %170 = vmatprep.subr.mxu0 0.0
    %171 = vmatpush1.msra.mxu0 0.0
    %172 = vmatprep.subr.mxu0 0.0
    %173 = vmatpush1.msra.mxu0 0.0
    %174 = vmatprep.subr.mxu0 0.0
    %175 = vmatpush1.msra.mxu0 0.0
    %176 = vmatprep.subr.mxu0 0.0
    %177 = vmatpush1.msra.mxu0 0.0
    %178 = vmatprep.subr.mxu0 0.0
    %179 = vmatpush1.msra.mxu0 0.0
    %180 = vmatprep.subr.mxu0 0.0
    %181 = vmatpush1.msra.mxu0 0.0
    %182 = vmatprep.subr.mxu0 0.0
    %183 = vmatpush1.msra.mxu0 0.0
    %184 = vmatprep.subr.mxu0 0.0
    %185 = vmatpush1.msra.mxu0 0.0
    %186 = vmatprep.subr.mxu0 0.0
    %187 = vmatpush1.msra.mxu0 0.0
    %188 = vmatprep.subr.mxu0 0.0
    %189 = vmatpush1.msra.mxu0 0.0
    %190 = vmatprep.subr.mxu0 0.0
    %191 = vmatpush1.msra.mxu0 0.0
    %192 = vmatprep.subr.mxu0 0.0
    %193 = vmatpush1.msra.mxu0 0.0
    %194 = vmatprep.subr.mxu0 0.0
    %195 = vmatpush1.msra.mxu0 0.0
    %196 = vmatprep.subr.mxu0 0.0
    %197 = vmatpush1.msra.mxu0 0.0
    %198 = vmatprep.subr.mxu0 0.0
    %199 = vmatpush1.msra.mxu0 0.0
    %200 = vmatprep.subr.mxu0 0.0
    %201 = vmatpush1.msra.mxu0 0.0
    %202 = vmatprep.subr.mxu0 0.0
    %203 = vmatpush1.msra.mxu0 0.0
    %204 = vmatprep.subr.mxu0 0.0
    %205 = vmatpush1.msra.mxu0 0.0
    %206 = vmatprep.subr.mxu0 0.0
    %207 = vmatpush1.msra.mxu0 0.0
    %208 = vmatprep.subr.mxu0 0.0
    %209 = vmatpush1.msra.mxu0 0.0
    %210 = vmatprep.subr.mxu0 0.0
    %211 = vmatpush1.msra.mxu0 0.0
    %212 = vmatprep.subr.mxu0 0.0
    %213 = vmatpush1.msra.mxu0 0.0
    %214 = vmatprep.subr.mxu0 0.0
    %215 = vmatpush1.msra.mxu0 0.0
    %216 = vmatprep.subr.mxu0 0.0
    %217 = vmatpush1.msra.mxu0 0.0
    %218 = vmatprep.subr.mxu0 0.0
    %219 = vmatpush1.msra.mxu0 0.0
    %220 = vmatprep.subr.mxu0 0.0
    %221 = vmatpush1.msra.mxu0 0.0
    %222 = vmatprep.subr.mxu0 0.0
    %223 = vmatpush1.msra.mxu0 0.0
    %224 = vmatprep.subr.mxu0 0.0
    %225 = vmatpush1.msra.mxu0 0.0
    %226 = vmatprep.subr.mxu0 0.0
    %227 = vmatpush1.msra.mxu0 0.0
    %228 = vmatprep.subr.mxu0 0.0
    %229 = vmatpush1.msra.mxu0 0.0
    %230 = vmatprep.subr.mxu0 0.0
    %231 = vmatpush1.msra.mxu0 0.0
    %232 = vmatprep.mubr.f32.mxu0 0.0
    %233 = vmatmul.mubr.f32.gmra.mrb[0].mxu0 %v159
    %v234 = vpop.f32.mrb[0].mxu0
    %v235 = vadd.f32 0.0, %v234
    %v236 = vpop.f32.mrb[0].mxu0
    %v237 = vadd.f32 0.0, %v236
    %238 = vmatprep.mubr.f32.mxu0 0.0
    %239 = vmatmul.mubr.f32.gmra.mrb[0].mxu0 %v162
    %v240 = vpop.f32.mrb[0].mxu0
    %v241 = vadd.f32 0.0, %v240
    %v242 = vpop.f32.mrb[0].mxu0
    %v243 = vadd.f32 0.0, %v242
    %244 = vdwg.mxu0
    %v245 = vadd.f32 %v145, %v235
    %v246 = vadd.f32 %v146, %v237
    %v247 = vadd.f32 %v147, %v241
    %v248 = vadd.f32 %v148, %v243
    %s249 = scalar_lea.vmem %s1, 32
    %v250 = vld [vmem:[%s249] sm:$0xff]
    %v251 = vld [vmem:[%s249 + $0x8] sm:$0xff]
    %252 = vrot.lane.b32.xlu0 %v51, 126
    %v253 = vpop.permute.xlu0 %252
    %254 = vrot.lane.b32.xlu0 %v55, 126
    %v255 = vpop.permute.xlu0 %254
    %vm256 = vcmask 1031168
    %v257 = vsel %vm256, %v253, %v255
    %v259 = vsel %vm56, %v250, 0
    %v262 = vsel %vm56, %v251, 0
    %v264 = vsel %vm63, %v257, 0
    %v266 = vsel %vm63, %v255, 0
    %268 = vmatprep.subr.mxu0 %v266
    %269 = vmatpush1.msra.mxu0 %v264
    %270 = vmatprep.subr.mxu0 0.0
    %271 = vmatpush1.msra.mxu0 0.0
    %272 = vmatprep.subr.mxu0 0.0
    %273 = vmatpush1.msra.mxu0 0.0
    %274 = vmatprep.subr.mxu0 0.0
    %275 = vmatpush1.msra.mxu0 0.0
    %276 = vmatprep.subr.mxu0 0.0
    %277 = vmatpush1.msra.mxu0 0.0
    %278 = vmatprep.subr.mxu0 0.0
    %279 = vmatpush1.msra.mxu0 0.0
    %280 = vmatprep.subr.mxu0 0.0
    %281 = vmatpush1.msra.mxu0 0.0
    %282 = vmatprep.subr.mxu0 0.0
    %283 = vmatpush1.msra.mxu0 0.0
    %284 = vmatprep.subr.mxu0 0.0
    %285 = vmatpush1.msra.mxu0 0.0
    %286 = vmatprep.subr.mxu0 0.0
    %287 = vmatpush1.msra.mxu0 0.0
    %288 = vmatprep.subr.mxu0 0.0
    %289 = vmatpush1.msra.mxu0 0.0
    %290 = vmatprep.subr.mxu0 0.0
    %291 = vmatpush1.msra.mxu0 0.0
    %292 = vmatprep.subr.mxu0 0.0
    %293 = vmatpush1.msra.mxu0 0.0
    %294 = vmatprep.subr.mxu0 0.0
    %295 = vmatpush1.msra.mxu0 0.0
    %296 = vmatprep.subr.mxu0 0.0
    %297 = vmatpush1.msra.mxu0 0.0
    %298 = vmatprep.subr.mxu0 0.0
    %299 = vmatpush1.msra.mxu0 0.0
    %300 = vmatprep.subr.mxu0 0.0
    %301 = vmatpush1.msra.mxu0 0.0
    %302 = vmatprep.subr.mxu0 0.0
    %303 = vmatpush1.msra.mxu0 0.0
    %304 = vmatprep.subr.mxu0 0.0
    %305 = vmatpush1.msra.mxu0 0.0
    %306 = vmatprep.subr.mxu0 0.0
    %307 = vmatpush1.msra.mxu0 0.0
    %308 = vmatprep.subr.mxu0 0.0
    %309 = vmatpush1.msra.mxu0 0.0
    %310 = vmatprep.subr.mxu0 0.0
    %311 = vmatpush1.msra.mxu0 0.0
    %312 = vmatprep.subr.mxu0 0.0
    %313 = vmatpush1.msra.mxu0 0.0
    %314 = vmatprep.subr.mxu0 0.0
    %315 = vmatpush1.msra.mxu0 0.0
    %316 = vmatprep.subr.mxu0 0.0
    %317 = vmatpush1.msra.mxu0 0.0
    %318 = vmatprep.subr.mxu0 0.0
    %319 = vmatpush1.msra.mxu0 0.0
    %320 = vmatprep.subr.mxu0 0.0
    %321 = vmatpush1.msra.mxu0 0.0
    %322 = vmatprep.subr.mxu0 0.0
    %323 = vmatpush1.msra.mxu0 0.0
    %324 = vmatprep.subr.mxu0 0.0
    %325 = vmatpush1.msra.mxu0 0.0
    %326 = vmatprep.subr.mxu0 0.0
    %327 = vmatpush1.msra.mxu0 0.0
    %328 = vmatprep.subr.mxu0 0.0
    %329 = vmatpush1.msra.mxu0 0.0
    %330 = vmatprep.subr.mxu0 0.0
    %331 = vmatpush1.msra.mxu0 0.0
    %332 = vmatprep.mubr.f32.mxu0 0.0
    %333 = vmatmul.mubr.f32.gmra.mrb[0].mxu0 %v259
    %v334 = vpop.f32.mrb[0].mxu0
    %v335 = vadd.f32 0.0, %v334
    %v336 = vpop.f32.mrb[0].mxu0
    %v337 = vadd.f32 0.0, %v336
    %338 = vmatprep.mubr.f32.mxu0 0.0
    %339 = vmatmul.mubr.f32.gmra.mrb[0].mxu0 %v262
    %v340 = vpop.f32.mrb[0].mxu0
    %v341 = vadd.f32 0.0, %v340
    %v342 = vpop.f32.mrb[0].mxu0
    %v343 = vadd.f32 0.0, %v342
    %344 = vdwg.mxu0
    %v345 = vadd.f32 %v245, %v335
    %v346 = vadd.f32 %v246, %v337
    %v347 = vadd.f32 %v247, %v341
    %v348 = vadd.f32 %v248, %v343
    %s349 = scalar_lea.vmem %s1, 48
    %v350 = vld [vmem:[%s349] sm:$0xff]
    %v351 = vld [vmem:[%s349 + $0x8] sm:$0xff]
    %352 = vrot.lane.b32.xlu0 %v51, 112
    %v353 = vpop.permute.xlu0 %352
    %354 = vrot.lane.b32.xlu0 %v55, 112
    %v355 = vpop.permute.xlu0 %354
    %vm356 = vcmask 916480
    %v357 = vsel %vm356, %v353, %v355
    %v359 = vsel %vm56, %v350, 0
    %v362 = vsel %vm56, %v351, 0
    %v364 = vsel %vm63, %v357, 0
    %v366 = vsel %vm63, %v355, 0
    %368 = vmatprep.subr.mxu0 %v366
    %369 = vmatpush1.msra.mxu0 %v364
    %370 = vmatprep.subr.mxu0 0.0
    %371 = vmatpush1.msra.mxu0 0.0
    %372 = vmatprep.subr.mxu0 0.0
    %373 = vmatpush1.msra.mxu0 0.0
    %374 = vmatprep.subr.mxu0 0.0
    %375 = vmatpush1.msra.mxu0 0.0
    %376 = vmatprep.subr.mxu0 0.0
    %377 = vmatpush1.msra.mxu0 0.0
    %378 = vmatprep.subr.mxu0 0.0
    %379 = vmatpush1.msra.mxu0 0.0
    %380 = vmatprep.subr.mxu0 0.0
    %381 = vmatpush1.msra.mxu0 0.0
    %382 = vmatprep.subr.mxu0 0.0
    %383 = vmatpush1.msra.mxu0 0.0
    %384 = vmatprep.subr.mxu0 0.0
    %385 = vmatpush1.msra.mxu0 0.0
    %386 = vmatprep.subr.mxu0 0.0
    %387 = vmatpush1.msra.mxu0 0.0
    %388 = vmatprep.subr.mxu0 0.0
    %389 = vmatpush1.msra.mxu0 0.0
    %390 = vmatprep.subr.mxu0 0.0
    %391 = vmatpush1.msra.mxu0 0.0
    %392 = vmatprep.subr.mxu0 0.0
    %393 = vmatpush1.msra.mxu0 0.0
    %394 = vmatprep.subr.mxu0 0.0
    %395 = vmatpush1.msra.mxu0 0.0
    %396 = vmatprep.subr.mxu0 0.0
    %397 = vmatpush1.msra.mxu0 0.0
    %398 = vmatprep.subr.mxu0 0.0
    %399 = vmatpush1.msra.mxu0 0.0
    %400 = vmatprep.subr.mxu0 0.0
    %401 = vmatpush1.msra.mxu0 0.0
    %402 = vmatprep.subr.mxu0 0.0
    %403 = vmatpush1.msra.mxu0 0.0
    %404 = vmatprep.subr.mxu0 0.0
    %405 = vmatpush1.msra.mxu0 0.0
    %406 = vmatprep.subr.mxu0 0.0
    %407 = vmatpush1.msra.mxu0 0.0
    %408 = vmatprep.subr.mxu0 0.0
    %409 = vmatpush1.msra.mxu0 0.0
    %410 = vmatprep.subr.mxu0 0.0
    %411 = vmatpush1.msra.mxu0 0.0
    %412 = vmatprep.subr.mxu0 0.0
    %413 = vmatpush1.msra.mxu0 0.0
    %414 = vmatprep.subr.mxu0 0.0
    %415 = vmatpush1.msra.mxu0 0.0
    %416 = vmatprep.subr.mxu0 0.0
    %417 = vmatpush1.msra.mxu0 0.0
    %418 = vmatprep.subr.mxu0 0.0
    %419 = vmatpush1.msra.mxu0 0.0
    %420 = vmatprep.subr.mxu0 0.0
    %421 = vmatpush1.msra.mxu0 0.0
    %422 = vmatprep.subr.mxu0 0.0
    %423 = vmatpush1.msra.mxu0 0.0
    %424 = vmatprep.subr.mxu0 0.0
    %425 = vmatpush1.msra.mxu0 0.0
    %426 = vmatprep.subr.mxu0 0.0
    %427 = vmatpush1.msra.mxu0 0.0
    %428 = vmatprep.subr.mxu0 0.0
    %429 = vmatpush1.msra.mxu0 0.0
    %430 = vmatprep.subr.mxu0 0.0
    %431 = vmatpush1.msra.mxu0 0.0
    %432 = vmatprep.mubr.f32.mxu0 0.0
    %433 = vmatmul.mubr.f32.gmra.mrb[0].mxu0 %v359
    %v434 = vpop.f32.mrb[0].mxu0
    %v435 = vadd.f32 0.0, %v434
    %v436 = vpop.f32.mrb[0].mxu0
    %v437 = vadd.f32 0.0, %v436
    %438 = vmatprep.mubr.f32.mxu0 0.0
    %439 = vmatmul.mubr.f32.gmra.mrb[0].mxu0 %v362
    %v440 = vpop.f32.mrb[0].mxu0
    %v441 = vadd.f32 0.0, %v440
    %v442 = vpop.f32.mrb[0].mxu0
    %v443 = vadd.f32 0.0, %v442
    %444 = vdwg.mxu0
    %v445 = vadd.f32 %v345, %v435
    %v446 = vadd.f32 %v346, %v437
    %v447 = vadd.f32 %v347, %v441
    %v448 = vadd.f32 %v348, %v443
    %s449 = scalar_lea.vmem %s1, 64
    %v450 = vld [vmem:[%s449] sm:$0xff]
    %v451 = vld [vmem:[%s449 + $0x8] sm:$0xff]
    %452 = vrot.lane.b32.xlu0 %v51, 111
    %v453 = vpop.permute.xlu0 %452
    %454 = vrot.lane.b32.xlu0 %v55, 111
    %v455 = vpop.permute.xlu0 %454
    %vm456 = vcmask 908288
    %v457 = vsel %vm456, %v453, %v455
    %v459 = vsel %vm56, %v450, 0
    %v462 = vsel %vm56, %v451, 0
    %v464 = vsel %vm63, %v457, 0
    %v466 = vsel %vm63, %v455, 0
    %468 = vmatprep.subr.mxu0 %v466
    %469 = vmatpush1.msra.mxu0 %v464
    %470 = vmatprep.subr.mxu0 0.0
    %471 = vmatpush1.msra.mxu0 0.0
    %472 = vmatprep.subr.mxu0 0.0
    %473 = vmatpush1.msra.mxu0 0.0
    %474 = vmatprep.subr.mxu0 0.0
    %475 = vmatpush1.msra.mxu0 0.0
    %476 = vmatprep.subr.mxu0 0.0
    %477 = vmatpush1.msra.mxu0 0.0
    %478 = vmatprep.subr.mxu0 0.0
    %479 = vmatpush1.msra.mxu0 0.0
    %480 = vmatprep.subr.mxu0 0.0
    %481 = vmatpush1.msra.mxu0 0.0
    %482 = vmatprep.subr.mxu0 0.0
    %483 = vmatpush1.msra.mxu0 0.0
    %484 = vmatprep.subr.mxu0 0.0
    %485 = vmatpush1.msra.mxu0 0.0
    %486 = vmatprep.subr.mxu0 0.0
    %487 = vmatpush1.msra.mxu0 0.0
    %488 = vmatprep.subr.mxu0 0.0
    %489 = vmatpush1.msra.mxu0 0.0
    %490 = vmatprep.subr.mxu0 0.0
    %491 = vmatpush1.msra.mxu0 0.0
    %492 = vmatprep.subr.mxu0 0.0
    %493 = vmatpush1.msra.mxu0 0.0
    %494 = vmatprep.subr.mxu0 0.0
    %495 = vmatpush1.msra.mxu0 0.0
    %496 = vmatprep.subr.mxu0 0.0
    %497 = vmatpush1.msra.mxu0 0.0
    %498 = vmatprep.subr.mxu0 0.0
    %499 = vmatpush1.msra.mxu0 0.0
    %500 = vmatprep.subr.mxu0 0.0
    %501 = vmatpush1.msra.mxu0 0.0
    %502 = vmatprep.subr.mxu0 0.0
    %503 = vmatpush1.msra.mxu0 0.0
    %504 = vmatprep.subr.mxu0 0.0
    %505 = vmatpush1.msra.mxu0 0.0
    %506 = vmatprep.subr.mxu0 0.0
    %507 = vmatpush1.msra.mxu0 0.0
    %508 = vmatprep.subr.mxu0 0.0
    %509 = vmatpush1.msra.mxu0 0.0
    %510 = vmatprep.subr.mxu0 0.0
    %511 = vmatpush1.msra.mxu0 0.0
    %512 = vmatprep.subr.mxu0 0.0
    %513 = vmatpush1.msra.mxu0 0.0
    %514 = vmatprep.subr.mxu0 0.0
    %515 = vmatpush1.msra.mxu0 0.0
    %516 = vmatprep.subr.mxu0 0.0
    %517 = vmatpush1.msra.mxu0 0.0
    %518 = vmatprep.subr.mxu0 0.0
    %519 = vmatpush1.msra.mxu0 0.0
    %520 = vmatprep.subr.mxu0 0.0
    %521 = vmatpush1.msra.mxu0 0.0
    %522 = vmatprep.subr.mxu0 0.0
    %523 = vmatpush1.msra.mxu0 0.0
    %524 = vmatprep.subr.mxu0 0.0
    %525 = vmatpush1.msra.mxu0 0.0
    %526 = vmatprep.subr.mxu0 0.0
    %527 = vmatpush1.msra.mxu0 0.0
    %528 = vmatprep.subr.mxu0 0.0
    %529 = vmatpush1.msra.mxu0 0.0
    %530 = vmatprep.subr.mxu0 0.0
    %531 = vmatpush1.msra.mxu0 0.0
    %532 = vmatprep.mubr.f32.mxu0 0.0
    %533 = vmatmul.mubr.f32.gmra.mrb[0].mxu0 %v459
    %v534 = vpop.f32.mrb[0].mxu0
    %v535 = vadd.f32 0.0, %v534
    %v536 = vpop.f32.mrb[0].mxu0
    %v537 = vadd.f32 0.0, %v536
    %538 = vmatprep.mubr.f32.mxu0 0.0
    %539 = vmatmul.mubr.f32.gmra.mrb[0].mxu0 %v462
    %v540 = vpop.f32.mrb[0].mxu0
    %v541 = vadd.f32 0.0, %v540
    %v542 = vpop.f32.mrb[0].mxu0
    %v543 = vadd.f32 0.0, %v542
    %544 = vdwg.mxu0
    %v545 = vadd.f32 %v445, %v535
    %v546 = vadd.f32 %v446, %v537
    %v547 = vadd.f32 %v447, %v541
    %v548 = vadd.f32 %v448, %v543
    %s549 = scalar_lea.vmem %s1, 80
    %v550 = vld [vmem:[%s549] sm:$0xff]
    %v551 = vld [vmem:[%s549 + $0x8] sm:$0xff]
    %552 = vrot.lane.b32.xlu0 %v51, 110
    %v553 = vpop.permute.xlu0 %552
    %554 = vrot.lane.b32.xlu0 %v55, 110
    %v555 = vpop.permute.xlu0 %554
    %vm556 = vcmask 900096
    %v557 = vsel %vm556, %v553, %v555
    %v559 = vsel %vm56, %v550, 0
    %v562 = vsel %vm56, %v551, 0
    %v564 = vsel %vm63, %v557, 0
    %v566 = vsel %vm63, %v555, 0
    %568 = vmatprep.subr.mxu0 %v566
    %569 = vmatpush1.msra.mxu0 %v564
    %570 = vmatprep.subr.mxu0 0.0
    %571 = vmatpush1.msra.mxu0 0.0
    %572 = vmatprep.subr.mxu0 0.0
    %573 = vmatpush1.msra.mxu0 0.0
    %574 = vmatprep.subr.mxu0 0.0
    %575 = vmatpush1.msra.mxu0 0.0
    %576 = vmatprep.subr.mxu0 0.0
    %577 = vmatpush1.msra.mxu0 0.0
    %578 = vmatprep.subr.mxu0 0.0
    %579 = vmatpush1.msra.mxu0 0.0
    %580 = vmatprep.subr.mxu0 0.0
    %581 = vmatpush1.msra.mxu0 0.0
    %582 = vmatprep.subr.mxu0 0.0
    %583 = vmatpush1.msra.mxu0 0.0
    %584 = vmatprep.subr.mxu0 0.0
    %585 = vmatpush1.msra.mxu0 0.0
    %586 = vmatprep.subr.mxu0 0.0
    %587 = vmatpush1.msra.mxu0 0.0
    %588 = vmatprep.subr.mxu0 0.0
    %589 = vmatpush1.msra.mxu0 0.0
    %590 = vmatprep.subr.mxu0 0.0
    %591 = vmatpush1.msra.mxu0 0.0
    %592 = vmatprep.subr.mxu0 0.0
    %593 = vmatpush1.msra.mxu0 0.0
    %594 = vmatprep.subr.mxu0 0.0
    %595 = vmatpush1.msra.mxu0 0.0
    %596 = vmatprep.subr.mxu0 0.0
    %597 = vmatpush1.msra.mxu0 0.0
    %598 = vmatprep.subr.mxu0 0.0
    %599 = vmatpush1.msra.mxu0 0.0
    %600 = vmatprep.subr.mxu0 0.0
    %601 = vmatpush1.msra.mxu0 0.0
    %602 = vmatprep.subr.mxu0 0.0
    %603 = vmatpush1.msra.mxu0 0.0
    %604 = vmatprep.subr.mxu0 0.0
    %605 = vmatpush1.msra.mxu0 0.0
    %606 = vmatprep.subr.mxu0 0.0
    %607 = vmatpush1.msra.mxu0 0.0
    %608 = vmatprep.subr.mxu0 0.0
    %609 = vmatpush1.msra.mxu0 0.0
    %610 = vmatprep.subr.mxu0 0.0
    %611 = vmatpush1.msra.mxu0 0.0
    %612 = vmatprep.subr.mxu0 0.0
    %613 = vmatpush1.msra.mxu0 0.0
    %614 = vmatprep.subr.mxu0 0.0
    %615 = vmatpush1.msra.mxu0 0.0
    %616 = vmatprep.subr.mxu0 0.0
    %617 = vmatpush1.msra.mxu0 0.0
    %618 = vmatprep.subr.mxu0 0.0
    %619 = vmatpush1.msra.mxu0 0.0
    %620 = vmatprep.subr.mxu0 0.0
    %621 = vmatpush1.msra.mxu0 0.0
    %622 = vmatprep.subr.mxu0 0.0
    %623 = vmatpush1.msra.mxu0 0.0
    %624 = vmatprep.subr.mxu0 0.0
    %625 = vmatpush1.msra.mxu0 0.0
    %626 = vmatprep.subr.mxu0 0.0
    %627 = vmatpush1.msra.mxu0 0.0
    %628 = vmatprep.subr.mxu0 0.0
    %629 = vmatpush1.msra.mxu0 0.0
    %630 = vmatprep.subr.mxu0 0.0
    %631 = vmatpush1.msra.mxu0 0.0
    %632 = vmatprep.mubr.f32.mxu0 0.0
    %633 = vmatmul.mubr.f32.gmra.mrb[0].mxu0 %v559
    %v634 = vpop.f32.mrb[0].mxu0
    %v635 = vadd.f32 0.0, %v634
    %v636 = vpop.f32.mrb[0].mxu0
    %v637 = vadd.f32 0.0, %v636
    %638 = vmatprep.mubr.f32.mxu0 0.0
    %639 = vmatmul.mubr.f32.gmra.mrb[0].mxu0 %v562
    %v640 = vpop.f32.mrb[0].mxu0
    %v641 = vadd.f32 0.0, %v640
    %v642 = vpop.f32.mrb[0].mxu0
    %v643 = vadd.f32 0.0, %v642
    %644 = vdwg.mxu0
    %v645 = vadd.f32 %v545, %v635
    %v646 = vadd.f32 %v546, %v637
    %v647 = vadd.f32 %v547, %v641
    %v648 = vadd.f32 %v548, %v643
    %s649 = scalar_lea.vmem %s1, 96
    %v650 = vld [vmem:[%s649] sm:$0xff]
    %v651 = vld [vmem:[%s649 + $0x8] sm:$0xff]
    %652 = vrot.lane.b32.xlu0 %v51, 96
    %v653 = vpop.permute.xlu0 %652
    %654 = vrot.lane.b32.xlu0 %v55, 96
    %v655 = vpop.permute.xlu0 %654
    %vm656 = vcmask 785408
    %v657 = vsel %vm656, %v653, %v655
    %v659 = vsel %vm56, %v650, 0
    %v662 = vsel %vm56, %v651, 0
    %v664 = vsel %vm63, %v657, 0
    %v666 = vsel %vm63, %v655, 0
    %668 = vmatprep.subr.mxu0 %v666
    %669 = vmatpush1.msra.mxu0 %v664
    %670 = vmatprep.subr.mxu0 0.0
    %671 = vmatpush1.msra.mxu0 0.0
    %672 = vmatprep.subr.mxu0 0.0
    %673 = vmatpush1.msra.mxu0 0.0
    %674 = vmatprep.subr.mxu0 0.0
    %675 = vmatpush1.msra.mxu0 0.0
    %676 = vmatprep.subr.mxu0 0.0
    %677 = vmatpush1.msra.mxu0 0.0
    %678 = vmatprep.subr.mxu0 0.0
    %679 = vmatpush1.msra.mxu0 0.0
    %680 = vmatprep.subr.mxu0 0.0
    %681 = vmatpush1.msra.mxu0 0.0
    %682 = vmatprep.subr.mxu0 0.0
    %683 = vmatpush1.msra.mxu0 0.0
    %684 = vmatprep.subr.mxu0 0.0
    %685 = vmatpush1.msra.mxu0 0.0
    %686 = vmatprep.subr.mxu0 0.0
    %687 = vmatpush1.msra.mxu0 0.0
    %688 = vmatprep.subr.mxu0 0.0
    %689 = vmatpush1.msra.mxu0 0.0
    %690 = vmatprep.subr.mxu0 0.0
    %691 = vmatpush1.msra.mxu0 0.0
    %692 = vmatprep.subr.mxu0 0.0
    %693 = vmatpush1.msra.mxu0 0.0
    %694 = vmatprep.subr.mxu0 0.0
    %695 = vmatpush1.msra.mxu0 0.0
    %696 = vmatprep.subr.mxu0 0.0
    %697 = vmatpush1.msra.mxu0 0.0
    %698 = vmatprep.subr.mxu0 0.0
    %699 = vmatpush1.msra.mxu0 0.0
    %700 = vmatprep.subr.mxu0 0.0
    %701 = vmatpush1.msra.mxu0 0.0
    %702 = vmatprep.subr.mxu0 0.0
    %703 = vmatpush1.msra.mxu0 0.0
    %704 = vmatprep.subr.mxu0 0.0
    %705 = vmatpush1.msra.mxu0 0.0
    %706 = vmatprep.subr.mxu0 0.0
    %707 = vmatpush1.msra.mxu0 0.0
    %708 = vmatprep.subr.mxu0 0.0
    %709 = vmatpush1.msra.mxu0 0.0
    %710 = vmatprep.subr.mxu0 0.0
    %711 = vmatpush1.msra.mxu0 0.0
    %712 = vmatprep.subr.mxu0 0.0
    %713 = vmatpush1.msra.mxu0 0.0
    %714 = vmatprep.subr.mxu0 0.0
    %715 = vmatpush1.msra.mxu0 0.0
    %716 = vmatprep.subr.mxu0 0.0
    %717 = vmatpush1.msra.mxu0 0.0
    %718 = vmatprep.subr.mxu0 0.0
    %719 = vmatpush1.msra.mxu0 0.0
    %720 = vmatprep.subr.mxu0 0.0
    %721 = vmatpush1.msra.mxu0 0.0
    %722 = vmatprep.subr.mxu0 0.0
    %723 = vmatpush1.msra.mxu0 0.0
    %724 = vmatprep.subr.mxu0 0.0
    %725 = vmatpush1.msra.mxu0 0.0
    %726 = vmatprep.subr.mxu0 0.0
    %727 = vmatpush1.msra.mxu0 0.0
    %728 = vmatprep.subr.mxu0 0.0
    %729 = vmatpush1.msra.mxu0 0.0
    %730 = vmatprep.subr.mxu0 0.0
    %731 = vmatpush1.msra.mxu0 0.0
    %732 = vmatprep.mubr.f32.mxu0 0.0
    %733 = vmatmul.mubr.f32.gmra.mrb[0].mxu0 %v659
    %v734 = vpop.f32.mrb[0].mxu0
    %v735 = vadd.f32 0.0, %v734
    %v736 = vpop.f32.mrb[0].mxu0
    %v737 = vadd.f32 0.0, %v736
    %738 = vmatprep.mubr.f32.mxu0 0.0
    %739 = vmatmul.mubr.f32.gmra.mrb[0].mxu0 %v662
    %v740 = vpop.f32.mrb[0].mxu0
    %v741 = vadd.f32 0.0, %v740
    %v742 = vpop.f32.mrb[0].mxu0
    %v743 = vadd.f32 0.0, %v742
    %744 = vdwg.mxu0
    %v745 = vadd.f32 %v645, %v735
    %v746 = vadd.f32 %v646, %v737
    %v747 = vadd.f32 %v647, %v741
    %v748 = vadd.f32 %v648, %v743
    %s749 = scalar_lea.vmem %s1, 112
    %v750 = vld [vmem:[%s749] sm:$0xff]
    %v751 = vld [vmem:[%s749 + $0x8] sm:$0xff]
    %752 = vrot.lane.b32.xlu0 %v51, 95
    %v753 = vpop.permute.xlu0 %752
    %754 = vrot.lane.b32.xlu0 %v55, 95
    %v755 = vpop.permute.xlu0 %754
    %vm756 = vcmask 777216
    %v757 = vsel %vm756, %v753, %v755
    %v759 = vsel %vm56, %v750, 0
    %v762 = vsel %vm56, %v751, 0
    %v764 = vsel %vm63, %v757, 0
    %v766 = vsel %vm63, %v755, 0
    %768 = vmatprep.subr.mxu0 %v766
    %769 = vmatpush1.msra.mxu0 %v764
    %770 = vmatprep.subr.mxu0 0.0
    %771 = vmatpush1.msra.mxu0 0.0
    %772 = vmatprep.subr.mxu0 0.0
    %773 = vmatpush1.msra.mxu0 0.0
    %774 = vmatprep.subr.mxu0 0.0
    %775 = vmatpush1.msra.mxu0 0.0
    %776 = vmatprep.subr.mxu0 0.0
    %777 = vmatpush1.msra.mxu0 0.0
    %778 = vmatprep.subr.mxu0 0.0
    %779 = vmatpush1.msra.mxu0 0.0
    %780 = vmatprep.subr.mxu0 0.0
    %781 = vmatpush1.msra.mxu0 0.0
    %782 = vmatprep.subr.mxu0 0.0
    %783 = vmatpush1.msra.mxu0 0.0
    %784 = vmatprep.subr.mxu0 0.0
    %785 = vmatpush1.msra.mxu0 0.0
    %786 = vmatprep.subr.mxu0 0.0
    %787 = vmatpush1.msra.mxu0 0.0
    %788 = vmatprep.subr.mxu0 0.0
    %789 = vmatpush1.msra.mxu0 0.0
    %790 = vmatprep.subr.mxu0 0.0
    %791 = vmatpush1.msra.mxu0 0.0
    %792 = vmatprep.subr.mxu0 0.0
    %793 = vmatpush1.msra.mxu0 0.0
    %794 = vmatprep.subr.mxu0 0.0
    %795 = vmatpush1.msra.mxu0 0.0
    %796 = vmatprep.subr.mxu0 0.0
    %797 = vmatpush1.msra.mxu0 0.0
    %798 = vmatprep.subr.mxu0 0.0
    %799 = vmatpush1.msra.mxu0 0.0
    %800 = vmatprep.subr.mxu0 0.0
    %801 = vmatpush1.msra.mxu0 0.0
    %802 = vmatprep.subr.mxu0 0.0
    %803 = vmatpush1.msra.mxu0 0.0
    %804 = vmatprep.subr.mxu0 0.0
    %805 = vmatpush1.msra.mxu0 0.0
    %806 = vmatprep.subr.mxu0 0.0
    %807 = vmatpush1.msra.mxu0 0.0
    %808 = vmatprep.subr.mxu0 0.0
    %809 = vmatpush1.msra.mxu0 0.0
    %810 = vmatprep.subr.mxu0 0.0
    %811 = vmatpush1.msra.mxu0 0.0
    %812 = vmatprep.subr.mxu0 0.0
    %813 = vmatpush1.msra.mxu0 0.0
    %814 = vmatprep.subr.mxu0 0.0
    %815 = vmatpush1.msra.mxu0 0.0
    %816 = vmatprep.subr.mxu0 0.0
    %817 = vmatpush1.msra.mxu0 0.0
    %818 = vmatprep.subr.mxu0 0.0
    %819 = vmatpush1.msra.mxu0 0.0
    %820 = vmatprep.subr.mxu0 0.0
    %821 = vmatpush1.msra.mxu0 0.0
    %822 = vmatprep.subr.mxu0 0.0
    %823 = vmatpush1.msra.mxu0 0.0
    %824 = vmatprep.subr.mxu0 0.0
    %825 = vmatpush1.msra.mxu0 0.0
    %826 = vmatprep.subr.mxu0 0.0
    %827 = vmatpush1.msra.mxu0 0.0
    %828 = vmatprep.subr.mxu0 0.0
    %829 = vmatpush1.msra.mxu0 0.0
    %830 = vmatprep.subr.mxu0 0.0
    %831 = vmatpush1.msra.mxu0 0.0
    %832 = vmatprep.mubr.f32.mxu0 0.0
    %833 = vmatmul.mubr.f32.gmra.mrb[0].mxu0 %v759
    %v834 = vpop.f32.mrb[0].mxu0
    %v835 = vadd.f32 0.0, %v834
    %v836 = vpop.f32.mrb[0].mxu0
    %v837 = vadd.f32 0.0, %v836
    %838 = vmatprep.mubr.f32.mxu0 0.0
    %839 = vmatmul.mubr.f32.gmra.mrb[0].mxu0 %v762
    %v840 = vpop.f32.mrb[0].mxu0
    %v841 = vadd.f32 0.0, %v840
    %v842 = vpop.f32.mrb[0].mxu0
    %v843 = vadd.f32 0.0, %v842
    %844 = vdwg.mxu0
    %v845 = vadd.f32 %v745, %v835
    %v846 = vadd.f32 %v746, %v837
    %v847 = vadd.f32 %v747, %v841
    %v848 = vadd.f32 %v748, %v843
    %s849 = scalar_lea.vmem %s1, 128
    %v850 = vld [vmem:[%s849] sm:$0xff]
    %v851 = vld [vmem:[%s849 + $0x8] sm:$0xff]
    %852 = vrot.lane.b32.xlu0 %v51, 94
    %v853 = vpop.permute.xlu0 %852
    %854 = vrot.lane.b32.xlu0 %v55, 94
    %v855 = vpop.permute.xlu0 %854
    %vm856 = vcmask 769024
    %v857 = vsel %vm856, %v853, %v855
    %v859 = vsel %vm56, %v850, 0
    %v862 = vsel %vm56, %v851, 0
    %v864 = vsel %vm63, %v857, 0
    %v866 = vsel %vm63, %v855, 0
    %868 = vmatprep.subr.mxu0 %v866
    %869 = vmatpush1.msra.mxu0 %v864
    %870 = vmatprep.subr.mxu0 0.0
    %871 = vmatpush1.msra.mxu0 0.0
    %872 = vmatprep.subr.mxu0 0.0
    %873 = vmatpush1.msra.mxu0 0.0
    %874 = vmatprep.subr.mxu0 0.0
    %875 = vmatpush1.msra.mxu0 0.0
    %876 = vmatprep.subr.mxu0 0.0
    %877 = vmatpush1.msra.mxu0 0.0
    %878 = vmatprep.subr.mxu0 0.0
    %879 = vmatpush1.msra.mxu0 0.0
    %880 = vmatprep.subr.mxu0 0.0
    %881 = vmatpush1.msra.mxu0 0.0
    %882 = vmatprep.subr.mxu0 0.0
    %883 = vmatpush1.msra.mxu0 0.0
    %884 = vmatprep.subr.mxu0 0.0
    %885 = vmatpush1.msra.mxu0 0.0
    %886 = vmatprep.subr.mxu0 0.0
    %887 = vmatpush1.msra.mxu0 0.0
    %888 = vmatprep.subr.mxu0 0.0
    %889 = vmatpush1.msra.mxu0 0.0
    %890 = vmatprep.subr.mxu0 0.0
    %891 = vmatpush1.msra.mxu0 0.0
    %892 = vmatprep.subr.mxu0 0.0
    %893 = vmatpush1.msra.mxu0 0.0
    %894 = vmatprep.subr.mxu0 0.0
    %895 = vmatpush1.msra.mxu0 0.0
    %896 = vmatprep.subr.mxu0 0.0
    %897 = vmatpush1.msra.mxu0 0.0
    %898 = vmatprep.subr.mxu0 0.0
    %899 = vmatpush1.msra.mxu0 0.0
    %900 = vmatprep.subr.mxu0 0.0
    %901 = vmatpush1.msra.mxu0 0.0
    %902 = vmatprep.subr.mxu0 0.0
    %903 = vmatpush1.msra.mxu0 0.0
    %904 = vmatprep.subr.mxu0 0.0
    %905 = vmatpush1.msra.mxu0 0.0
    %906 = vmatprep.subr.mxu0 0.0
    %907 = vmatpush1.msra.mxu0 0.0
    %908 = vmatprep.subr.mxu0 0.0
    %909 = vmatpush1.msra.mxu0 0.0
    %910 = vmatprep.subr.mxu0 0.0
    %911 = vmatpush1.msra.mxu0 0.0
    %912 = vmatprep.subr.mxu0 0.0
    %913 = vmatpush1.msra.mxu0 0.0
    %914 = vmatprep.subr.mxu0 0.0
    %915 = vmatpush1.msra.mxu0 0.0
    %916 = vmatprep.subr.mxu0 0.0
    %917 = vmatpush1.msra.mxu0 0.0
    %918 = vmatprep.subr.mxu0 0.0
    %919 = vmatpush1.msra.mxu0 0.0
    %920 = vmatprep.subr.mxu0 0.0
    %921 = vmatpush1.msra.mxu0 0.0
    %922 = vmatprep.subr.mxu0 0.0
    %923 = vmatpush1.msra.mxu0 0.0
    %924 = vmatprep.subr.mxu0 0.0
    %925 = vmatpush1.msra.mxu0 0.0
    %926 = vmatprep.subr.mxu0 0.0
    %927 = vmatpush1.msra.mxu0 0.0
    %928 = vmatprep.subr.mxu0 0.0
    %929 = vmatpush1.msra.mxu0 0.0
    %930 = vmatprep.subr.mxu0 0.0
    %931 = vmatpush1.msra.mxu0 0.0
    %932 = vmatprep.mubr.f32.mxu0 0.0
    %933 = vmatmul.mubr.f32.gmra.mrb[0].mxu0 %v859
    %v934 = vpop.f32.mrb[0].mxu0
    %v935 = vadd.f32 0.0, %v934
    %v936 = vpop.f32.mrb[0].mxu0
    %v937 = vadd.f32 0.0, %v936
    %938 = vmatprep.mubr.f32.mxu0 0.0
    %939 = vmatmul.mubr.f32.gmra.mrb[0].mxu0 %v862
    %v940 = vpop.f32.mrb[0].mxu0
    %v941 = vadd.f32 0.0, %v940
    %v942 = vpop.f32.mrb[0].mxu0
    %v943 = vadd.f32 0.0, %v942
    %944 = vdwg.mxu0
    %v945 = vadd.f32 %v845, %v935
    %v946 = vadd.f32 %v846, %v937
    %v947 = vadd.f32 %v847, %v941
    %v948 = vadd.f32 %v848, %v943
    %v949 = vmul.f32 %v945, %v29
    %v950 = vmul.f32 %v946, %v33
    %v951 = vmul.f32 %v947, %v29
    %v952 = vmul.f32 %v948, %v33
    %v953 = vsel %vm856, %v950, 0.0
    %v954 = vadd.f32 %v949, %v953
    %955 = vadd.xlane.f32.xlu0 %v954
    %v956 = vpop.xlane.xlu0 %955
    %v957 = vsel %vm856, %v952, 0.0
    %v958 = vadd.f32 %v951, %v957
    %959 = vadd.xlane.f32.xlu0 %v958
    %v960 = vpop.xlane.xlu0 %959
    %v961 = vmul.f32 %v956, 0.0051020407
    %v962 = vmul.f32 %v960, 0.0051020407
    %v963 = vsub.f32 %v945, %v961
    %v964 = vsub.f32 %v946, %v961
    %v965 = vsub.f32 %v947, %v962
    %v966 = vsub.f32 %v948, %v962
    %v967 = vmul.f32 %v963, %v29
    %v968 = vmul.f32 %v964, %v33
    %v969 = vmul.f32 %v965, %v29
    %v970 = vmul.f32 %v966, %v33
    %v971 = vmul.f32 %v967, %v967
    %v972 = vmul.f32 %v968, %v968
    %v973 = vmul.f32 %v969, %v969
    %v974 = vmul.f32 %v970, %v970
    %v975 = vsel %vm856, %v972, 0.0
    %v976 = vadd.f32 %v971, %v975
    %977 = vadd.xlane.f32.xlu0 %v976
    %v978 = vpop.xlane.xlu0 %977
    %v979 = vsel %vm856, %v974, 0.0
    %v980 = vadd.f32 %v973, %v979
    %981 = vadd.xlane.f32.xlu0 %v980
    %v982 = vpop.xlane.xlu0 %981
    %v983 = vmul.f32 %v978, 0.0051020407
    %v984 = vmul.f32 %v982, 0.0051020407
    %v985 = vadd.f32 %v983, 1e-05
    %v986 = vadd.f32 %v984, 1e-05
    %v987 = vrsqrt.pop %v985
    %v988 = vrsqrt.pop %v986
    %v989 = vmul.f32 %v963, %v987
    %v990 = vmul.f32 %v964, %v987
    %v991 = vmul.f32 %v965, %v988
    %v992 = vmul.f32 %v966, %v988
    %997 = vrot.lane.b32.xlu0 %v989, 127
    %v998 = vpop.permute.xlu0 %997
    %999 = vrot.lane.b32.xlu0 %v990, 127
    %v1000 = vpop.permute.xlu0 %999
    %1001 = vrot.lane.b32.xlu0 %v991, 127
    %v1002 = vpop.permute.xlu0 %1001
    %1003 = vrot.lane.b32.xlu0 %v992, 127
    %v1004 = vpop.permute.xlu0 %1003
    %v1005 = vsel %vm156, %v998, %v1000
    %v1006 = vsel %vm156, %v1002, %v1004
    %v1011 = vmax.f32 %v989, %v1005
    %v1012 = vmax.f32 %v990, %v1000
    %v1013 = vmax.f32 %v991, %v1006
    %v1014 = vmax.f32 %v992, %v1004
    %1019 = vrot.lane.b32.xlu0 %v1011, 112
    %v1020 = vpop.permute.xlu0 %1019
    %1021 = vrot.lane.b32.xlu0 %v1012, 112
    %v1022 = vpop.permute.xlu0 %1021
    %1023 = vrot.lane.b32.xlu0 %v1013, 112
    %v1024 = vpop.permute.xlu0 %1023
    %1025 = vrot.lane.b32.xlu0 %v1014, 112
    %v1026 = vpop.permute.xlu0 %1025
    %v1027 = vsel %vm356, %v1020, %v1022
    %v1028 = vsel %vm356, %v1024, %v1026
    %v1033 = vmax.f32 %v1011, %v1027
    %v1034 = vmax.f32 %v1012, %v1022
    %v1035 = vmax.f32 %v1013, %v1028
    %v1036 = vmax.f32 %v1014, %v1026
    %v1037 = vld [vmem:[%s4] sm:$0xff]
    %v1038 = vld [vmem:[%s4 + $0x8] sm:$0xff]
    %v1039 = vld [vmem:[%s4 + $0x10] sm:$0xff]
    %v1040 = vld [vmem:[%s4 + $0x18] sm:$0xff]
    %v1041 = vmul.f32 %v1033, %v1037
    %v1042 = vmul.f32 %v1034, %v1038
    %v1043 = vmul.f32 %v1035, %v1039
    %v1044 = vmul.f32 %v1036, %v1040
    %vm1045 = vcmask 629760
    %v1046 = vsel %vm1045, %v1042, 0.0
    %v1047 = vadd.f32 %v1041, %v1046
    %1048 = vadd.xlane.f32.xlu0 %v1047
    %v1049 = vpop.xlane.xlu0 %1048
    %v1050 = vsel %vm1045, %v1044, 0.0
    %v1051 = vadd.f32 %v1043, %v1050
    %1052 = vadd.xlane.f32.xlu0 %v1051
    %v1053 = vpop.xlane.xlu0 %1052
    %vm1054 = vcmp.eq.s32.totalorder %v50, 0
    %v1055 = vsel %vm1054, %v1049, 0.0
    %v1056 = vsel %vm1054, %v1053, 0.0
    %v1057 = vadd.f32 %v1055, 0.0
    %v1058 = vadd.f32 %v1056, 0.0
    %s1059 = scalar_lea.vmem %s4, 32
    %v1060 = vld [vmem:[%s1059] sm:$0xff]
    %v1061 = vld [vmem:[%s1059 + $0x8] sm:$0xff]
    %v1062 = vld [vmem:[%s1059 + $0x10] sm:$0xff]
    %v1063 = vld [vmem:[%s1059 + $0x18] sm:$0xff]
    %v1064 = vmul.f32 %v1033, %v1060
    %v1065 = vmul.f32 %v1034, %v1061
    %v1066 = vmul.f32 %v1035, %v1062
    %v1067 = vmul.f32 %v1036, %v1063
    %v1068 = vsel %vm1045, %v1065, 0.0
    %v1069 = vadd.f32 %v1064, %v1068
    %1070 = vadd.xlane.f32.xlu0 %v1069
    %v1071 = vpop.xlane.xlu0 %1070
    %v1072 = vsel %vm1045, %v1067, 0.0
    %v1073 = vadd.f32 %v1066, %v1072
    %1074 = vadd.xlane.f32.xlu0 %v1073
    %v1075 = vpop.xlane.xlu0 %1074
    %vm1076 = vcmp.eq.s32.totalorder %v50, 1
    %v1077 = vsel %vm1076, %v1071, 0.0
    %v1078 = vsel %vm1076, %v1075, 0.0
    %v1079 = vadd.f32 %v1057, %v1077
    %v1080 = vadd.f32 %v1058, %v1078
    %s1081 = scalar_lea.vmem %s4, 64
    %v1082 = vld [vmem:[%s1081] sm:$0xff]
    %v1083 = vld [vmem:[%s1081 + $0x8] sm:$0xff]
    %v1084 = vld [vmem:[%s1081 + $0x10] sm:$0xff]
    %v1085 = vld [vmem:[%s1081 + $0x18] sm:$0xff]
    %v1086 = vmul.f32 %v1033, %v1082
    %v1087 = vmul.f32 %v1034, %v1083
    %v1088 = vmul.f32 %v1035, %v1084
    %v1089 = vmul.f32 %v1036, %v1085
    %v1090 = vsel %vm1045, %v1087, 0.0
    %v1091 = vadd.f32 %v1086, %v1090
    %1092 = vadd.xlane.f32.xlu0 %v1091
    %v1093 = vpop.xlane.xlu0 %1092
    %v1094 = vsel %vm1045, %v1089, 0.0
    %v1095 = vadd.f32 %v1088, %v1094
    %1096 = vadd.xlane.f32.xlu0 %v1095
    %v1097 = vpop.xlane.xlu0 %1096
    %vm1098 = vcmp.eq.s32.totalorder %v50, 2
    %v1099 = vsel %vm1098, %v1093, 0.0
    %v1100 = vsel %vm1098, %v1097, 0.0
    %v1101 = vadd.f32 %v1079, %v1099
    %v1102 = vadd.f32 %v1080, %v1100
    %s1103 = scalar_lea.vmem %s4, 96
    %v1104 = vld [vmem:[%s1103] sm:$0xff]
    %v1105 = vld [vmem:[%s1103 + $0x8] sm:$0xff]
    %v1106 = vld [vmem:[%s1103 + $0x10] sm:$0xff]
    %v1107 = vld [vmem:[%s1103 + $0x18] sm:$0xff]
    %v1108 = vmul.f32 %v1033, %v1104
    %v1109 = vmul.f32 %v1034, %v1105
    %v1110 = vmul.f32 %v1035, %v1106
    %v1111 = vmul.f32 %v1036, %v1107
    %v1112 = vsel %vm1045, %v1109, 0.0
    %v1113 = vadd.f32 %v1108, %v1112
    %1114 = vadd.xlane.f32.xlu0 %v1113
    %v1115 = vpop.xlane.xlu0 %1114
    %v1116 = vsel %vm1045, %v1111, 0.0
    %v1117 = vadd.f32 %v1110, %v1116
    %1118 = vadd.xlane.f32.xlu0 %v1117
    %v1119 = vpop.xlane.xlu0 %1118
    %vm1120 = vcmp.eq.s32.totalorder %v50, 3
    %v1121 = vsel %vm1120, %v1115, 0.0
    %v1122 = vsel %vm1120, %v1119, 0.0
    %v1123 = vadd.f32 %v1101, %v1121
    %v1124 = vadd.f32 %v1102, %v1122
    %s1125 = scalar_lea.vmem %s4, 128
    %v1126 = vld [vmem:[%s1125] sm:$0xff]
    %v1127 = vld [vmem:[%s1125 + $0x8] sm:$0xff]
    %v1128 = vld [vmem:[%s1125 + $0x10] sm:$0xff]
    %v1129 = vld [vmem:[%s1125 + $0x18] sm:$0xff]
    %v1130 = vmul.f32 %v1033, %v1126
    %v1131 = vmul.f32 %v1034, %v1127
    %v1132 = vmul.f32 %v1035, %v1128
    %v1133 = vmul.f32 %v1036, %v1129
    %v1134 = vsel %vm1045, %v1131, 0.0
    %v1135 = vadd.f32 %v1130, %v1134
    %1136 = vadd.xlane.f32.xlu0 %v1135
    %v1137 = vpop.xlane.xlu0 %1136
    %v1138 = vsel %vm1045, %v1133, 0.0
    %v1139 = vadd.f32 %v1132, %v1138
    %1140 = vadd.xlane.f32.xlu0 %v1139
    %v1141 = vpop.xlane.xlu0 %1140
    %vm1142 = vcmp.eq.s32.totalorder %v50, 4
    %v1143 = vsel %vm1142, %v1137, 0.0
    %v1144 = vsel %vm1142, %v1141, 0.0
    %v1145 = vadd.f32 %v1123, %v1143
    %v1146 = vadd.f32 %v1124, %v1144
    %s1147 = scalar_lea.vmem %s4, 160
    %v1148 = vld [vmem:[%s1147] sm:$0xff]
    %v1149 = vld [vmem:[%s1147 + $0x8] sm:$0xff]
    %v1150 = vld [vmem:[%s1147 + $0x10] sm:$0xff]
    %v1151 = vld [vmem:[%s1147 + $0x18] sm:$0xff]
    %v1152 = vmul.f32 %v1033, %v1148
    %v1153 = vmul.f32 %v1034, %v1149
    %v1154 = vmul.f32 %v1035, %v1150
    %v1155 = vmul.f32 %v1036, %v1151
    %v1156 = vsel %vm1045, %v1153, 0.0
    %v1157 = vadd.f32 %v1152, %v1156
    %1158 = vadd.xlane.f32.xlu0 %v1157
    %v1159 = vpop.xlane.xlu0 %1158
    %v1160 = vsel %vm1045, %v1155, 0.0
    %v1161 = vadd.f32 %v1154, %v1160
    %1162 = vadd.xlane.f32.xlu0 %v1161
    %v1163 = vpop.xlane.xlu0 %1162
    %vm1164 = vcmp.eq.s32.totalorder %v50, 5
    %v1165 = vsel %vm1164, %v1159, 0.0
    %v1166 = vsel %vm1164, %v1163, 0.0
    %v1167 = vadd.f32 %v1145, %v1165
    %v1168 = vadd.f32 %v1146, %v1166
    %s1169 = scalar_lea.vmem %s4, 192
    %v1170 = vld [vmem:[%s1169] sm:$0xff]
    %v1171 = vld [vmem:[%s1169 + $0x8] sm:$0xff]
    %v1172 = vld [vmem:[%s1169 + $0x10] sm:$0xff]
    %v1173 = vld [vmem:[%s1169 + $0x18] sm:$0xff]
    %v1174 = vmul.f32 %v1033, %v1170
    %v1175 = vmul.f32 %v1034, %v1171
    %v1176 = vmul.f32 %v1035, %v1172
    %v1177 = vmul.f32 %v1036, %v1173
    %v1178 = vsel %vm1045, %v1175, 0.0
    %v1179 = vadd.f32 %v1174, %v1178
    %1180 = vadd.xlane.f32.xlu0 %v1179
    %v1181 = vpop.xlane.xlu0 %1180
    %v1182 = vsel %vm1045, %v1177, 0.0
    %v1183 = vadd.f32 %v1176, %v1182
    %1184 = vadd.xlane.f32.xlu0 %v1183
    %v1185 = vpop.xlane.xlu0 %1184
    %vm1186 = vcmp.eq.s32.totalorder %v50, 6
    %v1187 = vsel %vm1186, %v1181, 0.0
    %v1188 = vsel %vm1186, %v1185, 0.0
    %v1189 = vadd.f32 %v1167, %v1187
    %v1190 = vadd.f32 %v1168, %v1188
    %s1191 = scalar_lea.vmem %s4, 224
    %v1192 = vld [vmem:[%s1191] sm:$0xff]
    %v1193 = vld [vmem:[%s1191 + $0x8] sm:$0xff]
    %v1194 = vld [vmem:[%s1191 + $0x10] sm:$0xff]
    %v1195 = vld [vmem:[%s1191 + $0x18] sm:$0xff]
    %v1196 = vmul.f32 %v1033, %v1192
    %v1197 = vmul.f32 %v1034, %v1193
    %v1198 = vmul.f32 %v1035, %v1194
    %v1199 = vmul.f32 %v1036, %v1195
    %v1200 = vsel %vm1045, %v1197, 0.0
    %v1201 = vadd.f32 %v1196, %v1200
    %1202 = vadd.xlane.f32.xlu0 %v1201
    %v1203 = vpop.xlane.xlu0 %1202
    %v1204 = vsel %vm1045, %v1199, 0.0
    %v1205 = vadd.f32 %v1198, %v1204
    %1206 = vadd.xlane.f32.xlu0 %v1205
    %v1207 = vpop.xlane.xlu0 %1206
    %vm1208 = vcmp.eq.s32.totalorder %v50, 7
    %v1209 = vsel %vm1208, %v1203, 0.0
    %v1210 = vsel %vm1208, %v1207, 0.0
    %v1211 = vadd.f32 %v1189, %v1209
    %v1212 = vadd.f32 %v1190, %v1210
    %s1213 = scalar_lea.vmem %s4, 256
    %v1214 = vld [vmem:[%s1213] sm:$0xff]
    %v1215 = vld [vmem:[%s1213 + $0x8] sm:$0xff]
    %v1216 = vld [vmem:[%s1213 + $0x10] sm:$0xff]
    %v1217 = vld [vmem:[%s1213 + $0x18] sm:$0xff]
    %v1218 = vmul.f32 %v1033, %v1214
    %v1219 = vmul.f32 %v1034, %v1215
    %v1220 = vmul.f32 %v1035, %v1216
    %v1221 = vmul.f32 %v1036, %v1217
    %v1222 = vsel %vm1045, %v1219, 0.0
    %v1223 = vadd.f32 %v1218, %v1222
    %1224 = vadd.xlane.f32.xlu0 %v1223
    %v1225 = vpop.xlane.xlu0 %1224
    %v1226 = vsel %vm1045, %v1221, 0.0
    %v1227 = vadd.f32 %v1220, %v1226
    %1228 = vadd.xlane.f32.xlu0 %v1227
    %v1229 = vpop.xlane.xlu0 %1228
    %vm1230 = vcmp.eq.s32.totalorder %v50, 8
    %v1231 = vsel %vm1230, %v1225, 0.0
    %v1232 = vsel %vm1230, %v1229, 0.0
    %v1233 = vadd.f32 %v1211, %v1231
    %v1234 = vadd.f32 %v1212, %v1232
    %s1235 = scalar_lea.vmem %s4, 288
    %v1236 = vld [vmem:[%s1235] sm:$0xff]
    %v1237 = vld [vmem:[%s1235 + $0x8] sm:$0xff]
    %v1238 = vld [vmem:[%s1235 + $0x10] sm:$0xff]
    %v1239 = vld [vmem:[%s1235 + $0x18] sm:$0xff]
    %v1240 = vmul.f32 %v1033, %v1236
    %v1241 = vmul.f32 %v1034, %v1237
    %v1242 = vmul.f32 %v1035, %v1238
    %v1243 = vmul.f32 %v1036, %v1239
    %v1244 = vsel %vm1045, %v1241, 0.0
    %v1245 = vadd.f32 %v1240, %v1244
    %1246 = vadd.xlane.f32.xlu0 %v1245
    %v1247 = vpop.xlane.xlu0 %1246
    %v1248 = vsel %vm1045, %v1243, 0.0
    %v1249 = vadd.f32 %v1242, %v1248
    %1250 = vadd.xlane.f32.xlu0 %v1249
    %v1251 = vpop.xlane.xlu0 %1250
    %vm1252 = vcmp.eq.s32.totalorder %v50, 9
    %v1253 = vsel %vm1252, %v1247, 0.0
    %v1254 = vsel %vm1252, %v1251, 0.0
    %v1255 = vadd.f32 %v1233, %v1253
    %v1256 = vadd.f32 %v1234, %v1254
    %v1257 = vadd.f32 %v1255, %v1256
    %v1258 = vrot.slane %v1257, 4
    %v1259 = vadd.f32 %v1257, %v1258
    %v1260 = vrot.slane %v1259, 2
    %v1261 = vadd.f32 %v1259, %v1260
    %v1262 = vrot.slane %v1261, 1
    %v1263 = vadd.f32 %v1261, %v1262
    %v1264 = vadd.f32 %v1263, %v48
    %s1265 = scalar_lea.vmem %s0, 8
    %v1266 = vld [vmem:[%s1265] sm:$0xff]
    %v1268 = vcombine.high %v1266, %v1266
    %v1269 = vsel %vm63, %v1266, 0
    %v1271 = vsel %vm63, %v1268, 0
    %1273 = vmatprep.subr.mxu0 %v1271
    %1274 = vmatpush1.msra.mxu0 %v1269
    %1275 = vmatprep.subr.mxu0 0.0
    %1276 = vmatpush1.msra.mxu0 0.0
    %1277 = vmatprep.subr.mxu0 0.0
    %1278 = vmatpush1.msra.mxu0 0.0
    %1279 = vmatprep.subr.mxu0 0.0
    %1280 = vmatpush1.msra.mxu0 0.0
    %1281 = vmatprep.subr.mxu0 0.0
    %1282 = vmatpush1.msra.mxu0 0.0
    %1283 = vmatprep.subr.mxu0 0.0
    %1284 = vmatpush1.msra.mxu0 0.0
    %1285 = vmatprep.subr.mxu0 0.0
    %1286 = vmatpush1.msra.mxu0 0.0
    %1287 = vmatprep.subr.mxu0 0.0
    %1288 = vmatpush1.msra.mxu0 0.0
    %1289 = vmatprep.subr.mxu0 0.0
    %1290 = vmatpush1.msra.mxu0 0.0
    %1291 = vmatprep.subr.mxu0 0.0
    %1292 = vmatpush1.msra.mxu0 0.0
    %1293 = vmatprep.subr.mxu0 0.0
    %1294 = vmatpush1.msra.mxu0 0.0
    %1295 = vmatprep.subr.mxu0 0.0
    %1296 = vmatpush1.msra.mxu0 0.0
    %1297 = vmatprep.subr.mxu0 0.0
    %1298 = vmatpush1.msra.mxu0 0.0
    %1299 = vmatprep.subr.mxu0 0.0
    %1300 = vmatpush1.msra.mxu0 0.0
    %1301 = vmatprep.subr.mxu0 0.0
    %1302 = vmatpush1.msra.mxu0 0.0
    %1303 = vmatprep.subr.mxu0 0.0
    %1304 = vmatpush1.msra.mxu0 0.0
    %1305 = vmatprep.subr.mxu0 0.0
    %1306 = vmatpush1.msra.mxu0 0.0
    %1307 = vmatprep.subr.mxu0 0.0
    %1308 = vmatpush1.msra.mxu0 0.0
    %1309 = vmatprep.subr.mxu0 0.0
    %1310 = vmatpush1.msra.mxu0 0.0
    %1311 = vmatprep.subr.mxu0 0.0
    %1312 = vmatpush1.msra.mxu0 0.0
    %1313 = vmatprep.subr.mxu0 0.0
    %1314 = vmatpush1.msra.mxu0 0.0
    %1315 = vmatprep.subr.mxu0 0.0
    %1316 = vmatpush1.msra.mxu0 0.0
    %1317 = vmatprep.subr.mxu0 0.0
    %1318 = vmatpush1.msra.mxu0 0.0
    %1319 = vmatprep.subr.mxu0 0.0
    %1320 = vmatpush1.msra.mxu0 0.0
    %1321 = vmatprep.subr.mxu0 0.0
    %1322 = vmatpush1.msra.mxu0 0.0
    %1323 = vmatprep.subr.mxu0 0.0
    %1324 = vmatpush1.msra.mxu0 0.0
    %1325 = vmatprep.subr.mxu0 0.0
    %1326 = vmatpush1.msra.mxu0 0.0
    %1327 = vmatprep.subr.mxu0 0.0
    %1328 = vmatpush1.msra.mxu0 0.0
    %1329 = vmatprep.subr.mxu0 0.0
    %1330 = vmatpush1.msra.mxu0 0.0
    %1331 = vmatprep.subr.mxu0 0.0
    %1332 = vmatpush1.msra.mxu0 0.0
    %1333 = vmatprep.subr.mxu0 0.0
    %1334 = vmatpush1.msra.mxu0 0.0
    %1335 = vmatprep.subr.mxu0 0.0
    %1336 = vmatpush1.msra.mxu0 0.0
    %1337 = vmatprep.mubr.f32.mxu0 0.0
    %1338 = vmatmul.mubr.f32.gmra.mrb[0].mxu0 %v58
    %v1339 = vpop.f32.mrb[0].mxu0
    %v1340 = vadd.f32 0.0, %v1339
    %v1341 = vpop.f32.mrb[0].mxu0
    %v1342 = vadd.f32 0.0, %v1341
    %1343 = vmatprep.mubr.f32.mxu0 0.0
    %1344 = vmatmul.mubr.f32.gmra.mrb[0].mxu0 %v61
    %v1345 = vpop.f32.mrb[0].mxu0
    %v1346 = vadd.f32 0.0, %v1345
    %v1347 = vpop.f32.mrb[0].mxu0
    %v1348 = vadd.f32 0.0, %v1347
    %1349 = vdwg.mxu0
    %v1350 = vadd.f32 %v41, %v1340
    %v1351 = vadd.f32 %v41, %v1342
    %v1352 = vadd.f32 %v46, %v1346
    %v1353 = vadd.f32 %v46, %v1348
    %1354 = vrot.lane.b32.xlu0 %v1266, 127
    %v1355 = vpop.permute.xlu0 %1354
    %1356 = vrot.lane.b32.xlu0 %v1268, 127
    %v1357 = vpop.permute.xlu0 %1356
    %v1358 = vsel %vm156, %v1355, %v1357
    %v1359 = vsel %vm63, %v1358, 0
    %v1361 = vsel %vm63, %v1357, 0
    %1363 = vmatprep.subr.mxu0 %v1361
    %1364 = vmatpush1.msra.mxu0 %v1359
    %1365 = vmatprep.subr.mxu0 0.0
    %1366 = vmatpush1.msra.mxu0 0.0
    %1367 = vmatprep.subr.mxu0 0.0
    %1368 = vmatpush1.msra.mxu0 0.0
    %1369 = vmatprep.subr.mxu0 0.0
    %1370 = vmatpush1.msra.mxu0 0.0
    %1371 = vmatprep.subr.mxu0 0.0
    %1372 = vmatpush1.msra.mxu0 0.0
    %1373 = vmatprep.subr.mxu0 0.0
    %1374 = vmatpush1.msra.mxu0 0.0
    %1375 = vmatprep.subr.mxu0 0.0
    %1376 = vmatpush1.msra.mxu0 0.0
    %1377 = vmatprep.subr.mxu0 0.0
    %1378 = vmatpush1.msra.mxu0 0.0
    %1379 = vmatprep.subr.mxu0 0.0
    %1380 = vmatpush1.msra.mxu0 0.0
    %1381 = vmatprep.subr.mxu0 0.0
    %1382 = vmatpush1.msra.mxu0 0.0
    %1383 = vmatprep.subr.mxu0 0.0
    %1384 = vmatpush1.msra.mxu0 0.0
    %1385 = vmatprep.subr.mxu0 0.0
    %1386 = vmatpush1.msra.mxu0 0.0
    %1387 = vmatprep.subr.mxu0 0.0
    %1388 = vmatpush1.msra.mxu0 0.0
    %1389 = vmatprep.subr.mxu0 0.0
    %1390 = vmatpush1.msra.mxu0 0.0
    %1391 = vmatprep.subr.mxu0 0.0
    %1392 = vmatpush1.msra.mxu0 0.0
    %1393 = vmatprep.subr.mxu0 0.0
    %1394 = vmatpush1.msra.mxu0 0.0
    %1395 = vmatprep.subr.mxu0 0.0
    %1396 = vmatpush1.msra.mxu0 0.0
    %1397 = vmatprep.subr.mxu0 0.0
    %1398 = vmatpush1.msra.mxu0 0.0
    %1399 = vmatprep.subr.mxu0 0.0
    %1400 = vmatpush1.msra.mxu0 0.0
    %1401 = vmatprep.subr.mxu0 0.0
    %1402 = vmatpush1.msra.mxu0 0.0
    %1403 = vmatprep.subr.mxu0 0.0
    %1404 = vmatpush1.msra.mxu0 0.0
    %1405 = vmatprep.subr.mxu0 0.0
    %1406 = vmatpush1.msra.mxu0 0.0
    %1407 = vmatprep.subr.mxu0 0.0
    %1408 = vmatpush1.msra.mxu0 0.0
    %1409 = vmatprep.subr.mxu0 0.0
    %1410 = vmatpush1.msra.mxu0 0.0
    %1411 = vmatprep.subr.mxu0 0.0
    %1412 = vmatpush1.msra.mxu0 0.0
    %1413 = vmatprep.subr.mxu0 0.0
    %1414 = vmatpush1.msra.mxu0 0.0
    %1415 = vmatprep.subr.mxu0 0.0
    %1416 = vmatpush1.msra.mxu0 0.0
    %1417 = vmatprep.subr.mxu0 0.0
    %1418 = vmatpush1.msra.mxu0 0.0
    %1419 = vmatprep.subr.mxu0 0.0
    %1420 = vmatpush1.msra.mxu0 0.0
    %1421 = vmatprep.subr.mxu0 0.0
    %1422 = vmatpush1.msra.mxu0 0.0
    %1423 = vmatprep.subr.mxu0 0.0
    %1424 = vmatpush1.msra.mxu0 0.0
    %1425 = vmatprep.subr.mxu0 0.0
    %1426 = vmatpush1.msra.mxu0 0.0
    %1427 = vmatprep.mubr.f32.mxu0 0.0
    %1428 = vmatmul.mubr.f32.gmra.mrb[0].mxu0 %v159
    %v1429 = vpop.f32.mrb[0].mxu0
    %v1430 = vadd.f32 0.0, %v1429
    %v1431 = vpop.f32.mrb[0].mxu0
    %v1432 = vadd.f32 0.0, %v1431
    %1433 = vmatprep.mubr.f32.mxu0 0.0
    %1434 = vmatmul.mubr.f32.gmra.mrb[0].mxu0 %v162
    %v1435 = vpop.f32.mrb[0].mxu0
    %v1436 = vadd.f32 0.0, %v1435
    %v1437 = vpop.f32.mrb[0].mxu0
    %v1438 = vadd.f32 0.0, %v1437
    %1439 = vdwg.mxu0
    %v1440 = vadd.f32 %v1350, %v1430
    %v1441 = vadd.f32 %v1351, %v1432
    %v1442 = vadd.f32 %v1352, %v1436
    %v1443 = vadd.f32 %v1353, %v1438
    %1444 = vrot.lane.b32.xlu0 %v1266, 126
    %v1445 = vpop.permute.xlu0 %1444
    %1446 = vrot.lane.b32.xlu0 %v1268, 126
    %v1447 = vpop.permute.xlu0 %1446
    %v1448 = vsel %vm256, %v1445, %v1447
    %v1449 = vsel %vm63, %v1448, 0
    %v1451 = vsel %vm63, %v1447, 0
    %1453 = vmatprep.subr.mxu0 %v1451
    %1454 = vmatpush1.msra.mxu0 %v1449
    %1455 = vmatprep.subr.mxu0 0.0
    %1456 = vmatpush1.msra.mxu0 0.0
    %1457 = vmatprep.subr.mxu0 0.0
    %1458 = vmatpush1.msra.mxu0 0.0
    %1459 = vmatprep.subr.mxu0 0.0
    %1460 = vmatpush1.msra.mxu0 0.0
    %1461 = vmatprep.subr.mxu0 0.0
    %1462 = vmatpush1.msra.mxu0 0.0
    %1463 = vmatprep.subr.mxu0 0.0
    %1464 = vmatpush1.msra.mxu0 0.0
    %1465 = vmatprep.subr.mxu0 0.0
    %1466 = vmatpush1.msra.mxu0 0.0
    %1467 = vmatprep.subr.mxu0 0.0
    %1468 = vmatpush1.msra.mxu0 0.0
    %1469 = vmatprep.subr.mxu0 0.0
    %1470 = vmatpush1.msra.mxu0 0.0
    %1471 = vmatprep.subr.mxu0 0.0
    %1472 = vmatpush1.msra.mxu0 0.0
    %1473 = vmatprep.subr.mxu0 0.0
    %1474 = vmatpush1.msra.mxu0 0.0
    %1475 = vmatprep.subr.mxu0 0.0
    %1476 = vmatpush1.msra.mxu0 0.0
    %1477 = vmatprep.subr.mxu0 0.0
    %1478 = vmatpush1.msra.mxu0 0.0
    %1479 = vmatprep.subr.mxu0 0.0
    %1480 = vmatpush1.msra.mxu0 0.0
    %1481 = vmatprep.subr.mxu0 0.0
    %1482 = vmatpush1.msra.mxu0 0.0
    %1483 = vmatprep.subr.mxu0 0.0
    %1484 = vmatpush1.msra.mxu0 0.0
    %1485 = vmatprep.subr.mxu0 0.0
    %1486 = vmatpush1.msra.mxu0 0.0
    %1487 = vmatprep.subr.mxu0 0.0
    %1488 = vmatpush1.msra.mxu0 0.0
    %1489 = vmatprep.subr.mxu0 0.0
    %1490 = vmatpush1.msra.mxu0 0.0
    %1491 = vmatprep.subr.mxu0 0.0
    %1492 = vmatpush1.msra.mxu0 0.0
    %1493 = vmatprep.subr.mxu0 0.0
    %1494 = vmatpush1.msra.mxu0 0.0
    %1495 = vmatprep.subr.mxu0 0.0
    %1496 = vmatpush1.msra.mxu0 0.0
    %1497 = vmatprep.subr.mxu0 0.0
    %1498 = vmatpush1.msra.mxu0 0.0
    %1499 = vmatprep.subr.mxu0 0.0
    %1500 = vmatpush1.msra.mxu0 0.0
    %1501 = vmatprep.subr.mxu0 0.0
    %1502 = vmatpush1.msra.mxu0 0.0
    %1503 = vmatprep.subr.mxu0 0.0
    %1504 = vmatpush1.msra.mxu0 0.0
    %1505 = vmatprep.subr.mxu0 0.0
    %1506 = vmatpush1.msra.mxu0 0.0
    %1507 = vmatprep.subr.mxu0 0.0
    %1508 = vmatpush1.msra.mxu0 0.0
    %1509 = vmatprep.subr.mxu0 0.0
    %1510 = vmatpush1.msra.mxu0 0.0
    %1511 = vmatprep.subr.mxu0 0.0
    %1512 = vmatpush1.msra.mxu0 0.0
    %1513 = vmatprep.subr.mxu0 0.0
    %1514 = vmatpush1.msra.mxu0 0.0
    %1515 = vmatprep.subr.mxu0 0.0
    %1516 = vmatpush1.msra.mxu0 0.0
    %1517 = vmatprep.mubr.f32.mxu0 0.0
    %1518 = vmatmul.mubr.f32.gmra.mrb[0].mxu0 %v259
    %v1519 = vpop.f32.mrb[0].mxu0
    %v1520 = vadd.f32 0.0, %v1519
    %v1521 = vpop.f32.mrb[0].mxu0
    %v1522 = vadd.f32 0.0, %v1521
    %1523 = vmatprep.mubr.f32.mxu0 0.0
    %1524 = vmatmul.mubr.f32.gmra.mrb[0].mxu0 %v262
    %v1525 = vpop.f32.mrb[0].mxu0
    %v1526 = vadd.f32 0.0, %v1525
    %v1527 = vpop.f32.mrb[0].mxu0
    %v1528 = vadd.f32 0.0, %v1527
    %1529 = vdwg.mxu0
    %v1530 = vadd.f32 %v1440, %v1520
    %v1531 = vadd.f32 %v1441, %v1522
    %v1532 = vadd.f32 %v1442, %v1526
    %v1533 = vadd.f32 %v1443, %v1528
    %1534 = vrot.lane.b32.xlu0 %v1266, 112
    %v1535 = vpop.permute.xlu0 %1534
    %1536 = vrot.lane.b32.xlu0 %v1268, 112
    %v1537 = vpop.permute.xlu0 %1536
    %v1538 = vsel %vm356, %v1535, %v1537
    %v1539 = vsel %vm63, %v1538, 0
    %v1541 = vsel %vm63, %v1537, 0
    %1543 = vmatprep.subr.mxu0 %v1541
    %1544 = vmatpush1.msra.mxu0 %v1539
    %1545 = vmatprep.subr.mxu0 0.0
    %1546 = vmatpush1.msra.mxu0 0.0
    %1547 = vmatprep.subr.mxu0 0.0
    %1548 = vmatpush1.msra.mxu0 0.0
    %1549 = vmatprep.subr.mxu0 0.0
    %1550 = vmatpush1.msra.mxu0 0.0
    %1551 = vmatprep.subr.mxu0 0.0
    %1552 = vmatpush1.msra.mxu0 0.0
    %1553 = vmatprep.subr.mxu0 0.0
    %1554 = vmatpush1.msra.mxu0 0.0
    %1555 = vmatprep.subr.mxu0 0.0
    %1556 = vmatpush1.msra.mxu0 0.0
    %1557 = vmatprep.subr.mxu0 0.0
    %1558 = vmatpush1.msra.mxu0 0.0
    %1559 = vmatprep.subr.mxu0 0.0
    %1560 = vmatpush1.msra.mxu0 0.0
    %1561 = vmatprep.subr.mxu0 0.0
    %1562 = vmatpush1.msra.mxu0 0.0
    %1563 = vmatprep.subr.mxu0 0.0
    %1564 = vmatpush1.msra.mxu0 0.0
    %1565 = vmatprep.subr.mxu0 0.0
    %1566 = vmatpush1.msra.mxu0 0.0
    %1567 = vmatprep.subr.mxu0 0.0
    %1568 = vmatpush1.msra.mxu0 0.0
    %1569 = vmatprep.subr.mxu0 0.0
    %1570 = vmatpush1.msra.mxu0 0.0
    %1571 = vmatprep.subr.mxu0 0.0
    %1572 = vmatpush1.msra.mxu0 0.0
    %1573 = vmatprep.subr.mxu0 0.0
    %1574 = vmatpush1.msra.mxu0 0.0
    %1575 = vmatprep.subr.mxu0 0.0
    %1576 = vmatpush1.msra.mxu0 0.0
    %1577 = vmatprep.subr.mxu0 0.0
    %1578 = vmatpush1.msra.mxu0 0.0
    %1579 = vmatprep.subr.mxu0 0.0
    %1580 = vmatpush1.msra.mxu0 0.0
    %1581 = vmatprep.subr.mxu0 0.0
    %1582 = vmatpush1.msra.mxu0 0.0
    %1583 = vmatprep.subr.mxu0 0.0
    %1584 = vmatpush1.msra.mxu0 0.0
    %1585 = vmatprep.subr.mxu0 0.0
    %1586 = vmatpush1.msra.mxu0 0.0
    %1587 = vmatprep.subr.mxu0 0.0
    %1588 = vmatpush1.msra.mxu0 0.0
    %1589 = vmatprep.subr.mxu0 0.0
    %1590 = vmatpush1.msra.mxu0 0.0
    %1591 = vmatprep.subr.mxu0 0.0
    %1592 = vmatpush1.msra.mxu0 0.0
    %1593 = vmatprep.subr.mxu0 0.0
    %1594 = vmatpush1.msra.mxu0 0.0
    %1595 = vmatprep.subr.mxu0 0.0
    %1596 = vmatpush1.msra.mxu0 0.0
    %1597 = vmatprep.subr.mxu0 0.0
    %1598 = vmatpush1.msra.mxu0 0.0
    %1599 = vmatprep.subr.mxu0 0.0
    %1600 = vmatpush1.msra.mxu0 0.0
    %1601 = vmatprep.subr.mxu0 0.0
    %1602 = vmatpush1.msra.mxu0 0.0
    %1603 = vmatprep.subr.mxu0 0.0
    %1604 = vmatpush1.msra.mxu0 0.0
    %1605 = vmatprep.subr.mxu0 0.0
    %1606 = vmatpush1.msra.mxu0 0.0
    %1607 = vmatprep.mubr.f32.mxu0 0.0
    %1608 = vmatmul.mubr.f32.gmra.mrb[0].mxu0 %v359
    %v1609 = vpop.f32.mrb[0].mxu0
    %v1610 = vadd.f32 0.0, %v1609
    %v1611 = vpop.f32.mrb[0].mxu0
    %v1612 = vadd.f32 0.0, %v1611
    %1613 = vmatprep.mubr.f32.mxu0 0.0
    %1614 = vmatmul.mubr.f32.gmra.mrb[0].mxu0 %v362
    %v1615 = vpop.f32.mrb[0].mxu0
    %v1616 = vadd.f32 0.0, %v1615
    %v1617 = vpop.f32.mrb[0].mxu0
    %v1618 = vadd.f32 0.0, %v1617
    %1619 = vdwg.mxu0
    %v1620 = vadd.f32 %v1530, %v1610
    %v1621 = vadd.f32 %v1531, %v1612
    %v1622 = vadd.f32 %v1532, %v1616
    %v1623 = vadd.f32 %v1533, %v1618
    %1624 = vrot.lane.b32.xlu0 %v1266, 111
    %v1625 = vpop.permute.xlu0 %1624
    %1626 = vrot.lane.b32.xlu0 %v1268, 111
    %v1627 = vpop.permute.xlu0 %1626
    %v1628 = vsel %vm456, %v1625, %v1627
    %v1629 = vsel %vm63, %v1628, 0
    %v1631 = vsel %vm63, %v1627, 0
    %1633 = vmatprep.subr.mxu0 %v1631
    %1634 = vmatpush1.msra.mxu0 %v1629
    %1635 = vmatprep.subr.mxu0 0.0
    %1636 = vmatpush1.msra.mxu0 0.0
    %1637 = vmatprep.subr.mxu0 0.0
    %1638 = vmatpush1.msra.mxu0 0.0
    %1639 = vmatprep.subr.mxu0 0.0
    %1640 = vmatpush1.msra.mxu0 0.0
    %1641 = vmatprep.subr.mxu0 0.0
    %1642 = vmatpush1.msra.mxu0 0.0
    %1643 = vmatprep.subr.mxu0 0.0
    %1644 = vmatpush1.msra.mxu0 0.0
    %1645 = vmatprep.subr.mxu0 0.0
    %1646 = vmatpush1.msra.mxu0 0.0
    %1647 = vmatprep.subr.mxu0 0.0
    %1648 = vmatpush1.msra.mxu0 0.0
    %1649 = vmatprep.subr.mxu0 0.0
    %1650 = vmatpush1.msra.mxu0 0.0
    %1651 = vmatprep.subr.mxu0 0.0
    %1652 = vmatpush1.msra.mxu0 0.0
    %1653 = vmatprep.subr.mxu0 0.0
    %1654 = vmatpush1.msra.mxu0 0.0
    %1655 = vmatprep.subr.mxu0 0.0
    %1656 = vmatpush1.msra.mxu0 0.0
    %1657 = vmatprep.subr.mxu0 0.0
    %1658 = vmatpush1.msra.mxu0 0.0
    %1659 = vmatprep.subr.mxu0 0.0
    %1660 = vmatpush1.msra.mxu0 0.0
    %1661 = vmatprep.subr.mxu0 0.0
    %1662 = vmatpush1.msra.mxu0 0.0
    %1663 = vmatprep.subr.mxu0 0.0
    %1664 = vmatpush1.msra.mxu0 0.0
    %1665 = vmatprep.subr.mxu0 0.0
    %1666 = vmatpush1.msra.mxu0 0.0
    %1667 = vmatprep.subr.mxu0 0.0
    %1668 = vmatpush1.msra.mxu0 0.0
    %1669 = vmatprep.subr.mxu0 0.0
    %1670 = vmatpush1.msra.mxu0 0.0
    %1671 = vmatprep.subr.mxu0 0.0
    %1672 = vmatpush1.msra.mxu0 0.0
    %1673 = vmatprep.subr.mxu0 0.0
    %1674 = vmatpush1.msra.mxu0 0.0
    %1675 = vmatprep.subr.mxu0 0.0
    %1676 = vmatpush1.msra.mxu0 0.0
    %1677 = vmatprep.subr.mxu0 0.0
    %1678 = vmatpush1.msra.mxu0 0.0
    %1679 = vmatprep.subr.mxu0 0.0
    %1680 = vmatpush1.msra.mxu0 0.0
    %1681 = vmatprep.subr.mxu0 0.0
    %1682 = vmatpush1.msra.mxu0 0.0
    %1683 = vmatprep.subr.mxu0 0.0
    %1684 = vmatpush1.msra.mxu0 0.0
    %1685 = vmatprep.subr.mxu0 0.0
    %1686 = vmatpush1.msra.mxu0 0.0
    %1687 = vmatprep.subr.mxu0 0.0
    %1688 = vmatpush1.msra.mxu0 0.0
    %1689 = vmatprep.subr.mxu0 0.0
    %1690 = vmatpush1.msra.mxu0 0.0
    %1691 = vmatprep.subr.mxu0 0.0
    %1692 = vmatpush1.msra.mxu0 0.0
    %1693 = vmatprep.subr.mxu0 0.0
    %1694 = vmatpush1.msra.mxu0 0.0
    %1695 = vmatprep.subr.mxu0 0.0
    %1696 = vmatpush1.msra.mxu0 0.0
    %1697 = vmatprep.mubr.f32.mxu0 0.0
    %1698 = vmatmul.mubr.f32.gmra.mrb[0].mxu0 %v459
    %v1699 = vpop.f32.mrb[0].mxu0
    %v1700 = vadd.f32 0.0, %v1699
    %v1701 = vpop.f32.mrb[0].mxu0
    %v1702 = vadd.f32 0.0, %v1701
    %1703 = vmatprep.mubr.f32.mxu0 0.0
    %1704 = vmatmul.mubr.f32.gmra.mrb[0].mxu0 %v462
    %v1705 = vpop.f32.mrb[0].mxu0
    %v1706 = vadd.f32 0.0, %v1705
    %v1707 = vpop.f32.mrb[0].mxu0
    %v1708 = vadd.f32 0.0, %v1707
    %1709 = vdwg.mxu0
    %v1710 = vadd.f32 %v1620, %v1700
    %v1711 = vadd.f32 %v1621, %v1702
    %v1712 = vadd.f32 %v1622, %v1706
    %v1713 = vadd.f32 %v1623, %v1708
    %1714 = vrot.lane.b32.xlu0 %v1266, 110
    %v1715 = vpop.permute.xlu0 %1714
    %1716 = vrot.lane.b32.xlu0 %v1268, 110
    %v1717 = vpop.permute.xlu0 %1716
    %v1718 = vsel %vm556, %v1715, %v1717
    %v1719 = vsel %vm63, %v1718, 0
    %v1721 = vsel %vm63, %v1717, 0
    %1723 = vmatprep.subr.mxu0 %v1721
    %1724 = vmatpush1.msra.mxu0 %v1719
    %1725 = vmatprep.subr.mxu0 0.0
    %1726 = vmatpush1.msra.mxu0 0.0
    %1727 = vmatprep.subr.mxu0 0.0
    %1728 = vmatpush1.msra.mxu0 0.0
    %1729 = vmatprep.subr.mxu0 0.0
    %1730 = vmatpush1.msra.mxu0 0.0
    %1731 = vmatprep.subr.mxu0 0.0
    %1732 = vmatpush1.msra.mxu0 0.0
    %1733 = vmatprep.subr.mxu0 0.0
    %1734 = vmatpush1.msra.mxu0 0.0
    %1735 = vmatprep.subr.mxu0 0.0
    %1736 = vmatpush1.msra.mxu0 0.0
    %1737 = vmatprep.subr.mxu0 0.0
    %1738 = vmatpush1.msra.mxu0 0.0
    %1739 = vmatprep.subr.mxu0 0.0
    %1740 = vmatpush1.msra.mxu0 0.0
    %1741 = vmatprep.subr.mxu0 0.0
    %1742 = vmatpush1.msra.mxu0 0.0
    %1743 = vmatprep.subr.mxu0 0.0
    %1744 = vmatpush1.msra.mxu0 0.0
    %1745 = vmatprep.subr.mxu0 0.0
    %1746 = vmatpush1.msra.mxu0 0.0
    %1747 = vmatprep.subr.mxu0 0.0
    %1748 = vmatpush1.msra.mxu0 0.0
    %1749 = vmatprep.subr.mxu0 0.0
    %1750 = vmatpush1.msra.mxu0 0.0
    %1751 = vmatprep.subr.mxu0 0.0
    %1752 = vmatpush1.msra.mxu0 0.0
    %1753 = vmatprep.subr.mxu0 0.0
    %1754 = vmatpush1.msra.mxu0 0.0
    %1755 = vmatprep.subr.mxu0 0.0
    %1756 = vmatpush1.msra.mxu0 0.0
    %1757 = vmatprep.subr.mxu0 0.0
    %1758 = vmatpush1.msra.mxu0 0.0
    %1759 = vmatprep.subr.mxu0 0.0
    %1760 = vmatpush1.msra.mxu0 0.0
    %1761 = vmatprep.subr.mxu0 0.0
    %1762 = vmatpush1.msra.mxu0 0.0
    %1763 = vmatprep.subr.mxu0 0.0
    %1764 = vmatpush1.msra.mxu0 0.0
    %1765 = vmatprep.subr.mxu0 0.0
    %1766 = vmatpush1.msra.mxu0 0.0
    %1767 = vmatprep.subr.mxu0 0.0
    %1768 = vmatpush1.msra.mxu0 0.0
    %1769 = vmatprep.subr.mxu0 0.0
    %1770 = vmatpush1.msra.mxu0 0.0
    %1771 = vmatprep.subr.mxu0 0.0
    %1772 = vmatpush1.msra.mxu0 0.0
    %1773 = vmatprep.subr.mxu0 0.0
    %1774 = vmatpush1.msra.mxu0 0.0
    %1775 = vmatprep.subr.mxu0 0.0
    %1776 = vmatpush1.msra.mxu0 0.0
    %1777 = vmatprep.subr.mxu0 0.0
    %1778 = vmatpush1.msra.mxu0 0.0
    %1779 = vmatprep.subr.mxu0 0.0
    %1780 = vmatpush1.msra.mxu0 0.0
    %1781 = vmatprep.subr.mxu0 0.0
    %1782 = vmatpush1.msra.mxu0 0.0
    %1783 = vmatprep.subr.mxu0 0.0
    %1784 = vmatpush1.msra.mxu0 0.0
    %1785 = vmatprep.subr.mxu0 0.0
    %1786 = vmatpush1.msra.mxu0 0.0
    %1787 = vmatprep.mubr.f32.mxu0 0.0
    %1788 = vmatmul.mubr.f32.gmra.mrb[0].mxu0 %v559
    %v1789 = vpop.f32.mrb[0].mxu0
    %v1790 = vadd.f32 0.0, %v1789
    %v1791 = vpop.f32.mrb[0].mxu0
    %v1792 = vadd.f32 0.0, %v1791
    %1793 = vmatprep.mubr.f32.mxu0 0.0
    %1794 = vmatmul.mubr.f32.gmra.mrb[0].mxu0 %v562
    %v1795 = vpop.f32.mrb[0].mxu0
    %v1796 = vadd.f32 0.0, %v1795
    %v1797 = vpop.f32.mrb[0].mxu0
    %v1798 = vadd.f32 0.0, %v1797
    %1799 = vdwg.mxu0
    %v1800 = vadd.f32 %v1710, %v1790
    %v1801 = vadd.f32 %v1711, %v1792
    %v1802 = vadd.f32 %v1712, %v1796
    %v1803 = vadd.f32 %v1713, %v1798
    %1804 = vrot.lane.b32.xlu0 %v1266, 96
    %v1805 = vpop.permute.xlu0 %1804
    %1806 = vrot.lane.b32.xlu0 %v1268, 96
    %v1807 = vpop.permute.xlu0 %1806
    %v1808 = vsel %vm656, %v1805, %v1807
    %v1809 = vsel %vm63, %v1808, 0
    %v1811 = vsel %vm63, %v1807, 0
    %1813 = vmatprep.subr.mxu0 %v1811
    %1814 = vmatpush1.msra.mxu0 %v1809
    %1815 = vmatprep.subr.mxu0 0.0
    %1816 = vmatpush1.msra.mxu0 0.0
    %1817 = vmatprep.subr.mxu0 0.0
    %1818 = vmatpush1.msra.mxu0 0.0
    %1819 = vmatprep.subr.mxu0 0.0
    %1820 = vmatpush1.msra.mxu0 0.0
    %1821 = vmatprep.subr.mxu0 0.0
    %1822 = vmatpush1.msra.mxu0 0.0
    %1823 = vmatprep.subr.mxu0 0.0
    %1824 = vmatpush1.msra.mxu0 0.0
    %1825 = vmatprep.subr.mxu0 0.0
    %1826 = vmatpush1.msra.mxu0 0.0
    %1827 = vmatprep.subr.mxu0 0.0
    %1828 = vmatpush1.msra.mxu0 0.0
    %1829 = vmatprep.subr.mxu0 0.0
    %1830 = vmatpush1.msra.mxu0 0.0
    %1831 = vmatprep.subr.mxu0 0.0
    %1832 = vmatpush1.msra.mxu0 0.0
    %1833 = vmatprep.subr.mxu0 0.0
    %1834 = vmatpush1.msra.mxu0 0.0
    %1835 = vmatprep.subr.mxu0 0.0
    %1836 = vmatpush1.msra.mxu0 0.0
    %1837 = vmatprep.subr.mxu0 0.0
    %1838 = vmatpush1.msra.mxu0 0.0
    %1839 = vmatprep.subr.mxu0 0.0
    %1840 = vmatpush1.msra.mxu0 0.0
    %1841 = vmatprep.subr.mxu0 0.0
    %1842 = vmatpush1.msra.mxu0 0.0
    %1843 = vmatprep.subr.mxu0 0.0
    %1844 = vmatpush1.msra.mxu0 0.0
    %1845 = vmatprep.subr.mxu0 0.0
    %1846 = vmatpush1.msra.mxu0 0.0
    %1847 = vmatprep.subr.mxu0 0.0
    %1848 = vmatpush1.msra.mxu0 0.0
    %1849 = vmatprep.subr.mxu0 0.0
    %1850 = vmatpush1.msra.mxu0 0.0
    %1851 = vmatprep.subr.mxu0 0.0
    %1852 = vmatpush1.msra.mxu0 0.0
    %1853 = vmatprep.subr.mxu0 0.0
    %1854 = vmatpush1.msra.mxu0 0.0
    %1855 = vmatprep.subr.mxu0 0.0
    %1856 = vmatpush1.msra.mxu0 0.0
    %1857 = vmatprep.subr.mxu0 0.0
    %1858 = vmatpush1.msra.mxu0 0.0
    %1859 = vmatprep.subr.mxu0 0.0
    %1860 = vmatpush1.msra.mxu0 0.0
    %1861 = vmatprep.subr.mxu0 0.0
    %1862 = vmatpush1.msra.mxu0 0.0
    %1863 = vmatprep.subr.mxu0 0.0
    %1864 = vmatpush1.msra.mxu0 0.0
    %1865 = vmatprep.subr.mxu0 0.0
    %1866 = vmatpush1.msra.mxu0 0.0
    %1867 = vmatprep.subr.mxu0 0.0
    %1868 = vmatpush1.msra.mxu0 0.0
    %1869 = vmatprep.subr.mxu0 0.0
    %1870 = vmatpush1.msra.mxu0 0.0
    %1871 = vmatprep.subr.mxu0 0.0
    %1872 = vmatpush1.msra.mxu0 0.0
    %1873 = vmatprep.subr.mxu0 0.0
    %1874 = vmatpush1.msra.mxu0 0.0
    %1875 = vmatprep.subr.mxu0 0.0
    %1876 = vmatpush1.msra.mxu0 0.0
    %1877 = vmatprep.mubr.f32.mxu0 0.0
    %1878 = vmatmul.mubr.f32.gmra.mrb[0].mxu0 %v659
    %v1879 = vpop.f32.mrb[0].mxu0
    %v1880 = vadd.f32 0.0, %v1879
    %v1881 = vpop.f32.mrb[0].mxu0
    %v1882 = vadd.f32 0.0, %v1881
    %1883 = vmatprep.mubr.f32.mxu0 0.0
    %1884 = vmatmul.mubr.f32.gmra.mrb[0].mxu0 %v662
    %v1885 = vpop.f32.mrb[0].mxu0
    %v1886 = vadd.f32 0.0, %v1885
    %v1887 = vpop.f32.mrb[0].mxu0
    %v1888 = vadd.f32 0.0, %v1887
    %1889 = vdwg.mxu0
    %v1890 = vadd.f32 %v1800, %v1880
    %v1891 = vadd.f32 %v1801, %v1882
    %v1892 = vadd.f32 %v1802, %v1886
    %v1893 = vadd.f32 %v1803, %v1888
    %1894 = vrot.lane.b32.xlu0 %v1266, 95
    %v1895 = vpop.permute.xlu0 %1894
    %1896 = vrot.lane.b32.xlu0 %v1268, 95
    %v1897 = vpop.permute.xlu0 %1896
    %v1898 = vsel %vm756, %v1895, %v1897
    %v1899 = vsel %vm63, %v1898, 0
    %v1901 = vsel %vm63, %v1897, 0
    %1903 = vmatprep.subr.mxu0 %v1901
    %1904 = vmatpush1.msra.mxu0 %v1899
    %1905 = vmatprep.subr.mxu0 0.0
    %1906 = vmatpush1.msra.mxu0 0.0
    %1907 = vmatprep.subr.mxu0 0.0
    %1908 = vmatpush1.msra.mxu0 0.0
    %1909 = vmatprep.subr.mxu0 0.0
    %1910 = vmatpush1.msra.mxu0 0.0
    %1911 = vmatprep.subr.mxu0 0.0
    %1912 = vmatpush1.msra.mxu0 0.0
    %1913 = vmatprep.subr.mxu0 0.0
    %1914 = vmatpush1.msra.mxu0 0.0
    %1915 = vmatprep.subr.mxu0 0.0
    %1916 = vmatpush1.msra.mxu0 0.0
    %1917 = vmatprep.subr.mxu0 0.0
    %1918 = vmatpush1.msra.mxu0 0.0
    %1919 = vmatprep.subr.mxu0 0.0
    %1920 = vmatpush1.msra.mxu0 0.0
    %1921 = vmatprep.subr.mxu0 0.0
    %1922 = vmatpush1.msra.mxu0 0.0
    %1923 = vmatprep.subr.mxu0 0.0
    %1924 = vmatpush1.msra.mxu0 0.0
    %1925 = vmatprep.subr.mxu0 0.0
    %1926 = vmatpush1.msra.mxu0 0.0
    %1927 = vmatprep.subr.mxu0 0.0
    %1928 = vmatpush1.msra.mxu0 0.0
    %1929 = vmatprep.subr.mxu0 0.0
    %1930 = vmatpush1.msra.mxu0 0.0
    %1931 = vmatprep.subr.mxu0 0.0
    %1932 = vmatpush1.msra.mxu0 0.0
    %1933 = vmatprep.subr.mxu0 0.0
    %1934 = vmatpush1.msra.mxu0 0.0
    %1935 = vmatprep.subr.mxu0 0.0
    %1936 = vmatpush1.msra.mxu0 0.0
    %1937 = vmatprep.subr.mxu0 0.0
    %1938 = vmatpush1.msra.mxu0 0.0
    %1939 = vmatprep.subr.mxu0 0.0
    %1940 = vmatpush1.msra.mxu0 0.0
    %1941 = vmatprep.subr.mxu0 0.0
    %1942 = vmatpush1.msra.mxu0 0.0
    %1943 = vmatprep.subr.mxu0 0.0
    %1944 = vmatpush1.msra.mxu0 0.0
    %1945 = vmatprep.subr.mxu0 0.0
    %1946 = vmatpush1.msra.mxu0 0.0
    %1947 = vmatprep.subr.mxu0 0.0
    %1948 = vmatpush1.msra.mxu0 0.0
    %1949 = vmatprep.subr.mxu0 0.0
    %1950 = vmatpush1.msra.mxu0 0.0
    %1951 = vmatprep.subr.mxu0 0.0
    %1952 = vmatpush1.msra.mxu0 0.0
    %1953 = vmatprep.subr.mxu0 0.0
    %1954 = vmatpush1.msra.mxu0 0.0
    %1955 = vmatprep.subr.mxu0 0.0
    %1956 = vmatpush1.msra.mxu0 0.0
    %1957 = vmatprep.subr.mxu0 0.0
    %1958 = vmatpush1.msra.mxu0 0.0
    %1959 = vmatprep.subr.mxu0 0.0
    %1960 = vmatpush1.msra.mxu0 0.0
    %1961 = vmatprep.subr.mxu0 0.0
    %1962 = vmatpush1.msra.mxu0 0.0
    %1963 = vmatprep.subr.mxu0 0.0
    %1964 = vmatpush1.msra.mxu0 0.0
    %1965 = vmatprep.subr.mxu0 0.0
    %1966 = vmatpush1.msra.mxu0 0.0
    %1967 = vmatprep.mubr.f32.mxu0 0.0
    %1968 = vmatmul.mubr.f32.gmra.mrb[0].mxu0 %v759
    %v1969 = vpop.f32.mrb[0].mxu0
    %v1970 = vadd.f32 0.0, %v1969
    %v1971 = vpop.f32.mrb[0].mxu0
    %v1972 = vadd.f32 0.0, %v1971
    %1973 = vmatprep.mubr.f32.mxu0 0.0
    %1974 = vmatmul.mubr.f32.gmra.mrb[0].mxu0 %v762
    %v1975 = vpop.f32.mrb[0].mxu0
    %v1976 = vadd.f32 0.0, %v1975
    %v1977 = vpop.f32.mrb[0].mxu0
    %v1978 = vadd.f32 0.0, %v1977
    %1979 = vdwg.mxu0
    %v1980 = vadd.f32 %v1890, %v1970
    %v1981 = vadd.f32 %v1891, %v1972
    %v1982 = vadd.f32 %v1892, %v1976
    %v1983 = vadd.f32 %v1893, %v1978
    %1984 = vrot.lane.b32.xlu0 %v1266, 94
    %v1985 = vpop.permute.xlu0 %1984
    %1986 = vrot.lane.b32.xlu0 %v1268, 94
    %v1987 = vpop.permute.xlu0 %1986
    %v1988 = vsel %vm856, %v1985, %v1987
    %v1989 = vsel %vm63, %v1988, 0
    %v1991 = vsel %vm63, %v1987, 0
    %1993 = vmatprep.subr.mxu0 %v1991
    %1994 = vmatpush1.msra.mxu0 %v1989
    %1995 = vmatprep.subr.mxu0 0.0
    %1996 = vmatpush1.msra.mxu0 0.0
    %1997 = vmatprep.subr.mxu0 0.0
    %1998 = vmatpush1.msra.mxu0 0.0
    %1999 = vmatprep.subr.mxu0 0.0
    %2000 = vmatpush1.msra.mxu0 0.0
    %2001 = vmatprep.subr.mxu0 0.0
    %2002 = vmatpush1.msra.mxu0 0.0
    %2003 = vmatprep.subr.mxu0 0.0
    %2004 = vmatpush1.msra.mxu0 0.0
    %2005 = vmatprep.subr.mxu0 0.0
    %2006 = vmatpush1.msra.mxu0 0.0
    %2007 = vmatprep.subr.mxu0 0.0
    %2008 = vmatpush1.msra.mxu0 0.0
    %2009 = vmatprep.subr.mxu0 0.0
    %2010 = vmatpush1.msra.mxu0 0.0
    %2011 = vmatprep.subr.mxu0 0.0
    %2012 = vmatpush1.msra.mxu0 0.0
    %2013 = vmatprep.subr.mxu0 0.0
    %2014 = vmatpush1.msra.mxu0 0.0
    %2015 = vmatprep.subr.mxu0 0.0
    %2016 = vmatpush1.msra.mxu0 0.0
    %2017 = vmatprep.subr.mxu0 0.0
    %2018 = vmatpush1.msra.mxu0 0.0
    %2019 = vmatprep.subr.mxu0 0.0
    %2020 = vmatpush1.msra.mxu0 0.0
    %2021 = vmatprep.subr.mxu0 0.0
    %2022 = vmatpush1.msra.mxu0 0.0
    %2023 = vmatprep.subr.mxu0 0.0
    %2024 = vmatpush1.msra.mxu0 0.0
    %2025 = vmatprep.subr.mxu0 0.0
    %2026 = vmatpush1.msra.mxu0 0.0
    %2027 = vmatprep.subr.mxu0 0.0
    %2028 = vmatpush1.msra.mxu0 0.0
    %2029 = vmatprep.subr.mxu0 0.0
    %2030 = vmatpush1.msra.mxu0 0.0
    %2031 = vmatprep.subr.mxu0 0.0
    %2032 = vmatpush1.msra.mxu0 0.0
    %2033 = vmatprep.subr.mxu0 0.0
    %2034 = vmatpush1.msra.mxu0 0.0
    %2035 = vmatprep.subr.mxu0 0.0
    %2036 = vmatpush1.msra.mxu0 0.0
    %2037 = vmatprep.subr.mxu0 0.0
    %2038 = vmatpush1.msra.mxu0 0.0
    %2039 = vmatprep.subr.mxu0 0.0
    %2040 = vmatpush1.msra.mxu0 0.0
    %2041 = vmatprep.subr.mxu0 0.0
    %2042 = vmatpush1.msra.mxu0 0.0
    %2043 = vmatprep.subr.mxu0 0.0
    %2044 = vmatpush1.msra.mxu0 0.0
    %2045 = vmatprep.subr.mxu0 0.0
    %2046 = vmatpush1.msra.mxu0 0.0
    %2047 = vmatprep.subr.mxu0 0.0
    %2048 = vmatpush1.msra.mxu0 0.0
    %2049 = vmatprep.subr.mxu0 0.0
    %2050 = vmatpush1.msra.mxu0 0.0
    %2051 = vmatprep.subr.mxu0 0.0
    %2052 = vmatpush1.msra.mxu0 0.0
    %2053 = vmatprep.subr.mxu0 0.0
    %2054 = vmatpush1.msra.mxu0 0.0
    %2055 = vmatprep.subr.mxu0 0.0
    %2056 = vmatpush1.msra.mxu0 0.0
    %2057 = vmatprep.mubr.f32.mxu0 0.0
    %2058 = vmatmul.mubr.f32.gmra.mrb[0].mxu0 %v859
    %v2059 = vpop.f32.mrb[0].mxu0
    %v2060 = vadd.f32 0.0, %v2059
    %v2061 = vpop.f32.mrb[0].mxu0
    %v2062 = vadd.f32 0.0, %v2061
    %2063 = vmatprep.mubr.f32.mxu0 0.0
    %2064 = vmatmul.mubr.f32.gmra.mrb[0].mxu0 %v862
    %v2065 = vpop.f32.mrb[0].mxu0
    %v2066 = vadd.f32 0.0, %v2065
    %v2067 = vpop.f32.mrb[0].mxu0
    %v2068 = vadd.f32 0.0, %v2067
    %2069 = vdwg.mxu0
    %v2070 = vadd.f32 %v1980, %v2060
    %v2071 = vadd.f32 %v1981, %v2062
    %v2072 = vadd.f32 %v1982, %v2066
    %v2073 = vadd.f32 %v1983, %v2068
    %v2074 = vmul.f32 %v2070, %v29
    %v2075 = vmul.f32 %v2071, %v33
    %v2076 = vmul.f32 %v2072, %v29
    %v2077 = vmul.f32 %v2073, %v33
    %v2078 = vsel %vm856, %v2075, 0.0
    %v2079 = vadd.f32 %v2074, %v2078
    %2080 = vadd.xlane.f32.xlu0 %v2079
    %v2081 = vpop.xlane.xlu0 %2080
    %v2082 = vsel %vm856, %v2077, 0.0
    %v2083 = vadd.f32 %v2076, %v2082
    %2084 = vadd.xlane.f32.xlu0 %v2083
    %v2085 = vpop.xlane.xlu0 %2084
    %v2086 = vmul.f32 %v2081, 0.0051020407
    %v2087 = vmul.f32 %v2085, 0.0051020407
    %v2088 = vsub.f32 %v2070, %v2086
    %v2089 = vsub.f32 %v2071, %v2086
    %v2090 = vsub.f32 %v2072, %v2087
    %v2091 = vsub.f32 %v2073, %v2087
    %v2092 = vmul.f32 %v2088, %v29
    %v2093 = vmul.f32 %v2089, %v33
    %v2094 = vmul.f32 %v2090, %v29
    %v2095 = vmul.f32 %v2091, %v33
    %v2096 = vmul.f32 %v2092, %v2092
    %v2097 = vmul.f32 %v2093, %v2093
    %v2098 = vmul.f32 %v2094, %v2094
    %v2099 = vmul.f32 %v2095, %v2095
    %v2100 = vsel %vm856, %v2097, 0.0
    %v2101 = vadd.f32 %v2096, %v2100
    %2102 = vadd.xlane.f32.xlu0 %v2101
    %v2103 = vpop.xlane.xlu0 %2102
    %v2104 = vsel %vm856, %v2099, 0.0
    %v2105 = vadd.f32 %v2098, %v2104
    %2106 = vadd.xlane.f32.xlu0 %v2105
    %v2107 = vpop.xlane.xlu0 %2106
    %v2108 = vmul.f32 %v2103, 0.0051020407
    %v2109 = vmul.f32 %v2107, 0.0051020407
    %v2110 = vadd.f32 %v2108, 1e-05
    %v2111 = vadd.f32 %v2109, 1e-05
    %v2112 = vrsqrt.pop %v2110
    %v2113 = vrsqrt.pop %v2111
    %v2114 = vmul.f32 %v2088, %v2112
    %v2115 = vmul.f32 %v2089, %v2112
    %v2116 = vmul.f32 %v2090, %v2113
    %v2117 = vmul.f32 %v2091, %v2113
    %2122 = vrot.lane.b32.xlu0 %v2114, 127
    %v2123 = vpop.permute.xlu0 %2122
    %2124 = vrot.lane.b32.xlu0 %v2115, 127
    %v2125 = vpop.permute.xlu0 %2124
    %2126 = vrot.lane.b32.xlu0 %v2116, 127
    %v2127 = vpop.permute.xlu0 %2126
    %2128 = vrot.lane.b32.xlu0 %v2117, 127
    %v2129 = vpop.permute.xlu0 %2128
    %v2130 = vsel %vm156, %v2123, %v2125
    %v2131 = vsel %vm156, %v2127, %v2129
    %v2136 = vmax.f32 %v2114, %v2130
    %v2137 = vmax.f32 %v2115, %v2125
    %v2138 = vmax.f32 %v2116, %v2131
    %v2139 = vmax.f32 %v2117, %v2129
    %2144 = vrot.lane.b32.xlu0 %v2136, 112
    %v2145 = vpop.permute.xlu0 %2144
    %2146 = vrot.lane.b32.xlu0 %v2137, 112
    %v2147 = vpop.permute.xlu0 %2146
    %2148 = vrot.lane.b32.xlu0 %v2138, 112
    %v2149 = vpop.permute.xlu0 %2148
    %2150 = vrot.lane.b32.xlu0 %v2139, 112
    %v2151 = vpop.permute.xlu0 %2150
    %v2152 = vsel %vm356, %v2145, %v2147
    %v2153 = vsel %vm356, %v2149, %v2151
    %v2158 = vmax.f32 %v2136, %v2152
    %v2159 = vmax.f32 %v2137, %v2147
    %v2160 = vmax.f32 %v2138, %v2153
    %v2161 = vmax.f32 %v2139, %v2151
    %v2162 = vmul.f32 %v2158, %v1037
    %v2163 = vmul.f32 %v2159, %v1038
    %v2164 = vmul.f32 %v2160, %v1039
    %v2165 = vmul.f32 %v2161, %v1040
    %v2166 = vsel %vm1045, %v2163, 0.0
    %v2167 = vadd.f32 %v2162, %v2166
    %2168 = vadd.xlane.f32.xlu0 %v2167
    %v2169 = vpop.xlane.xlu0 %2168
    %v2170 = vsel %vm1045, %v2165, 0.0
    %v2171 = vadd.f32 %v2164, %v2170
    %2172 = vadd.xlane.f32.xlu0 %v2171
    %v2173 = vpop.xlane.xlu0 %2172
    %v2174 = vsel %vm1054, %v2169, 0.0
    %v2175 = vsel %vm1054, %v2173, 0.0
    %v2176 = vadd.f32 %v2174, 0.0
    %v2177 = vadd.f32 %v2175, 0.0
    %v2178 = vmul.f32 %v2158, %v1060
    %v2179 = vmul.f32 %v2159, %v1061
    %v2180 = vmul.f32 %v2160, %v1062
    %v2181 = vmul.f32 %v2161, %v1063
    %v2182 = vsel %vm1045, %v2179, 0.0
    %v2183 = vadd.f32 %v2178, %v2182
    %2184 = vadd.xlane.f32.xlu0 %v2183
    %v2185 = vpop.xlane.xlu0 %2184
    %v2186 = vsel %vm1045, %v2181, 0.0
    %v2187 = vadd.f32 %v2180, %v2186
    %2188 = vadd.xlane.f32.xlu0 %v2187
    %v2189 = vpop.xlane.xlu0 %2188
    %v2190 = vsel %vm1076, %v2185, 0.0
    %v2191 = vsel %vm1076, %v2189, 0.0
    %v2192 = vadd.f32 %v2176, %v2190
    %v2193 = vadd.f32 %v2177, %v2191
    %v2194 = vmul.f32 %v2158, %v1082
    %v2195 = vmul.f32 %v2159, %v1083
    %v2196 = vmul.f32 %v2160, %v1084
    %v2197 = vmul.f32 %v2161, %v1085
    %v2198 = vsel %vm1045, %v2195, 0.0
    %v2199 = vadd.f32 %v2194, %v2198
    %2200 = vadd.xlane.f32.xlu0 %v2199
    %v2201 = vpop.xlane.xlu0 %2200
    %v2202 = vsel %vm1045, %v2197, 0.0
    %v2203 = vadd.f32 %v2196, %v2202
    %2204 = vadd.xlane.f32.xlu0 %v2203
    %v2205 = vpop.xlane.xlu0 %2204
    %v2206 = vsel %vm1098, %v2201, 0.0
    %v2207 = vsel %vm1098, %v2205, 0.0
    %v2208 = vadd.f32 %v2192, %v2206
    %v2209 = vadd.f32 %v2193, %v2207
    %v2210 = vmul.f32 %v2158, %v1104
    %v2211 = vmul.f32 %v2159, %v1105
    %v2212 = vmul.f32 %v2160, %v1106
    %v2213 = vmul.f32 %v2161, %v1107
    %v2214 = vsel %vm1045, %v2211, 0.0
    %v2215 = vadd.f32 %v2210, %v2214
    %2216 = vadd.xlane.f32.xlu0 %v2215
    %v2217 = vpop.xlane.xlu0 %2216
    %v2218 = vsel %vm1045, %v2213, 0.0
    %v2219 = vadd.f32 %v2212, %v2218
    %2220 = vadd.xlane.f32.xlu0 %v2219
    %v2221 = vpop.xlane.xlu0 %2220
    %v2222 = vsel %vm1120, %v2217, 0.0
    %v2223 = vsel %vm1120, %v2221, 0.0
    %v2224 = vadd.f32 %v2208, %v2222
    %v2225 = vadd.f32 %v2209, %v2223
    %v2226 = vmul.f32 %v2158, %v1126
    %v2227 = vmul.f32 %v2159, %v1127
    %v2228 = vmul.f32 %v2160, %v1128
    %v2229 = vmul.f32 %v2161, %v1129
    %v2230 = vsel %vm1045, %v2227, 0.0
    %v2231 = vadd.f32 %v2226, %v2230
    %2232 = vadd.xlane.f32.xlu0 %v2231
    %v2233 = vpop.xlane.xlu0 %2232
    %v2234 = vsel %vm1045, %v2229, 0.0
    %v2235 = vadd.f32 %v2228, %v2234
    %2236 = vadd.xlane.f32.xlu0 %v2235
    %v2237 = vpop.xlane.xlu0 %2236
    %v2238 = vsel %vm1142, %v2233, 0.0
    %v2239 = vsel %vm1142, %v2237, 0.0
    %v2240 = vadd.f32 %v2224, %v2238
    %v2241 = vadd.f32 %v2225, %v2239
    %v2242 = vmul.f32 %v2158, %v1148
    %v2243 = vmul.f32 %v2159, %v1149
    %v2244 = vmul.f32 %v2160, %v1150
    %v2245 = vmul.f32 %v2161, %v1151
    %v2246 = vsel %vm1045, %v2243, 0.0
    %v2247 = vadd.f32 %v2242, %v2246
    %2248 = vadd.xlane.f32.xlu0 %v2247
    %v2249 = vpop.xlane.xlu0 %2248
    %v2250 = vsel %vm1045, %v2245, 0.0
    %v2251 = vadd.f32 %v2244, %v2250
    %2252 = vadd.xlane.f32.xlu0 %v2251
    %v2253 = vpop.xlane.xlu0 %2252
    %v2254 = vsel %vm1164, %v2249, 0.0
    %v2255 = vsel %vm1164, %v2253, 0.0
    %v2256 = vadd.f32 %v2240, %v2254
    %v2257 = vadd.f32 %v2241, %v2255
    %v2258 = vmul.f32 %v2158, %v1170
    %v2259 = vmul.f32 %v2159, %v1171
    %v2260 = vmul.f32 %v2160, %v1172
    %v2261 = vmul.f32 %v2161, %v1173
    %v2262 = vsel %vm1045, %v2259, 0.0
    %v2263 = vadd.f32 %v2258, %v2262
    %2264 = vadd.xlane.f32.xlu0 %v2263
    %v2265 = vpop.xlane.xlu0 %2264
    %v2266 = vsel %vm1045, %v2261, 0.0
    %v2267 = vadd.f32 %v2260, %v2266
    %2268 = vadd.xlane.f32.xlu0 %v2267
    %v2269 = vpop.xlane.xlu0 %2268
    %v2270 = vsel %vm1186, %v2265, 0.0
    %v2271 = vsel %vm1186, %v2269, 0.0
    %v2272 = vadd.f32 %v2256, %v2270
    %v2273 = vadd.f32 %v2257, %v2271
    %v2274 = vmul.f32 %v2158, %v1192
    %v2275 = vmul.f32 %v2159, %v1193
    %v2276 = vmul.f32 %v2160, %v1194
    %v2277 = vmul.f32 %v2161, %v1195
    %v2278 = vsel %vm1045, %v2275, 0.0
    %v2279 = vadd.f32 %v2274, %v2278
    %2280 = vadd.xlane.f32.xlu0 %v2279
    %v2281 = vpop.xlane.xlu0 %2280
    %v2282 = vsel %vm1045, %v2277, 0.0
    %v2283 = vadd.f32 %v2276, %v2282
    %2284 = vadd.xlane.f32.xlu0 %v2283
    %v2285 = vpop.xlane.xlu0 %2284
    %v2286 = vsel %vm1208, %v2281, 0.0
    %v2287 = vsel %vm1208, %v2285, 0.0
    %v2288 = vadd.f32 %v2272, %v2286
    %v2289 = vadd.f32 %v2273, %v2287
    %v2290 = vmul.f32 %v2158, %v1214
    %v2291 = vmul.f32 %v2159, %v1215
    %v2292 = vmul.f32 %v2160, %v1216
    %v2293 = vmul.f32 %v2161, %v1217
    %v2294 = vsel %vm1045, %v2291, 0.0
    %v2295 = vadd.f32 %v2290, %v2294
    %2296 = vadd.xlane.f32.xlu0 %v2295
    %v2297 = vpop.xlane.xlu0 %2296
    %v2298 = vsel %vm1045, %v2293, 0.0
    %v2299 = vadd.f32 %v2292, %v2298
    %2300 = vadd.xlane.f32.xlu0 %v2299
    %v2301 = vpop.xlane.xlu0 %2300
    %v2302 = vsel %vm1230, %v2297, 0.0
    %v2303 = vsel %vm1230, %v2301, 0.0
    %v2304 = vadd.f32 %v2288, %v2302
    %v2305 = vadd.f32 %v2289, %v2303
    %v2306 = vmul.f32 %v2158, %v1236
    %v2307 = vmul.f32 %v2159, %v1237
    %v2308 = vmul.f32 %v2160, %v1238
    %v2309 = vmul.f32 %v2161, %v1239
    %v2310 = vsel %vm1045, %v2307, 0.0
    %v2311 = vadd.f32 %v2306, %v2310
    %2312 = vadd.xlane.f32.xlu0 %v2311
    %v2313 = vpop.xlane.xlu0 %2312
    %v2314 = vsel %vm1045, %v2309, 0.0
    %v2315 = vadd.f32 %v2308, %v2314
    %2316 = vadd.xlane.f32.xlu0 %v2315
    %v2317 = vpop.xlane.xlu0 %2316
    %v2318 = vsel %vm1252, %v2313, 0.0
    %v2319 = vsel %vm1252, %v2317, 0.0
    %v2320 = vadd.f32 %v2304, %v2318
    %v2321 = vadd.f32 %v2305, %v2319
    %v2322 = vadd.f32 %v2320, %v2321
    %v2323 = vrot.slane %v2322, 4
    %v2324 = vadd.f32 %v2322, %v2323
    %v2325 = vrot.slane %v2324, 2
    %v2326 = vadd.f32 %v2324, %v2325
    %v2327 = vrot.slane %v2326, 1
    %v2328 = vadd.f32 %v2326, %v2327
    %v2329 = vadd.f32 %v2328, %v48
    %v2331 = vrot.slane %v2329, 7
    %vm2333 = vcmask 1040384
    %v2334 = vsel %vm2333, %v1264, %v2331
    %2335 = vst [vmem:[#allocation2] sm:$0x3] %v2334
    // Predicated region
    $region26: #{forward.1} parent=1 // pred_check
      _
    $region27: #{forward.1} parent=1 // pred_check_branch
      %2337 = sbr.rel (0) target = $region29
    $region28: #{forward.1} parent=1 // pred_region
      %s2339 = ssub.s32 32, 32
      %2340 = vsyncadd [#allocation3], %s2339
      %s2342 = sshll.u32 [#allocation2], 4
      %s2343 = int_to_ptr.vmem [resolvable:$true] %s2342
      %2345 = dma.vmem_to_hbm [thread:$0]  %s2343, 32, %s6, [#allocation3]
    $region29: #{forward.1} parent=1 // pred_fallthru
      _
    // Predicated region
    $region30: #{forward.1} parent=1 // pred_check
      _
    $region31: #{forward.1} parent=1 // pred_check_branch
      %2347 = sbr.rel (0) target = $region33
    $region32: #{forward.1} parent=1 // pred_region
      %2348 = dma.done [#allocation3], 32
    $region33: #{forward.1} parent=1 // pred_fallthru
      _
    %2349 = vsyncpa [#allocation3], 1

</llo_original>
